<compile_context>
chip_gen: v6e
topology: v6e:2x2x1
jax: 0.10.0
libtpu: 0.0.40
codegen_flags: <defaults>
</compile_context>

<pallas_src>
import functools

import jax
import jax.numpy as jnp
from jax import lax
from jax.experimental import pallas as pl
from jax.experimental.pallas import tpu as pltpu

LANE = 128
EXPANSION = 4


def _round_up(c, m=LANE):
    return ((c + m - 1) // m) * m


# ----------------------------------------------------------------------------
# Fused Bottleneck kernel
# ----------------------------------------------------------------------------
def _bottleneck_kernel(*refs, stride, has_proj):
    nx = 1 if stride == 1 else 4          # number of x parity views
    nw = 12 if has_proj else 9
    x_refs = refs[:nx]
    (w1_ref, s1_ref, b1_ref,
     w2_ref, s2_ref, b2_ref,
     w3_ref, s3_ref, b3_ref) = refs[nx:nx + 9]
    if has_proj:
        wsc_ref, ssc_ref, bsc_ref = refs[nx + 9:nx + 12]
    out_ref = refs[nx + nw]
    a1_refs = refs[nx + nw + 1:]          # VMEM scratch: zero-padded conv1 output

    f32 = jnp.float32
    _, h_out, w_out, c_out_p = out_ref.shape
    p_pad = a1_refs[0].shape[-1]
    m = h_out * w_out

    def mm(a, w):                          # bf16 MXU matmul, f32 accumulation
        return jnp.dot(a.astype(jnp.bfloat16), w, preferred_element_type=f32)

    def conv1_bn_relu(x_ref):              # 1x1 conv + BN1 + ReLU on one x view
        _, hq, wq, cin_p = x_ref.shape
        z = mm(x_ref[0].reshape(hq * wq, cin_p), w1_ref[...])
        z = z * s1_ref[...] + b1_ref[...]
        return jnp.maximum(z, 0.0).reshape(hq, wq, p_pad)

    # ---- stage 1: conv1 -> bn1 -> relu, written into zero-padded VMEM scratch.
    for r in a1_refs:                      # zeros realise conv2's spatial padding
        r[...] = jnp.zeros_like(r)
    if stride == 1:
        a1_refs[0][1:h_out + 1, 1:w_out + 1, :] = conv1_bn_relu(x_refs[0])
    else:
        # parity scratch (pr, pc) holds padded-conv1 rows p==pr, cols q==pc (mod 2)
        a1_refs[0][1:h_out + 1, 1:w_out + 1, :] = conv1_bn_relu(x_refs[0])  # x[1::2,1::2]
        a1_refs[1][1:h_out + 1, 0:w_out, :] = conv1_bn_relu(x_refs[1])      # x[1::2,0::2]
        a1_refs[2][0:h_out, 1:w_out + 1, :] = conv1_bn_relu(x_refs[2])      # x[0::2,1::2]
        a1_refs[3][0:h_out, 0:w_out, :] = conv1_bn_relu(x_refs[3])          # x[0::2,0::2]

    # ---- stage 2: 3x3 conv (stride folded in) -> bn2 -> relu
    acc = jnp.zeros((m, p_pad), f32)
    for kh in range(3):
        for kw in range(3):
            if stride == 1:
                tap_ref, r0, c0 = a1_refs[0], kh, kw
            else:
                tap_ref = a1_refs[2 * (kh % 2) + (kw % 2)]
                r0, c0 = kh // 2, kw // 2
            tap = tap_ref[r0:r0 + h_out, c0:c0 + w_out, :]
            acc = acc + mm(tap.reshape(m, p_pad), w2_ref[kh, kw])
    a2 = jnp.maximum(acc * s2_ref[...] + b2_ref[...], 0.0)

    # ---- stage 3: conv3 -> bn3
    y = mm(a2, w3_ref[...]) * s3_ref[...] + b3_ref[...]

    # ---- shortcut, add, final relu
    if has_proj:
        xs_ref = x_refs[0] if stride == 1 else x_refs[3]       # x[::s, ::s]
        res = mm(xs_ref[0].reshape(m, xs_ref.shape[-1]), wsc_ref[...])
        res = res * ssc_ref[...] + bsc_ref[...]
    else:
        res = x_refs[0][0].reshape(m, c_out_p).astype(f32)     # identity shortcut
    out = jnp.maximum(y + res, 0.0)
    out_ref[0] = out.reshape(h_out, w_out, c_out_p).astype(out_ref.dtype)


# ----------------------------------------------------------------------------
# Wrapper: channel padding to lane width, parity views for stride, pallas_call
# ----------------------------------------------------------------------------
def _pad_last(a, target):
    pad = target - a.shape[-1]
    if pad == 0:
        return a
    return jnp.pad(a, [(0, 0)] * (a.ndim - 1) + [(0, pad)])


def _pad_io(w2d, cin_p, cout_p):
    return jnp.pad(w2d, ((0, cin_p - w2d.shape[0]), (0, cout_p - w2d.shape[1])))


def bottleneck_forward(x, p, *, stride=1):
    """x: (N, H, W, Cin) float32 NHWC. Returns (N, H_out, W_out, 4*planes)."""
    n, h, w, cin = x.shape
    planes = p["w1"].shape[3]
    cout = p["w3"].shape[3]
    assert stride in (1, 2), "kernel supports stride 1 or 2"
    if stride == 2:
        assert h % 2 == 0 and w % 2 == 0, "even spatial dims required for stride 2"
    h_out = (h + 2 - 3) // stride + 1
    w_out = (w + 2 - 3) // stride + 1

    cin_p, p_p, o_p = _round_up(cin), _round_up(planes), _round_up(cout)
    has_proj = p["w_sc"] is not None

    # lane-dense (channel-padded) bf16 operands for the MXU
    xp = _pad_last(x, cin_p).astype(jnp.bfloat16)
    w1 = _pad_io(p["w1"][0, 0], cin_p, p_p).astype(jnp.bfloat16)
    w2 = jnp.pad(p["w2"], ((0, 0), (0, 0), (0, p_p - planes),
                           (0, p_p - planes))).astype(jnp.bfloat16)
    w3 = _pad_io(p["w3"][0, 0], p_p, o_p).astype(jnp.bfloat16)
    s1 = _pad_last(p["scale1"], p_p).reshape(1, p_p)
    b1 = _pad_last(p["shift1"], p_p).reshape(1, p_p)
    s2 = _pad_last(p["scale2"], p_p).reshape(1, p_p)
    b2 = _pad_last(p["shift2"], p_p).reshape(1, p_p)
    s3 = _pad_last(p["scale3"], o_p).reshape(1, o_p)
    b3 = _pad_last(p["shift3"], o_p).reshape(1, o_p)

    if stride == 1:
        x_views = [xp]
        hq, wq = h, w
    else:  # 4 row/col parity views (cheap XLA slices); stride handled in-kernel
        x_views = [xp[:, 1::2, 1::2, :], xp[:, 1::2, 0::2, :],
                   xp[:, 0::2, 1::2, :], xp[:, 0::2, 0::2, :]]
        hq, wq = h // 2, w // 2

    args = list(x_views) + [w1, s1, b1, w2, s2, b2, w3, s3, b3]
    vec_spec_p = pl.BlockSpec((1, p_p), lambda b: (0, 0))
    vec_spec_o = pl.BlockSpec((1, o_p), lambda b: (0, 0))
    in_specs = (
        [pl.BlockSpec((1, hq, wq, cin_p), lambda b: (b, 0, 0, 0))] * len(x_views)
        + [pl.BlockSpec(w1.shape, lambda b: (0, 0)), vec_spec_p, vec_spec_p,
           pl.BlockSpec(w2.shape, lambda b: (0, 0, 0, 0)), vec_spec_p, vec_spec_p,
           pl.BlockSpec(w3.shape, lambda b: (0, 0)), vec_spec_o, vec_spec_o])

    if has_proj:
        wsc = _pad_io(p["w_sc"][0, 0], cin_p, o_p).astype(jnp.bfloat16)
        ssc = _pad_last(p["scale_sc"], o_p).reshape(1, o_p)
        bsc = _pad_last(p["shift_sc"], o_p).reshape(1, o_p)
        args += [wsc, ssc, bsc]
        in_specs += [pl.BlockSpec(wsc.shape, lambda b: (0, 0)), vec_spec_o, vec_spec_o]

    if stride == 1:
        scratch = [pltpu.VMEM((h + 2, w + 2, p_p), jnp.float32)]
    else:
        scratch = [pltpu.VMEM((h_out + 1, w_out + 1, p_p), jnp.float32)
                   for _ in range(4)]

    kernel = functools.partial(_bottleneck_kernel, stride=stride, has_proj=has_proj)
    out = pl.pallas_call(
        kernel,
        out_shape=jax.ShapeDtypeStruct((n, h_out, w_out, o_p), jnp.float32),
        grid=(n,),
        in_specs=in_specs,
        out_specs=pl.BlockSpec((1, h_out, w_out, o_p), lambda b: (b, 0, 0, 0)),
        scratch_shapes=scratch,
        compiler_params=pltpu.CompilerParams(
            dimension_semantics=("parallel",),
            vmem_limit_bytes=32 * 1024 * 1024),
    )(*args)
    return out[..., :cout]


# ----------------------------------------------------------------------------
# Parameter setup (deterministic; plain-JAX glue for uspars / SwitchBatchNorm2d)
# ----------------------------------------------------------------------------
def _fold_bn(gamma, beta, mean, var, eps=1e-5):
    scale = gamma / jnp.sqrt(var + eps)
    shift = beta - mean * scale
    return scale, shift


def _spars_mask(w, nspars, spars_idx):
    frac = spars_idx / nspars
    if frac <= 0.0:
        return jnp.ones_like(w)
    thresh = jnp.quantile(jnp.abs(w).ravel(), frac)
    return (jnp.abs(w) >= thresh).astype(w.dtype)


def _init_bn(key, c, nspars, spars_idx):
    kg, kb, km, kv = jax.random.split(key, 4)
    gamma = 1.0 + 0.1 * jax.random.normal(kg, (nspars, c), jnp.float32)
    beta = 0.05 * jax.random.normal(kb, (nspars, c), jnp.float32)
    mean = 0.1 * jax.random.normal(km, (nspars, c), jnp.float32)
    var = jax.random.uniform(kv, (nspars, c), jnp.float32, 0.5, 1.5)
    return _fold_bn(gamma[spars_idx], beta[spars_idx], mean[spars_idx], var[spars_idx])


def init_bottleneck_params(key, in_planes, planes, stride, nspars=4, spars_idx=1):
    out_planes = EXPANSION * planes
    ks = jax.random.split(key, 8)

    def conv_w(k, kk, ci, co):
        w = 0.1 * jax.random.normal(k, (kk, kk, ci, co), jnp.float32)
        return w * _spars_mask(w, nspars, spars_idx)   # uspars magnitude mask

    params = {"w1": conv_w(ks[0], 1, in_planes, planes),
              "w2": conv_w(ks[1], 3, planes, planes),
              "w3": conv_w(ks[2], 1, planes, out_planes),
              "w_sc": None, "scale_sc": None, "shift_sc": None}
    params["scale1"], params["shift1"] = _init_bn(ks[3], planes, nspars, spars_idx)
    params["scale2"], params["shift2"] = _init_bn(ks[4], planes, nspars, spars_idx)
    params["scale3"], params["shift3"] = _init_bn(ks[5], out_planes, nspars, spars_idx)
    if stride != 1 or in_planes != out_planes:
        params["w_sc"] = conv_w(ks[6], 1, in_planes, out_planes)
        params["scale_sc"], params["shift_sc"] = _init_bn(ks[7], out_planes,
                                                          nspars, spars_idx)
    return params


# ----------------------------------------------------------------------------
# Pure-JAX reference (mirrors the kernel's bf16-input / f32-accumulate numerics)
# ----------------------------------------------------------------------------
def bottleneck_reference(x, p, *, stride=1):
    q = lambda a: a.astype(jnp.bfloat16).astype(jnp.float32)

    def conv(z, w, s, pad):
        return lax.conv_general_dilated(
            q(z), q(w), (s, s), [(pad, pad), (pad, pad)],
            dimension_numbers=("NHWC", "HWIO", "NHWC"))

    a1 = jnp.maximum(conv(x, p["w1"], 1, 0) * p["scale1"] + p["shift1"], 0.0)
    a2 = jnp.maximum(conv(a1, p["w2"], stride, 1) * p["scale2"] + p["shift2"], 0.0)
    y = conv(a2, p["w3"], 1, 0) * p["scale3"] + p["shift3"]
    if p["w_sc"] is None:
        sc = q(x)
    else:
        sc = conv(x, p["w_sc"], stride, 0) * p["scale_sc"] + p["shift_sc"]
    return jnp.maximum(y + sc, 0.0)


if __name__ == "__main__":
    key = jax.random.PRNGKey(0)
    N, H, W = 2, 16, 16
    configs = [
        (16, 8, 2),   # downsample block: projection shortcut, stride 2 (in-kernel)
        (32, 8, 1),   # identity-shortcut block: in_planes == expansion * planes
    ]
    for cfg_i, (in_planes, planes, stride) in enumerate(configs):
        k_param, k_x = jax.random.split(jax.random.fold_in(key, cfg_i))
        params = init_bottleneck_params(k_param, in_planes, planes, stride,
                                        nspars=4, spars_idx=1)
        x = jax.random.normal(k_x, (N, H, W, in_planes), jnp.float32)

        out = jax.block_until_ready(bottleneck_forward(x, params, stride=stride))
        ref = bottleneck_reference(x, params, stride=stride)

        h_out = (H + 2 - 3) // stride + 1
        assert out.shape == ref.shape == (N, h_out, h_out, EXPANSION * planes)
        err = float(jnp.max(jnp.abs(out - ref)))
        assert jnp.allclose(out, ref, rtol=5e-3, atol=5e-3), (cfg_i, err)

    print("KERNEL_OK")
</pallas_src>

<mosaic_0001>
module attributes {stable_mosaic.version = 11 : i64} {
  func.func @_bottleneck_kernel(%arg0: i32, %arg1: memref<1x8x8x128xbf16, #tpu.memory_space<vmem>>, %arg2: memref<1x8x8x128xbf16, #tpu.memory_space<vmem>>, %arg3: memref<1x8x8x128xbf16, #tpu.memory_space<vmem>>, %arg4: memref<1x8x8x128xbf16, #tpu.memory_space<vmem>>, %arg5: memref<128x128xbf16, #tpu.memory_space<vmem>>, %arg6: memref<1x128xf32, #tpu.memory_space<vmem>>, %arg7: memref<1x128xf32, #tpu.memory_space<vmem>>, %arg8: memref<3x3x128x128xbf16, #tpu.memory_space<vmem>>, %arg9: memref<1x128xf32, #tpu.memory_space<vmem>>, %arg10: memref<1x128xf32, #tpu.memory_space<vmem>>, %arg11: memref<128x128xbf16, #tpu.memory_space<vmem>>, %arg12: memref<1x128xf32, #tpu.memory_space<vmem>>, %arg13: memref<1x128xf32, #tpu.memory_space<vmem>>, %arg14: memref<128x128xbf16, #tpu.memory_space<vmem>>, %arg15: memref<1x128xf32, #tpu.memory_space<vmem>>, %arg16: memref<1x128xf32, #tpu.memory_space<vmem>>, %arg17: memref<1x8x8x128xf32, #tpu.memory_space<vmem>>, %arg18: memref<9x9x128xf32, #tpu.memory_space<vmem>>, %arg19: memref<9x9x128xf32, #tpu.memory_space<vmem>>, %arg20: memref<9x9x128xf32, #tpu.memory_space<vmem>>, %arg21: memref<9x9x128xf32, #tpu.memory_space<vmem>>) attributes {dimension_semantics = [#tpu.dimension_semantics<parallel>], iteration_bounds = array<i64: 2>, scalar_prefetch = 0 : i64, scratch_operands = 4 : i64, tpu.core_type = #tpu.core_type<tc>, window_params = [{transform_indices = @transform_0, window_bounds = array<i64: 1, 8, 8, 128>}, {transform_indices = @transform_1, window_bounds = array<i64: 1, 8, 8, 128>}, {transform_indices = @transform_2, window_bounds = array<i64: 1, 8, 8, 128>}, {transform_indices = @transform_3, window_bounds = array<i64: 1, 8, 8, 128>}, {pipeline_mode = #tpu.pipeline_mode<synchronous>, transform_indices = @transform_4, window_bounds = array<i64: 128, 128>}, {pipeline_mode = #tpu.pipeline_mode<synchronous>, transform_indices = @transform_5, window_bounds = array<i64: 1, 128>}, {pipeline_mode = #tpu.pipeline_mode<synchronous>, transform_indices = @transform_6, window_bounds = array<i64: 1, 128>}, {pipeline_mode = #tpu.pipeline_mode<synchronous>, transform_indices = @transform_7, window_bounds = array<i64: 3, 3, 128, 128>}, {pipeline_mode = #tpu.pipeline_mode<synchronous>, transform_indices = @transform_8, window_bounds = array<i64: 1, 128>}, {pipeline_mode = #tpu.pipeline_mode<synchronous>, transform_indices = @transform_9, window_bounds = array<i64: 1, 128>}, {pipeline_mode = #tpu.pipeline_mode<synchronous>, transform_indices = @transform_10, window_bounds = array<i64: 128, 128>}, {pipeline_mode = #tpu.pipeline_mode<synchronous>, transform_indices = @transform_11, window_bounds = array<i64: 1, 128>}, {pipeline_mode = #tpu.pipeline_mode<synchronous>, transform_indices = @transform_12, window_bounds = array<i64: 1, 128>}, {pipeline_mode = #tpu.pipeline_mode<synchronous>, transform_indices = @transform_13, window_bounds = array<i64: 128, 128>}, {pipeline_mode = #tpu.pipeline_mode<synchronous>, transform_indices = @transform_14, window_bounds = array<i64: 1, 128>}, {pipeline_mode = #tpu.pipeline_mode<synchronous>, transform_indices = @transform_15, window_bounds = array<i64: 1, 128>}, {transform_indices = @transform_16, window_bounds = array<i64: 1, 8, 8, 128>}]} {
    %cst = arith.constant 0.000000e+00 : f32
    %0 = vector.broadcast %cst : f32 to vector<9x9x128xf32>
    %c0 = arith.constant 0 : index
    %c0_0 = arith.constant 0 : index
    %c0_1 = arith.constant 0 : index
    %1 = vector.load %arg18[%c0, %c0_0, %c0_1] : memref<9x9x128xf32, #tpu.memory_space<vmem>>, vector<9x9x128xf32>
    tpu.vector_store %arg18[%c0, %c0_0, %c0_1], %0 {strides = array<i32>} : memref<9x9x128xf32, #tpu.memory_space<vmem>>, vector<9x9x128xf32>,
    %cst_2 = arith.constant 0.000000e+00 : f32
    %2 = vector.broadcast %cst_2 : f32 to vector<9x9x128xf32>
    %c0_3 = arith.constant 0 : index
    %c0_4 = arith.constant 0 : index
    %c0_5 = arith.constant 0 : index
    %3 = vector.load %arg19[%c0_3, %c0_4, %c0_5] : memref<9x9x128xf32, #tpu.memory_space<vmem>>, vector<9x9x128xf32>
    tpu.vector_store %arg19[%c0_3, %c0_4, %c0_5], %2 {strides = array<i32>} : memref<9x9x128xf32, #tpu.memory_space<vmem>>, vector<9x9x128xf32>,
    %cst_6 = arith.constant 0.000000e+00 : f32
    %4 = vector.broadcast %cst_6 : f32 to vector<9x9x128xf32>
    %c0_7 = arith.constant 0 : index
    %c0_8 = arith.constant 0 : index
    %c0_9 = arith.constant 0 : index
    %5 = vector.load %arg20[%c0_7, %c0_8, %c0_9] : memref<9x9x128xf32, #tpu.memory_space<vmem>>, vector<9x9x128xf32>
    tpu.vector_store %arg20[%c0_7, %c0_8, %c0_9], %4 {strides = array<i32>} : memref<9x9x128xf32, #tpu.memory_space<vmem>>, vector<9x9x128xf32>,
    %cst_10 = arith.constant 0.000000e+00 : f32
    %6 = vector.broadcast %cst_10 : f32 to vector<9x9x128xf32>
    %c0_11 = arith.constant 0 : index
    %c0_12 = arith.constant 0 : index
    %c0_13 = arith.constant 0 : index
    %7 = vector.load %arg21[%c0_11, %c0_12, %c0_13] : memref<9x9x128xf32, #tpu.memory_space<vmem>>, vector<9x9x128xf32>
    tpu.vector_store %arg21[%c0_11, %c0_12, %c0_13], %6 {strides = array<i32>} : memref<9x9x128xf32, #tpu.memory_space<vmem>>, vector<9x9x128xf32>,
    %c0_14 = arith.constant 0 : index
    %c0_15 = arith.constant 0 : index
    %c0_16 = arith.constant 0 : index
    %c0_17 = arith.constant 0 : index
    %8 = vector.load %arg1[%c0_14, %c0_15, %c0_16, %c0_17] : memref<1x8x8x128xbf16, #tpu.memory_space<vmem>>, vector<1x8x8x128xbf16>
    %9 = vector.shape_cast %8 : vector<1x8x8x128xbf16> to vector<8x8x128xbf16>
    %10 = vector.shape_cast %9 : vector<8x8x128xbf16> to vector<64x128xbf16>
    %c0_18 = arith.constant 0 : index
    %c0_19 = arith.constant 0 : index
    %11 = vector.load %arg5[%c0_18, %c0_19] : memref<128x128xbf16, #tpu.memory_space<vmem>>, vector<128x128xbf16>
    %cst_20 = arith.constant dense<0.000000e+00> : vector<64x128xf32>
    %12 = tpu.matmul %10, %11, %cst_20 {dimension_numbers = #tpu.dot_dimension_numbers<[1], [0], [0], [1], [0, 0, 1, 1], [], []>} : vector<64x128xbf16>, vector<128x128xbf16>, vector<64x128xf32> -> vector<64x128xf32>
    %c0_21 = arith.constant 0 : index
    %c0_22 = arith.constant 0 : index
    %13 = vector.load %arg6[%c0_21, %c0_22] : memref<1x128xf32, #tpu.memory_space<vmem>>, vector<1x128xf32>
    %14 = vector.broadcast %13 : vector<1x128xf32> to vector<64x128xf32>
    %15 = arith.mulf %12, %14 : vector<64x128xf32>
    %c0_23 = arith.constant 0 : index
    %c0_24 = arith.constant 0 : index
    %16 = vector.load %arg7[%c0_23, %c0_24] : memref<1x128xf32, #tpu.memory_space<vmem>>, vector<1x128xf32>
    %17 = vector.broadcast %16 : vector<1x128xf32> to vector<64x128xf32>
    %18 = arith.addf %15, %17 : vector<64x128xf32>
    %cst_25 = arith.constant 0.000000e+00 : f32
    %19 = vector.broadcast %cst_25 : f32 to vector<64x128xf32>
    %20 = arith.maximumf %18, %19 : vector<64x128xf32>
    %21 = vector.shape_cast %20 : vector<64x128xf32> to vector<8x8x128xf32>
    %c1 = arith.constant 1 : index
    %c1_26 = arith.constant 1 : index
    %c0_27 = arith.constant 0 : index
    %22 = vector.load %arg18[%c1, %c1_26, %c0_27] : memref<9x9x128xf32, #tpu.memory_space<vmem>>, vector<8x8x128xf32>
    tpu.vector_store %arg18[%c1, %c1_26, %c0_27], %21 {strides = array<i32>} : memref<9x9x128xf32, #tpu.memory_space<vmem>>, vector<8x8x128xf32>,
    %c0_28 = arith.constant 0 : index
    %c0_29 = arith.constant 0 : index
    %c0_30 = arith.constant 0 : index
    %c0_31 = arith.constant 0 : index
    %23 = vector.load %arg2[%c0_28, %c0_29, %c0_30, %c0_31] : memref<1x8x8x128xbf16, #tpu.memory_space<vmem>>, vector<1x8x8x128xbf16>
    %24 = vector.shape_cast %23 : vector<1x8x8x128xbf16> to vector<8x8x128xbf16>
    %25 = vector.shape_cast %24 : vector<8x8x128xbf16> to vector<64x128xbf16>
    %c0_32 = arith.constant 0 : index
    %c0_33 = arith.constant 0 : index
    %26 = vector.load %arg5[%c0_32, %c0_33] : memref<128x128xbf16, #tpu.memory_space<vmem>>, vector<128x128xbf16>
    %cst_34 = arith.constant dense<0.000000e+00> : vector<64x128xf32>
    %27 = tpu.matmul %25, %26, %cst_34 {dimension_numbers = #tpu.dot_dimension_numbers<[1], [0], [0], [1], [0, 0, 1, 1], [], []>} : vector<64x128xbf16>, vector<128x128xbf16>, vector<64x128xf32> -> vector<64x128xf32>
    %c0_35 = arith.constant 0 : index
    %c0_36 = arith.constant 0 : index
    %28 = vector.load %arg6[%c0_35, %c0_36] : memref<1x128xf32, #tpu.memory_space<vmem>>, vector<1x128xf32>
    %29 = vector.broadcast %28 : vector<1x128xf32> to vector<64x128xf32>
    %30 = arith.mulf %27, %29 : vector<64x128xf32>
    %c0_37 = arith.constant 0 : index
    %c0_38 = arith.constant 0 : index
    %31 = vector.load %arg7[%c0_37, %c0_38] : memref<1x128xf32, #tpu.memory_space<vmem>>, vector<1x128xf32>
    %32 = vector.broadcast %31 : vector<1x128xf32> to vector<64x128xf32>
    %33 = arith.addf %30, %32 : vector<64x128xf32>
    %cst_39 = arith.constant 0.000000e+00 : f32
    %34 = vector.broadcast %cst_39 : f32 to vector<64x128xf32>
    %35 = arith.maximumf %33, %34 : vector<64x128xf32>
    %36 = vector.shape_cast %35 : vector<64x128xf32> to vector<8x8x128xf32>
    %c1_40 = arith.constant 1 : index
    %c0_41 = arith.constant 0 : index
    %c0_42 = arith.constant 0 : index
    %37 = vector.load %arg19[%c1_40, %c0_41, %c0_42] : memref<9x9x128xf32, #tpu.memory_space<vmem>>, vector<8x8x128xf32>
    tpu.vector_store %arg19[%c1_40, %c0_41, %c0_42], %36 {strides = array<i32>} : memref<9x9x128xf32, #tpu.memory_space<vmem>>, vector<8x8x128xf32>,
    %c0_43 = arith.constant 0 : index
    %c0_44 = arith.constant 0 : index
    %c0_45 = arith.constant 0 : index
    %c0_46 = arith.constant 0 : index
    %38 = vector.load %arg3[%c0_43, %c0_44, %c0_45, %c0_46] : memref<1x8x8x128xbf16, #tpu.memory_space<vmem>>, vector<1x8x8x128xbf16>
    %39 = vector.shape_cast %38 : vector<1x8x8x128xbf16> to vector<8x8x128xbf16>
    %40 = vector.shape_cast %39 : vector<8x8x128xbf16> to vector<64x128xbf16>
    %c0_47 = arith.constant 0 : index
    %c0_48 = arith.constant 0 : index
    %41 = vector.load %arg5[%c0_47, %c0_48] : memref<128x128xbf16, #tpu.memory_space<vmem>>, vector<128x128xbf16>
    %cst_49 = arith.constant dense<0.000000e+00> : vector<64x128xf32>
    %42 = tpu.matmul %40, %41, %cst_49 {dimension_numbers = #tpu.dot_dimension_numbers<[1], [0], [0], [1], [0, 0, 1, 1], [], []>} : vector<64x128xbf16>, vector<128x128xbf16>, vector<64x128xf32> -> vector<64x128xf32>
    %c0_50 = arith.constant 0 : index
    %c0_51 = arith.constant 0 : index
    %43 = vector.load %arg6[%c0_50, %c0_51] : memref<1x128xf32, #tpu.memory_space<vmem>>, vector<1x128xf32>
    %44 = vector.broadcast %43 : vector<1x128xf32> to vector<64x128xf32>
    %45 = arith.mulf %42, %44 : vector<64x128xf32>
    %c0_52 = arith.constant 0 : index
    %c0_53 = arith.constant 0 : index
    %46 = vector.load %arg7[%c0_52, %c0_53] : memref<1x128xf32, #tpu.memory_space<vmem>>, vector<1x128xf32>
    %47 = vector.broadcast %46 : vector<1x128xf32> to vector<64x128xf32>
    %48 = arith.addf %45, %47 : vector<64x128xf32>
    %cst_54 = arith.constant 0.000000e+00 : f32
    %49 = vector.broadcast %cst_54 : f32 to vector<64x128xf32>
    %50 = arith.maximumf %48, %49 : vector<64x128xf32>
    %51 = vector.shape_cast %50 : vector<64x128xf32> to vector<8x8x128xf32>
    %c0_55 = arith.constant 0 : index
    %c1_56 = arith.constant 1 : index
    %c0_57 = arith.constant 0 : index
    %52 = vector.load %arg20[%c0_55, %c1_56, %c0_57] : memref<9x9x128xf32, #tpu.memory_space<vmem>>, vector<8x8x128xf32>
    tpu.vector_store %arg20[%c0_55, %c1_56, %c0_57], %51 {strides = array<i32>} : memref<9x9x128xf32, #tpu.memory_space<vmem>>, vector<8x8x128xf32>,
    %c0_58 = arith.constant 0 : index
    %c0_59 = arith.constant 0 : index
    %c0_60 = arith.constant 0 : index
    %c0_61 = arith.constant 0 : index
    %53 = vector.load %arg4[%c0_58, %c0_59, %c0_60, %c0_61] : memref<1x8x8x128xbf16, #tpu.memory_space<vmem>>, vector<1x8x8x128xbf16>
    %54 = vector.shape_cast %53 : vector<1x8x8x128xbf16> to vector<8x8x128xbf16>
    %55 = vector.shape_cast %54 : vector<8x8x128xbf16> to vector<64x128xbf16>
    %c0_62 = arith.constant 0 : index
    %c0_63 = arith.constant 0 : index
    %56 = vector.load %arg5[%c0_62, %c0_63] : memref<128x128xbf16, #tpu.memory_space<vmem>>, vector<128x128xbf16>
    %cst_64 = arith.constant dense<0.000000e+00> : vector<64x128xf32>
    %57 = tpu.matmul %55, %56, %cst_64 {dimension_numbers = #tpu.dot_dimension_numbers<[1], [0], [0], [1], [0, 0, 1, 1], [], []>} : vector<64x128xbf16>, vector<128x128xbf16>, vector<64x128xf32> -> vector<64x128xf32>
    %c0_65 = arith.constant 0 : index
    %c0_66 = arith.constant 0 : index
    %58 = vector.load %arg6[%c0_65, %c0_66] : memref<1x128xf32, #tpu.memory_space<vmem>>, vector<1x128xf32>
    %59 = vector.broadcast %58 : vector<1x128xf32> to vector<64x128xf32>
    %60 = arith.mulf %57, %59 : vector<64x128xf32>
    %c0_67 = arith.constant 0 : index
    %c0_68 = arith.constant 0 : index
    %61 = vector.load %arg7[%c0_67, %c0_68] : memref<1x128xf32, #tpu.memory_space<vmem>>, vector<1x128xf32>
    %62 = vector.broadcast %61 : vector<1x128xf32> to vector<64x128xf32>
    %63 = arith.addf %60, %62 : vector<64x128xf32>
    %cst_69 = arith.constant 0.000000e+00 : f32
    %64 = vector.broadcast %cst_69 : f32 to vector<64x128xf32>
    %65 = arith.maximumf %63, %64 : vector<64x128xf32>
    %66 = vector.shape_cast %65 : vector<64x128xf32> to vector<8x8x128xf32>
    %c0_70 = arith.constant 0 : index
    %c0_71 = arith.constant 0 : index
    %c0_72 = arith.constant 0 : index
    %67 = vector.load %arg21[%c0_70, %c0_71, %c0_72] : memref<9x9x128xf32, #tpu.memory_space<vmem>>, vector<8x8x128xf32>
    tpu.vector_store %arg21[%c0_70, %c0_71, %c0_72], %66 {strides = array<i32>} : memref<9x9x128xf32, #tpu.memory_space<vmem>>, vector<8x8x128xf32>,
    %cst_73 = arith.constant 0.000000e+00 : f32
    %68 = vector.broadcast %cst_73 : f32 to vector<64x128xf32>
    %c0_74 = arith.constant 0 : index
    %c0_75 = arith.constant 0 : index
    %c0_76 = arith.constant 0 : index
    %69 = vector.load %arg18[%c0_74, %c0_75, %c0_76] : memref<9x9x128xf32, #tpu.memory_space<vmem>>, vector<8x8x128xf32>
    %70 = vector.shape_cast %69 : vector<8x8x128xf32> to vector<64x128xf32>
    %c0_77 = arith.constant 0 : index
    %c0_78 = arith.constant 0 : index
    %c0_79 = arith.constant 0 : index
    %c0_80 = arith.constant 0 : index
    %71 = vector.load %arg8[%c0_77, %c0_78, %c0_79, %c0_80] : memref<3x3x128x128xbf16, #tpu.memory_space<vmem>>, vector<1x1x128x128xbf16>
    %72 = vector.shape_cast %71 : vector<1x1x128x128xbf16> to vector<128x128xbf16>
    %73 = arith.truncf %70 : vector<64x128xf32> to vector<64x128xbf16>
    %cst_81 = arith.constant dense<0.000000e+00> : vector<64x128xf32>
    %74 = tpu.matmul %73, %72, %cst_81 {dimension_numbers = #tpu.dot_dimension_numbers<[1], [0], [0], [1], [0, 0, 1, 1], [], []>} : vector<64x128xbf16>, vector<128x128xbf16>, vector<64x128xf32> -> vector<64x128xf32>
    %75 = arith.addf %68, %74 : vector<64x128xf32>
    %c0_82 = arith.constant 0 : index
    %c0_83 = arith.constant 0 : index
    %c0_84 = arith.constant 0 : index
    %76 = vector.load %arg19[%c0_82, %c0_83, %c0_84] : memref<9x9x128xf32, #tpu.memory_space<vmem>>, vector<8x8x128xf32>
    %77 = vector.shape_cast %76 : vector<8x8x128xf32> to vector<64x128xf32>
    %c0_85 = arith.constant 0 : index
    %c1_86 = arith.constant 1 : index
    %c0_87 = arith.constant 0 : index
    %c0_88 = arith.constant 0 : index
    %78 = vector.load %arg8[%c0_85, %c1_86, %c0_87, %c0_88] : memref<3x3x128x128xbf16, #tpu.memory_space<vmem>>, vector<1x1x128x128xbf16>
    %79 = vector.shape_cast %78 : vector<1x1x128x128xbf16> to vector<128x128xbf16>
    %80 = arith.truncf %77 : vector<64x128xf32> to vector<64x128xbf16>
    %cst_89 = arith.constant dense<0.000000e+00> : vector<64x128xf32>
    %81 = tpu.matmul %80, %79, %cst_89 {dimension_numbers = #tpu.dot_dimension_numbers<[1], [0], [0], [1], [0, 0, 1, 1], [], []>} : vector<64x128xbf16>, vector<128x128xbf16>, vector<64x128xf32> -> vector<64x128xf32>
    %82 = arith.addf %75, %81 : vector<64x128xf32>
    %c0_90 = arith.constant 0 : index
    %c1_91 = arith.constant 1 : index
    %c0_92 = arith.constant 0 : index
    %83 = vector.load %arg18[%c0_90, %c1_91, %c0_92] : memref<9x9x128xf32, #tpu.memory_space<vmem>>, vector<8x8x128xf32>
    %84 = vector.shape_cast %83 : vector<8x8x128xf32> to vector<64x128xf32>
    %c0_93 = arith.constant 0 : index
    %c2 = arith.constant 2 : index
    %c0_94 = arith.constant 0 : index
    %c0_95 = arith.constant 0 : index
    %85 = vector.load %arg8[%c0_93, %c2, %c0_94, %c0_95] : memref<3x3x128x128xbf16, #tpu.memory_space<vmem>>, vector<1x1x128x128xbf16>
    %86 = vector.shape_cast %85 : vector<1x1x128x128xbf16> to vector<128x128xbf16>
    %87 = arith.truncf %84 : vector<64x128xf32> to vector<64x128xbf16>
    %cst_96 = arith.constant dense<0.000000e+00> : vector<64x128xf32>
    %88 = tpu.matmul %87, %86, %cst_96 {dimension_numbers = #tpu.dot_dimension_numbers<[1], [0], [0], [1], [0, 0, 1, 1], [], []>} : vector<64x128xbf16>, vector<128x128xbf16>, vector<64x128xf32> -> vector<64x128xf32>
    %89 = arith.addf %82, %88 : vector<64x128xf32>
    %c0_97 = arith.constant 0 : index
    %c0_98 = arith.constant 0 : index
    %c0_99 = arith.constant 0 : index
    %90 = vector.load %arg20[%c0_97, %c0_98, %c0_99] : memref<9x9x128xf32, #tpu.memory_space<vmem>>, vector<8x8x128xf32>
    %91 = vector.shape_cast %90 : vector<8x8x128xf32> to vector<64x128xf32>
    %c1_100 = arith.constant 1 : index
    %c0_101 = arith.constant 0 : index
    %c0_102 = arith.constant 0 : index
    %c0_103 = arith.constant 0 : index
    %92 = vector.load %arg8[%c1_100, %c0_101, %c0_102, %c0_103] : memref<3x3x128x128xbf16, #tpu.memory_space<vmem>>, vector<1x1x128x128xbf16>
    %93 = vector.shape_cast %92 : vector<1x1x128x128xbf16> to vector<128x128xbf16>
    %94 = arith.truncf %91 : vector<64x128xf32> to vector<64x128xbf16>
    %cst_104 = arith.constant dense<0.000000e+00> : vector<64x128xf32>
    %95 = tpu.matmul %94, %93, %cst_104 {dimension_numbers = #tpu.dot_dimension_numbers<[1], [0], [0], [1], [0, 0, 1, 1], [], []>} : vector<64x128xbf16>, vector<128x128xbf16>, vector<64x128xf32> -> vector<64x128xf32>
    %96 = arith.addf %89, %95 : vector<64x128xf32>
    %c0_105 = arith.constant 0 : index
    %c0_106 = arith.constant 0 : index
    %c0_107 = arith.constant 0 : index
    %97 = vector.load %arg21[%c0_105, %c0_106, %c0_107] : memref<9x9x128xf32, #tpu.memory_space<vmem>>, vector<8x8x128xf32>
    %98 = vector.shape_cast %97 : vector<8x8x128xf32> to vector<64x128xf32>
    %c1_108 = arith.constant 1 : index
    %c1_109 = arith.constant 1 : index
    %c0_110 = arith.constant 0 : index
    %c0_111 = arith.constant 0 : index
    %99 = vector.load %arg8[%c1_108, %c1_109, %c0_110, %c0_111] : memref<3x3x128x128xbf16, #tpu.memory_space<vmem>>, vector<1x1x128x128xbf16>
    %100 = vector.shape_cast %99 : vector<1x1x128x128xbf16> to vector<128x128xbf16>
    %101 = arith.truncf %98 : vector<64x128xf32> to vector<64x128xbf16>
    %cst_112 = arith.constant dense<0.000000e+00> : vector<64x128xf32>
    %102 = tpu.matmul %101, %100, %cst_112 {dimension_numbers = #tpu.dot_dimension_numbers<[1], [0], [0], [1], [0, 0, 1, 1], [], []>} : vector<64x128xbf16>, vector<128x128xbf16>, vector<64x128xf32> -> vector<64x128xf32>
    %103 = arith.addf %96, %102 : vector<64x128xf32>
    %c0_113 = arith.constant 0 : index
    %c1_114 = arith.constant 1 : index
    %c0_115 = arith.constant 0 : index
    %104 = vector.load %arg20[%c0_113, %c1_114, %c0_115] : memref<9x9x128xf32, #tpu.memory_space<vmem>>, vector<8x8x128xf32>
    %105 = vector.shape_cast %104 : vector<8x8x128xf32> to vector<64x128xf32>
    %c1_116 = arith.constant 1 : index
    %c2_117 = arith.constant 2 : index
    %c0_118 = arith.constant 0 : index
    %c0_119 = arith.constant 0 : index
    %106 = vector.load %arg8[%c1_116, %c2_117, %c0_118, %c0_119] : memref<3x3x128x128xbf16, #tpu.memory_space<vmem>>, vector<1x1x128x128xbf16>
    %107 = vector.shape_cast %106 : vector<1x1x128x128xbf16> to vector<128x128xbf16>
    %108 = arith.truncf %105 : vector<64x128xf32> to vector<64x128xbf16>
    %cst_120 = arith.constant dense<0.000000e+00> : vector<64x128xf32>
    %109 = tpu.matmul %108, %107, %cst_120 {dimension_numbers = #tpu.dot_dimension_numbers<[1], [0], [0], [1], [0, 0, 1, 1], [], []>} : vector<64x128xbf16>, vector<128x128xbf16>, vector<64x128xf32> -> vector<64x128xf32>
    %110 = arith.addf %103, %109 : vector<64x128xf32>
    %c1_121 = arith.constant 1 : index
    %c0_122 = arith.constant 0 : index
    %c0_123 = arith.constant 0 : index
    %111 = vector.load %arg18[%c1_121, %c0_122, %c0_123] : memref<9x9x128xf32, #tpu.memory_space<vmem>>, vector<8x8x128xf32>
    %112 = vector.shape_cast %111 : vector<8x8x128xf32> to vector<64x128xf32>
    %c2_124 = arith.constant 2 : index
    %c0_125 = arith.constant 0 : index
    %c0_126 = arith.constant 0 : index
    %c0_127 = arith.constant 0 : index
    %113 = vector.load %arg8[%c2_124, %c0_125, %c0_126, %c0_127] : memref<3x3x128x128xbf16, #tpu.memory_space<vmem>>, vector<1x1x128x128xbf16>
    %114 = vector.shape_cast %113 : vector<1x1x128x128xbf16> to vector<128x128xbf16>
    %115 = arith.truncf %112 : vector<64x128xf32> to vector<64x128xbf16>
    %cst_128 = arith.constant dense<0.000000e+00> : vector<64x128xf32>
    %116 = tpu.matmul %115, %114, %cst_128 {dimension_numbers = #tpu.dot_dimension_numbers<[1], [0], [0], [1], [0, 0, 1, 1], [], []>} : vector<64x128xbf16>, vector<128x128xbf16>, vector<64x128xf32> -> vector<64x128xf32>
    %117 = arith.addf %110, %116 : vector<64x128xf32>
    %c1_129 = arith.constant 1 : index
    %c0_130 = arith.constant 0 : index
    %c0_131 = arith.constant 0 : index
    %118 = vector.load %arg19[%c1_129, %c0_130, %c0_131] : memref<9x9x128xf32, #tpu.memory_space<vmem>>, vector<8x8x128xf32>
    %119 = vector.shape_cast %118 : vector<8x8x128xf32> to vector<64x128xf32>
    %c2_132 = arith.constant 2 : index
    %c1_133 = arith.constant 1 : index
    %c0_134 = arith.constant 0 : index
    %c0_135 = arith.constant 0 : index
    %120 = vector.load %arg8[%c2_132, %c1_133, %c0_134, %c0_135] : memref<3x3x128x128xbf16, #tpu.memory_space<vmem>>, vector<1x1x128x128xbf16>
    %121 = vector.shape_cast %120 : vector<1x1x128x128xbf16> to vector<128x128xbf16>
    %122 = arith.truncf %119 : vector<64x128xf32> to vector<64x128xbf16>
    %cst_136 = arith.constant dense<0.000000e+00> : vector<64x128xf32>
    %123 = tpu.matmul %122, %121, %cst_136 {dimension_numbers = #tpu.dot_dimension_numbers<[1], [0], [0], [1], [0, 0, 1, 1], [], []>} : vector<64x128xbf16>, vector<128x128xbf16>, vector<64x128xf32> -> vector<64x128xf32>
    %124 = arith.addf %117, %123 : vector<64x128xf32>
    %c1_137 = arith.constant 1 : index
    %c1_138 = arith.constant 1 : index
    %c0_139 = arith.constant 0 : index
    %125 = vector.load %arg18[%c1_137, %c1_138, %c0_139] : memref<9x9x128xf32, #tpu.memory_space<vmem>>, vector<8x8x128xf32>
    %126 = vector.shape_cast %125 : vector<8x8x128xf32> to vector<64x128xf32>
    %c2_140 = arith.constant 2 : index
    %c2_141 = arith.constant 2 : index
    %c0_142 = arith.constant 0 : index
    %c0_143 = arith.constant 0 : index
    %127 = vector.load %arg8[%c2_140, %c2_141, %c0_142, %c0_143] : memref<3x3x128x128xbf16, #tpu.memory_space<vmem>>, vector<1x1x128x128xbf16>
    %128 = vector.shape_cast %127 : vector<1x1x128x128xbf16> to vector<128x128xbf16>
    %129 = arith.truncf %126 : vector<64x128xf32> to vector<64x128xbf16>
    %cst_144 = arith.constant dense<0.000000e+00> : vector<64x128xf32>
    %130 = tpu.matmul %129, %128, %cst_144 {dimension_numbers = #tpu.dot_dimension_numbers<[1], [0], [0], [1], [0, 0, 1, 1], [], []>} : vector<64x128xbf16>, vector<128x128xbf16>, vector<64x128xf32> -> vector<64x128xf32>
    %131 = arith.addf %124, %130 : vector<64x128xf32>
    %c0_145 = arith.constant 0 : index
    %c0_146 = arith.constant 0 : index
    %132 = vector.load %arg9[%c0_145, %c0_146] : memref<1x128xf32, #tpu.memory_space<vmem>>, vector<1x128xf32>
    %133 = vector.broadcast %132 : vector<1x128xf32> to vector<64x128xf32>
    %134 = arith.mulf %131, %133 : vector<64x128xf32>
    %c0_147 = arith.constant 0 : index
    %c0_148 = arith.constant 0 : index
    %135 = vector.load %arg10[%c0_147, %c0_148] : memref<1x128xf32, #tpu.memory_space<vmem>>, vector<1x128xf32>
    %136 = vector.broadcast %135 : vector<1x128xf32> to vector<64x128xf32>
    %137 = arith.addf %134, %136 : vector<64x128xf32>
    %cst_149 = arith.constant 0.000000e+00 : f32
    %138 = vector.broadcast %cst_149 : f32 to vector<64x128xf32>
    %139 = arith.maximumf %137, %138 : vector<64x128xf32>
    %c0_150 = arith.constant 0 : index
    %c0_151 = arith.constant 0 : index
    %140 = vector.load %arg11[%c0_150, %c0_151] : memref<128x128xbf16, #tpu.memory_space<vmem>>, vector<128x128xbf16>
    %141 = arith.truncf %139 : vector<64x128xf32> to vector<64x128xbf16>
    %cst_152 = arith.constant dense<0.000000e+00> : vector<64x128xf32>
    %142 = tpu.matmul %141, %140, %cst_152 {dimension_numbers = #tpu.dot_dimension_numbers<[1], [0], [0], [1], [0, 0, 1, 1], [], []>} : vector<64x128xbf16>, vector<128x128xbf16>, vector<64x128xf32> -> vector<64x128xf32>
    %c0_153 = arith.constant 0 : index
    %c0_154 = arith.constant 0 : index
    %143 = vector.load %arg12[%c0_153, %c0_154] : memref<1x128xf32, #tpu.memory_space<vmem>>, vector<1x128xf32>
    %144 = vector.broadcast %143 : vector<1x128xf32> to vector<64x128xf32>
    %145 = arith.mulf %142, %144 : vector<64x128xf32>
    %c0_155 = arith.constant 0 : index
    %c0_156 = arith.constant 0 : index
    %146 = vector.load %arg13[%c0_155, %c0_156] : memref<1x128xf32, #tpu.memory_space<vmem>>, vector<1x128xf32>
    %147 = vector.broadcast %146 : vector<1x128xf32> to vector<64x128xf32>
    %148 = arith.addf %145, %147 : vector<64x128xf32>
    %c0_157 = arith.constant 0 : index
    %c0_158 = arith.constant 0 : index
    %c0_159 = arith.constant 0 : index
    %c0_160 = arith.constant 0 : index
    %149 = vector.load %arg4[%c0_157, %c0_158, %c0_159, %c0_160] : memref<1x8x8x128xbf16, #tpu.memory_space<vmem>>, vector<1x8x8x128xbf16>
    %150 = vector.shape_cast %149 : vector<1x8x8x128xbf16> to vector<8x8x128xbf16>
    %151 = vector.shape_cast %150 : vector<8x8x128xbf16> to vector<64x128xbf16>
    %c0_161 = arith.constant 0 : index
    %c0_162 = arith.constant 0 : index
    %152 = vector.load %arg14[%c0_161, %c0_162] : memref<128x128xbf16, #tpu.memory_space<vmem>>, vector<128x128xbf16>
    %cst_163 = arith.constant dense<0.000000e+00> : vector<64x128xf32>
    %153 = tpu.matmul %151, %152, %cst_163 {dimension_numbers = #tpu.dot_dimension_numbers<[1], [0], [0], [1], [0, 0, 1, 1], [], []>} : vector<64x128xbf16>, vector<128x128xbf16>, vector<64x128xf32> -> vector<64x128xf32>
    %c0_164 = arith.constant 0 : index
    %c0_165 = arith.constant 0 : index
    %154 = vector.load %arg15[%c0_164, %c0_165] : memref<1x128xf32, #tpu.memory_space<vmem>>, vector<1x128xf32>
    %155 = vector.broadcast %154 : vector<1x128xf32> to vector<64x128xf32>
    %156 = arith.mulf %153, %155 : vector<64x128xf32>
    %c0_166 = arith.constant 0 : index
    %c0_167 = arith.constant 0 : index
    %157 = vector.load %arg16[%c0_166, %c0_167] : memref<1x128xf32, #tpu.memory_space<vmem>>, vector<1x128xf32>
    %158 = vector.broadcast %157 : vector<1x128xf32> to vector<64x128xf32>
    %159 = arith.addf %156, %158 : vector<64x128xf32>
    %160 = arith.addf %148, %159 : vector<64x128xf32>
    %cst_168 = arith.constant 0.000000e+00 : f32
    %161 = vector.broadcast %cst_168 : f32 to vector<64x128xf32>
    %162 = arith.maximumf %160, %161 : vector<64x128xf32>
    %163 = vector.shape_cast %162 : vector<64x128xf32> to vector<8x8x128xf32>
    %c0_169 = arith.constant 0 : index
    %c0_170 = arith.constant 0 : index
    %c0_171 = arith.constant 0 : index
    %c0_172 = arith.constant 0 : index
    %164 = vector.load %arg17[%c0_169, %c0_170, %c0_171, %c0_172] : memref<1x8x8x128xf32, #tpu.memory_space<vmem>>, vector<1x8x8x128xf32>
    %165 = vector.shape_cast %164 : vector<1x8x8x128xf32> to vector<8x8x128xf32>
    %166 = vector.shape_cast %163 : vector<8x8x128xf32> to vector<1x8x8x128xf32>
    tpu.vector_store %arg17[%c0_169, %c0_170, %c0_171, %c0_172], %166 {strides = array<i32>} : memref<1x8x8x128xf32, #tpu.memory_space<vmem>>, vector<1x8x8x128xf32>,
    return
  }
  func.func @transform_0(%arg0: i32) -> (i32, i32, i32, i32) {
    %c0_i32 = arith.constant 0 : i32
    %c0_i32_0 = arith.constant 0 : i32
    %c0_i32_1 = arith.constant 0 : i32
    %c0_i32_2 = arith.constant 0 : i32
    return %arg0, %c0_i32, %c0_i32_0, %c0_i32_1 : i32, i32, i32, i32
  }
  func.func @transform_1(%arg0: i32) -> (i32, i32, i32, i32) {
    %c0_i32 = arith.constant 0 : i32
    %c0_i32_0 = arith.constant 0 : i32
    %c0_i32_1 = arith.constant 0 : i32
    %c0_i32_2 = arith.constant 0 : i32
    return %arg0, %c0_i32, %c0_i32_0, %c0_i32_1 : i32, i32, i32, i32
  }
  func.func @transform_2(%arg0: i32) -> (i32, i32, i32, i32) {
    %c0_i32 = arith.constant 0 : i32
    %c0_i32_0 = arith.constant 0 : i32
    %c0_i32_1 = arith.constant 0 : i32
    %c0_i32_2 = arith.constant 0 : i32
    return %arg0, %c0_i32, %c0_i32_0, %c0_i32_1 : i32, i32, i32, i32
  }
  func.func @transform_3(%arg0: i32) -> (i32, i32, i32, i32) {
    %c0_i32 = arith.constant 0 : i32
    %c0_i32_0 = arith.constant 0 : i32
    %c0_i32_1 = arith.constant 0 : i32
    %c0_i32_2 = arith.constant 0 : i32
    return %arg0, %c0_i32, %c0_i32_0, %c0_i32_1 : i32, i32, i32, i32
  }
  func.func @transform_4(%arg0: i32) -> (i32, i32) {
    %c0_i32 = arith.constant 0 : i32
    %c0_i32_0 = arith.constant 0 : i32
    %c0_i32_1 = arith.constant 0 : i32
    return %c0_i32, %c0_i32_0 : i32, i32
  }
  func.func @transform_5(%arg0: i32) -> (i32, i32) {
    %c0_i32 = arith.constant 0 : i32
    %c0_i32_0 = arith.constant 0 : i32
    %c0_i32_1 = arith.constant 0 : i32
    return %c0_i32, %c0_i32_0 : i32, i32
  }
  func.func @transform_6(%arg0: i32) -> (i32, i32) {
    %c0_i32 = arith.constant 0 : i32
    %c0_i32_0 = arith.constant 0 : i32
    %c0_i32_1 = arith.constant 0 : i32
    return %c0_i32, %c0_i32_0 : i32, i32
  }
  func.func @transform_7(%arg0: i32) -> (i32, i32, i32, i32) {
    %c0_i32 = arith.constant 0 : i32
    %c0_i32_0 = arith.constant 0 : i32
    %c0_i32_1 = arith.constant 0 : i32
    %c0_i32_2 = arith.constant 0 : i32
    %c0_i32_3 = arith.constant 0 : i32
    return %c0_i32, %c0_i32_0, %c0_i32_1, %c0_i32_2 : i32, i32, i32, i32
  }
  func.func @transform_8(%arg0: i32) -> (i32, i32) {
    %c0_i32 = arith.constant 0 : i32
    %c0_i32_0 = arith.constant 0 : i32
    %c0_i32_1 = arith.constant 0 : i32
    return %c0_i32, %c0_i32_0 : i32, i32
  }
  func.func @transform_9(%arg0: i32) -> (i32, i32) {
    %c0_i32 = arith.constant 0 : i32
    %c0_i32_0 = arith.constant 0 : i32
    %c0_i32_1 = arith.constant 0 : i32
    return %c0_i32, %c0_i32_0 : i32, i32
  }
  func.func @transform_10(%arg0: i32) -> (i32, i32) {
    %c0_i32 = arith.constant 0 : i32
    %c0_i32_0 = arith.constant 0 : i32
    %c0_i32_1 = arith.constant 0 : i32
    return %c0_i32, %c0_i32_0 : i32, i32
  }
  func.func @transform_11(%arg0: i32) -> (i32, i32) {
    %c0_i32 = arith.constant 0 : i32
    %c0_i32_0 = arith.constant 0 : i32
    %c0_i32_1 = arith.constant 0 : i32
    return %c0_i32, %c0_i32_0 : i32, i32
  }
  func.func @transform_12(%arg0: i32) -> (i32, i32) {
    %c0_i32 = arith.constant 0 : i32
    %c0_i32_0 = arith.constant 0 : i32
    %c0_i32_1 = arith.constant 0 : i32
    return %c0_i32, %c0_i32_0 : i32, i32
  }
  func.func @transform_13(%arg0: i32) -> (i32, i32) {
    %c0_i32 = arith.constant 0 : i32
    %c0_i32_0 = arith.constant 0 : i32
    %c0_i32_1 = arith.constant 0 : i32
    return %c0_i32, %c0_i32_0 : i32, i32
  }
  func.func @transform_14(%arg0: i32) -> (i32, i32) {
    %c0_i32 = arith.constant 0 : i32
    %c0_i32_0 = arith.constant 0 : i32
    %c0_i32_1 = arith.constant 0 : i32
    return %c0_i32, %c0_i32_0 : i32, i32
  }
  func.func @transform_15(%arg0: i32) -> (i32, i32) {
    %c0_i32 = arith.constant 0 : i32
    %c0_i32_0 = arith.constant 0 : i32
    %c0_i32_1 = arith.constant 0 : i32
    return %c0_i32, %c0_i32_0 : i32, i32
  }
  func.func @transform_16(%arg0: i32) -> (i32, i32, i32, i32) {
    %c0_i32 = arith.constant 0 : i32
    %c0_i32_0 = arith.constant 0 : i32
    %c0_i32_1 = arith.constant 0 : i32
    %c0_i32_2 = arith.constant 0 : i32
    return %arg0, %c0_i32, %c0_i32_0, %c0_i32_1 : i32, i32, i32, i32
  }
}

</mosaic_0001>

<llo_original>
// kernel: tpu_custom_call.1
$region0: #{tpu_custom_call.1}
  #allocation0 [shape = 'u32[]', space=smem, size = 0x4, offset = 0x4, fixed_abs, tag = 'smem constant byte address 0x4 - core index']
  #allocation1 [shape = 'u32[144,128]{1,0:T(1,128)}', space=vmem, size = 0x12000, scoped, tag = 'internal scratch']
  #allocation2 [shape = 'f32[9,9,128]{2,1,0:T(8,128)}', space=vmem, size = 0x12000, scoped, tag = 'scratch operand']
  #allocation3 [shape = 'f32[9,9,128]{2,1,0:T(8,128)}', space=vmem, size = 0x12000, scoped, tag = 'scratch operand']
  #allocation4 [shape = 'f32[9,9,128]{2,1,0:T(8,128)}', space=vmem, size = 0x12000, scoped, tag = 'scratch operand']
  #allocation5 [shape = 'f32[9,9,128]{2,1,0:T(8,128)}', space=vmem, size = 0x12000, scoped, tag = 'scratch operand']
  %s0 = inlined_call_operand.hbm [shape: bf16[2,8,8,128], index: 0, kind: input, shape index: {}]
  %s1 = inlined_call_operand.hbm [shape: bf16[2,8,8,128], index: 1, kind: input, shape index: {}]
  %s2 = inlined_call_operand.hbm [shape: bf16[2,8,8,128], index: 2, kind: input, shape index: {}]
  %s3 = inlined_call_operand.hbm [shape: bf16[2,8,8,128], index: 3, kind: input, shape index: {}]
  %s4 = inlined_call_operand.hbm [shape: bf16[128,128], index: 4, kind: input, shape index: {}]
  %s5 = inlined_call_operand.vmem [shape: f32[1,128], index: 5, kind: input, shape index: {}]
  %s6 = inlined_call_operand.vmem [shape: f32[1,128], index: 6, kind: input, shape index: {}]
  %s7 = inlined_call_operand.hbm [shape: bf16[3,3,128,128], index: 7, kind: input, shape index: {}]
  %s8 = inlined_call_operand.vmem [shape: f32[1,128], index: 8, kind: input, shape index: {}]
  %s9 = inlined_call_operand.vmem [shape: f32[1,128], index: 9, kind: input, shape index: {}]
  %s10 = inlined_call_operand.hbm [shape: bf16[128,128], index: 10, kind: input, shape index: {}]
  %s11 = inlined_call_operand.vmem [shape: f32[1,128], index: 11, kind: input, shape index: {}]
  %s12 = inlined_call_operand.vmem [shape: f32[1,128], index: 12, kind: input, shape index: {}]
  %s13 = inlined_call_operand.hbm [shape: bf16[128,128], index: 13, kind: input, shape index: {}]
  %s14 = inlined_call_operand.vmem [shape: f32[1,128], index: 14, kind: input, shape index: {}]
  %s15 = inlined_call_operand.vmem [shape: f32[1,128], index: 15, kind: input, shape index: {}]
  %s16 = inlined_call_operand.hbm [shape: f32[2,8,8,128], index: 16, kind: output, shape index: {}]
  %s17 = sld [smem:[#allocation0]]
  $region129: #{tpu_custom_call.1} parent=0
    _
  %s19 = ssub.s32 1, %s17
  %s20 = scalar_select 0, %s19, %s17
  $region1: #{tpu_custom_call.1} parent=0
    #allocation6 [shape = 'u8[32768]{0}', space=vmem, size = 0x8000, scoped, tag = 'input window, operand 0']
    #allocation7 [shape = 's32[2]{0}', space=sflag, size = 0x8, scoped, tag = 'scoped memory for tpu_custom_call.1']
    #allocation8 [shape = 's32[2]{0}', space=sflag, size = 0x8, scoped, tag = 'scoped memory for tpu_custom_call.1']
    #allocation9 [shape = 'u8[32768]{0}', space=vmem, size = 0x8000, scoped, tag = 'input window, operand 1']
    #allocation10 [shape = 's32[2]{0}', space=sflag, size = 0x8, scoped, tag = 'scoped memory for tpu_custom_call.1']
    #allocation11 [shape = 'u8[32768]{0}', space=vmem, size = 0x8000, scoped, tag = 'input window, operand 2']
    #allocation12 [shape = 'u8[32768]{0}', space=vmem, size = 0x8000, scoped, tag = 'input window, operand 3']
    #allocation13 [shape = 's32[2]{0}', space=sflag, size = 0x8, scoped, tag = 'scoped memory for tpu_custom_call.1']
    #allocation14 [shape = 'u8[32768]{0}', space=vmem, size = 0x8000, scoped, tag = 'input window, operand 4, single buffered']
    #allocation15 [shape = 'u8[294912]{0}', space=vmem, size = 0x48000, scoped, tag = 'input window, operand 7, single buffered']
    #allocation16 [shape = 's32[1]{0}', space=sflag, size = 0x4, scoped, tag = 'scoped memory for tpu_custom_call.1']
    #allocation17 [shape = 'u8[32768]{0}', space=vmem, size = 0x8000, scoped, tag = 'input window, operand 10, single buffered']
    #allocation18 [shape = 'u8[32768]{0}', space=vmem, size = 0x8000, scoped, tag = 'input window, operand 13, single buffered']
    #allocation19 [shape = 's32[1]{0}', space=sflag, size = 0x4, scoped, tag = 'scoped memory for tpu_custom_call.1']
    #allocation20 [shape = 'u8[65536]{0}', space=vmem, size = 0x10000, scoped, tag = 'output window, operand 0']
    %21 = vsyncpa [#allocation7], 0
    %s22 = scalar_lea.sflag [#allocation7], 1
    %23 = vsyncpa %s22, 0
    %24 = vsyncpa [#allocation10], 0
    %s25 = scalar_lea.sflag [#allocation10], 1
    %26 = vsyncpa %s25, 0
    %27 = vsyncpa [#allocation13], 0
    %s28 = scalar_lea.sflag [#allocation13], 1
    %29 = vsyncpa %s28, 0
    %30 = vsyncpa [#allocation16], 0
    %31 = vsyncpa [#allocation19], 0
    %32 = vsyncpa [#allocation8], 0
    %s33 = scalar_lea.sflag [#allocation8], 1
    %34 = vsyncpa %s33, 0
    loop: start=0, step=1, limit=4
    $region2: #{tpu_custom_call.1} parent=1 // loop_pre_header
      _
    $region3: #{tpu_custom_call.1} parent=1 // loop_header
      %s36 = sphi 0, %s40
      %p37 = scmp.ge.s32.totalorder %s36, 4
      %s46 = sphi 0, %s48
      %s49 = sphi 0, %s46
      %s50 = sphi 0, %s49
      %s66 = sphi 0, %s50
      %s72 = sphi 0, %s74
      %s75 = sphi 0, %s72
      %s76 = sphi 0, %s75
      %s92 = sphi 0, %s76
      %s98 = sphi 0, %s100
      %s101 = sphi 0, %s98
      %s102 = sphi 0, %s101
      %s118 = sphi 0, %s102
      %s124 = sphi 0, %s126
      %s127 = sphi 0, %s124
      %s128 = sphi 0, %s127
      %s144 = sphi 0, %s128
      %s148 = sphi 0, %s148
      %s150 = sphi 0, %s148
      %s151 = sphi 0, %s150
      %s165 = sphi 0, %s151
      %s169 = sphi 0, %s169
      %s171 = sphi 0, %s169
      %s172 = sphi 0, %s171
      %s186 = sphi 0, %s172
      %s190 = sphi 0, %s190
      %s192 = sphi 0, %s190
      %s193 = sphi 0, %s192
      %s207 = sphi 0, %s193
      %s211 = sphi 0, %s211
      %s213 = sphi 0, %s211
      %s214 = sphi 0, %s213
      %s228 = sphi 0, %s214
      %s232 = sphi 0, %s232
      %s234 = sphi 0, %s232
      %s235 = sphi 0, %s234
      %s249 = sphi 0, %s235
      %s253 = sphi 0, %s253
      %s255 = sphi 0, %s253
      %s256 = sphi 0, %s255
      %s270 = sphi 0, %s256
      %s274 = sphi 0, %s274
      %s276 = sphi 0, %s274
      %s277 = sphi 0, %s276
      %s291 = sphi 0, %s277
      %s295 = sphi 0, %s295
      %s297 = sphi 0, %s295
      %s298 = sphi 0, %s297
      %s312 = sphi 0, %s298
      %s316 = sphi 0, %s316
      %s318 = sphi 0, %s316
      %s319 = sphi 0, %s318
      %s333 = sphi 0, %s319
      %s337 = sphi 0, %s337
      %s339 = sphi 0, %s337
      %s340 = sphi 0, %s339
      %s354 = sphi 0, %s340
      %s358 = sphi 0, %s358
      %s360 = sphi 0, %s358
      %s361 = sphi 0, %s360
      %s375 = sphi 0, %s361
      %s379 = sphi 0, %s379
      %s381 = sphi 0, %s379
      %s382 = sphi 0, %s381
      %s396 = sphi 0, %s382
      %s402 = sphi 0, %s404
      %s405 = sphi 0, %s402
      %s406 = sphi 0, %s405
      %s422 = sphi 0, %s406
    $region4: #{tpu_custom_call.1} parent=1 // loop_header_branch
      %39 = sbr.rel (%p37) target = $region8
    $region5: #{tpu_custom_call.1} parent=1 // loop_body
      %s41 = ssub.s32 %s36, 1
      %s42 = ssub.s32 %s36, 2
      %s43 = sadd.s32 %s36, 1
      %s44 = ssub.s32 %s36, %s43
      %p45 = scmp.eq.s32.totalorder %s44, 0
      %s47 = sadd.s32 %s46, 1
      %s48 = scalar_select %p45, %s46, %s47
      %p51 = pneg %p45
      %p52 = scmp.eq.s32.totalorder %s36, 1
      %p53 = por %p51, %p52
      %p54 = scmp.ne.s32.totalorder %s46, %s49
      %p55 = scmp.eq.s32.totalorder %s36, 0
      %p56 = por %p54, %p55
      %p57 = scmp.ne.s32.totalorder %s46, %s49
      %p58 = scmp.eq.s32.totalorder %s41, 1
      %p59 = por %p57, %p58
      %p60 = scmp.ne.s32.totalorder %s49, %s50
      %p61 = scmp.eq.s32.totalorder %s41, 0
      %p62 = por %p60, %p61
      %p63 = scmp.ne.s32.totalorder %s49, %s50
      %p64 = scmp.eq.s32.totalorder %s42, 1
      %p65 = por %p63, %p64
      %p67 = scmp.ne.s32.totalorder %s50, %s66
      %p68 = scmp.eq.s32.totalorder %s42, 0
      %p69 = por %p67, %p68
      %s70 = ssub.s32 %s36, %s43
      %p71 = scmp.eq.s32.totalorder %s70, 0
      %s73 = sadd.s32 %s72, 1
      %s74 = scalar_select %p71, %s72, %s73
      %p77 = pneg %p71
      %p78 = scmp.eq.s32.totalorder %s36, 1
      %p79 = por %p77, %p78
      %p80 = scmp.ne.s32.totalorder %s72, %s75
      %p81 = scmp.eq.s32.totalorder %s36, 0
      %p82 = por %p80, %p81
      %p83 = scmp.ne.s32.totalorder %s72, %s75
      %p84 = scmp.eq.s32.totalorder %s41, 1
      %p85 = por %p83, %p84
      %p86 = scmp.ne.s32.totalorder %s75, %s76
      %p87 = scmp.eq.s32.totalorder %s41, 0
      %p88 = por %p86, %p87
      %p89 = scmp.ne.s32.totalorder %s75, %s76
      %p90 = scmp.eq.s32.totalorder %s42, 1
      %p91 = por %p89, %p90
      %p93 = scmp.ne.s32.totalorder %s76, %s92
      %p94 = scmp.eq.s32.totalorder %s42, 0
      %p95 = por %p93, %p94
      %s96 = ssub.s32 %s36, %s43
      %p97 = scmp.eq.s32.totalorder %s96, 0
      %s99 = sadd.s32 %s98, 1
      %s100 = scalar_select %p97, %s98, %s99
      %p103 = pneg %p97
      %p104 = scmp.eq.s32.totalorder %s36, 1
      %p105 = por %p103, %p104
      %p106 = scmp.ne.s32.totalorder %s98, %s101
      %p107 = scmp.eq.s32.totalorder %s36, 0
      %p108 = por %p106, %p107
      %p109 = scmp.ne.s32.totalorder %s98, %s101
      %p110 = scmp.eq.s32.totalorder %s41, 1
      %p111 = por %p109, %p110
      %p112 = scmp.ne.s32.totalorder %s101, %s102
      %p113 = scmp.eq.s32.totalorder %s41, 0
      %p114 = por %p112, %p113
      %p115 = scmp.ne.s32.totalorder %s101, %s102
      %p116 = scmp.eq.s32.totalorder %s42, 1
      %p117 = por %p115, %p116
      %p119 = scmp.ne.s32.totalorder %s102, %s118
      %p120 = scmp.eq.s32.totalorder %s42, 0
      %p121 = por %p119, %p120
      %s122 = ssub.s32 %s36, %s43
      %p123 = scmp.eq.s32.totalorder %s122, 0
      %s125 = sadd.s32 %s124, 1
      %s126 = scalar_select %p123, %s124, %s125
      %p129 = pneg %p123
      %p130 = scmp.eq.s32.totalorder %s36, 1
      %p131 = por %p129, %p130
      %p132 = scmp.ne.s32.totalorder %s124, %s127
      %p133 = scmp.eq.s32.totalorder %s36, 0
      %p134 = por %p132, %p133
      %p135 = scmp.ne.s32.totalorder %s124, %s127
      %p136 = scmp.eq.s32.totalorder %s41, 1
      %p137 = por %p135, %p136
      %p138 = scmp.ne.s32.totalorder %s127, %s128
      %p139 = scmp.eq.s32.totalorder %s41, 0
      %p140 = por %p138, %p139
      %p141 = scmp.ne.s32.totalorder %s127, %s128
      %p142 = scmp.eq.s32.totalorder %s42, 1
      %p143 = por %p141, %p142
      %p145 = scmp.ne.s32.totalorder %s128, %s144
      %p146 = scmp.eq.s32.totalorder %s42, 0
      %p147 = por %p145, %p146
      %s149 = sadd.s32 %s148, 1
      %p152 = scmp.eq.s32.totalorder %s36, 1
      %p153 = scmp.ne.s32.totalorder %s148, %s150
      %p154 = scmp.eq.s32.totalorder %s36, 0
      %p155 = por %p153, %p154
      %p156 = scmp.ne.s32.totalorder %s148, %s150
      %p157 = scmp.eq.s32.totalorder %s41, 1
      %p158 = por %p156, %p157
      %p159 = scmp.ne.s32.totalorder %s150, %s151
      %p160 = scmp.eq.s32.totalorder %s41, 0
      %p161 = por %p159, %p160
      %p162 = scmp.ne.s32.totalorder %s150, %s151
      %p163 = scmp.eq.s32.totalorder %s42, 1
      %p164 = por %p162, %p163
      %p166 = scmp.ne.s32.totalorder %s151, %s165
      %p167 = scmp.eq.s32.totalorder %s42, 0
      %p168 = por %p166, %p167
      %s170 = sadd.s32 %s169, 1
      %p173 = scmp.eq.s32.totalorder %s36, 1
      %p174 = scmp.ne.s32.totalorder %s169, %s171
      %p175 = scmp.eq.s32.totalorder %s36, 0
      %p176 = por %p174, %p175
      %p177 = scmp.ne.s32.totalorder %s169, %s171
      %p178 = scmp.eq.s32.totalorder %s41, 1
      %p179 = por %p177, %p178
      %p180 = scmp.ne.s32.totalorder %s171, %s172
      %p181 = scmp.eq.s32.totalorder %s41, 0
      %p182 = por %p180, %p181
      %p183 = scmp.ne.s32.totalorder %s171, %s172
      %p184 = scmp.eq.s32.totalorder %s42, 1
      %p185 = por %p183, %p184
      %p187 = scmp.ne.s32.totalorder %s172, %s186
      %p188 = scmp.eq.s32.totalorder %s42, 0
      %p189 = por %p187, %p188
      %s191 = sadd.s32 %s190, 1
      %p194 = scmp.eq.s32.totalorder %s36, 1
      %p195 = scmp.ne.s32.totalorder %s190, %s192
      %p196 = scmp.eq.s32.totalorder %s36, 0
      %p197 = por %p195, %p196
      %p198 = scmp.ne.s32.totalorder %s190, %s192
      %p199 = scmp.eq.s32.totalorder %s41, 1
      %p200 = por %p198, %p199
      %p201 = scmp.ne.s32.totalorder %s192, %s193
      %p202 = scmp.eq.s32.totalorder %s41, 0
      %p203 = por %p201, %p202
      %p204 = scmp.ne.s32.totalorder %s192, %s193
      %p205 = scmp.eq.s32.totalorder %s42, 1
      %p206 = por %p204, %p205
      %p208 = scmp.ne.s32.totalorder %s193, %s207
      %p209 = scmp.eq.s32.totalorder %s42, 0
      %p210 = por %p208, %p209
      %s212 = sadd.s32 %s211, 1
      %p215 = scmp.eq.s32.totalorder %s36, 1
      %p216 = scmp.ne.s32.totalorder %s211, %s213
      %p217 = scmp.eq.s32.totalorder %s36, 0
      %p218 = por %p216, %p217
      %p219 = scmp.ne.s32.totalorder %s211, %s213
      %p220 = scmp.eq.s32.totalorder %s41, 1
      %p221 = por %p219, %p220
      %p222 = scmp.ne.s32.totalorder %s213, %s214
      %p223 = scmp.eq.s32.totalorder %s41, 0
      %p224 = por %p222, %p223
      %p225 = scmp.ne.s32.totalorder %s213, %s214
      %p226 = scmp.eq.s32.totalorder %s42, 1
      %p227 = por %p225, %p226
      %p229 = scmp.ne.s32.totalorder %s214, %s228
      %p230 = scmp.eq.s32.totalorder %s42, 0
      %p231 = por %p229, %p230
      %s233 = sadd.s32 %s232, 1
      %p236 = scmp.eq.s32.totalorder %s36, 1
      %p237 = scmp.ne.s32.totalorder %s232, %s234
      %p238 = scmp.eq.s32.totalorder %s36, 0
      %p239 = por %p237, %p238
      %p240 = scmp.ne.s32.totalorder %s232, %s234
      %p241 = scmp.eq.s32.totalorder %s41, 1
      %p242 = por %p240, %p241
      %p243 = scmp.ne.s32.totalorder %s234, %s235
      %p244 = scmp.eq.s32.totalorder %s41, 0
      %p245 = por %p243, %p244
      %p246 = scmp.ne.s32.totalorder %s234, %s235
      %p247 = scmp.eq.s32.totalorder %s42, 1
      %p248 = por %p246, %p247
      %p250 = scmp.ne.s32.totalorder %s235, %s249
      %p251 = scmp.eq.s32.totalorder %s42, 0
      %p252 = por %p250, %p251
      %s254 = sadd.s32 %s253, 1
      %p257 = scmp.eq.s32.totalorder %s36, 1
      %p258 = scmp.ne.s32.totalorder %s253, %s255
      %p259 = scmp.eq.s32.totalorder %s36, 0
      %p260 = por %p258, %p259
      %p261 = scmp.ne.s32.totalorder %s253, %s255
      %p262 = scmp.eq.s32.totalorder %s41, 1
      %p263 = por %p261, %p262
      %p264 = scmp.ne.s32.totalorder %s255, %s256
      %p265 = scmp.eq.s32.totalorder %s41, 0
      %p266 = por %p264, %p265
      %p267 = scmp.ne.s32.totalorder %s255, %s256
      %p268 = scmp.eq.s32.totalorder %s42, 1
      %p269 = por %p267, %p268
      %p271 = scmp.ne.s32.totalorder %s256, %s270
      %p272 = scmp.eq.s32.totalorder %s42, 0
      %p273 = por %p271, %p272
      %s275 = sadd.s32 %s274, 1
      %p278 = scmp.eq.s32.totalorder %s36, 1
      %p279 = scmp.ne.s32.totalorder %s274, %s276
      %p280 = scmp.eq.s32.totalorder %s36, 0
      %p281 = por %p279, %p280
      %p282 = scmp.ne.s32.totalorder %s274, %s276
      %p283 = scmp.eq.s32.totalorder %s41, 1
      %p284 = por %p282, %p283
      %p285 = scmp.ne.s32.totalorder %s276, %s277
      %p286 = scmp.eq.s32.totalorder %s41, 0
      %p287 = por %p285, %p286
      %p288 = scmp.ne.s32.totalorder %s276, %s277
      %p289 = scmp.eq.s32.totalorder %s42, 1
      %p290 = por %p288, %p289
      %p292 = scmp.ne.s32.totalorder %s277, %s291
      %p293 = scmp.eq.s32.totalorder %s42, 0
      %p294 = por %p292, %p293
      %s296 = sadd.s32 %s295, 1
      %p299 = scmp.eq.s32.totalorder %s36, 1
      %p300 = scmp.ne.s32.totalorder %s295, %s297
      %p301 = scmp.eq.s32.totalorder %s36, 0
      %p302 = por %p300, %p301
      %p303 = scmp.ne.s32.totalorder %s295, %s297
      %p304 = scmp.eq.s32.totalorder %s41, 1
      %p305 = por %p303, %p304
      %p306 = scmp.ne.s32.totalorder %s297, %s298
      %p307 = scmp.eq.s32.totalorder %s41, 0
      %p308 = por %p306, %p307
      %p309 = scmp.ne.s32.totalorder %s297, %s298
      %p310 = scmp.eq.s32.totalorder %s42, 1
      %p311 = por %p309, %p310
      %p313 = scmp.ne.s32.totalorder %s298, %s312
      %p314 = scmp.eq.s32.totalorder %s42, 0
      %p315 = por %p313, %p314
      %s317 = sadd.s32 %s316, 1
      %p320 = scmp.eq.s32.totalorder %s36, 1
      %p321 = scmp.ne.s32.totalorder %s316, %s318
      %p322 = scmp.eq.s32.totalorder %s36, 0
      %p323 = por %p321, %p322
      %p324 = scmp.ne.s32.totalorder %s316, %s318
      %p325 = scmp.eq.s32.totalorder %s41, 1
      %p326 = por %p324, %p325
      %p327 = scmp.ne.s32.totalorder %s318, %s319
      %p328 = scmp.eq.s32.totalorder %s41, 0
      %p329 = por %p327, %p328
      %p330 = scmp.ne.s32.totalorder %s318, %s319
      %p331 = scmp.eq.s32.totalorder %s42, 1
      %p332 = por %p330, %p331
      %p334 = scmp.ne.s32.totalorder %s319, %s333
      %p335 = scmp.eq.s32.totalorder %s42, 0
      %p336 = por %p334, %p335
      %s338 = sadd.s32 %s337, 1
      %p341 = scmp.eq.s32.totalorder %s36, 1
      %p342 = scmp.ne.s32.totalorder %s337, %s339
      %p343 = scmp.eq.s32.totalorder %s36, 0
      %p344 = por %p342, %p343
      %p345 = scmp.ne.s32.totalorder %s337, %s339
      %p346 = scmp.eq.s32.totalorder %s41, 1
      %p347 = por %p345, %p346
      %p348 = scmp.ne.s32.totalorder %s339, %s340
      %p349 = scmp.eq.s32.totalorder %s41, 0
      %p350 = por %p348, %p349
      %p351 = scmp.ne.s32.totalorder %s339, %s340
      %p352 = scmp.eq.s32.totalorder %s42, 1
      %p353 = por %p351, %p352
      %p355 = scmp.ne.s32.totalorder %s340, %s354
      %p356 = scmp.eq.s32.totalorder %s42, 0
      %p357 = por %p355, %p356
      %s359 = sadd.s32 %s358, 1
      %p362 = scmp.eq.s32.totalorder %s36, 1
      %p363 = scmp.ne.s32.totalorder %s358, %s360
      %p364 = scmp.eq.s32.totalorder %s36, 0
      %p365 = por %p363, %p364
      %p366 = scmp.ne.s32.totalorder %s358, %s360
      %p367 = scmp.eq.s32.totalorder %s41, 1
      %p368 = por %p366, %p367
      %p369 = scmp.ne.s32.totalorder %s360, %s361
      %p370 = scmp.eq.s32.totalorder %s41, 0
      %p371 = por %p369, %p370
      %p372 = scmp.ne.s32.totalorder %s360, %s361
      %p373 = scmp.eq.s32.totalorder %s42, 1
      %p374 = por %p372, %p373
      %p376 = scmp.ne.s32.totalorder %s361, %s375
      %p377 = scmp.eq.s32.totalorder %s42, 0
      %p378 = por %p376, %p377
      %s380 = sadd.s32 %s379, 1
      %p383 = scmp.eq.s32.totalorder %s36, 1
      %p384 = scmp.ne.s32.totalorder %s379, %s381
      %p385 = scmp.eq.s32.totalorder %s36, 0
      %p386 = por %p384, %p385
      %p387 = scmp.ne.s32.totalorder %s379, %s381
      %p388 = scmp.eq.s32.totalorder %s41, 1
      %p389 = por %p387, %p388
      %p390 = scmp.ne.s32.totalorder %s381, %s382
      %p391 = scmp.eq.s32.totalorder %s41, 0
      %p392 = por %p390, %p391
      %p393 = scmp.ne.s32.totalorder %s381, %s382
      %p394 = scmp.eq.s32.totalorder %s42, 1
      %p395 = por %p393, %p394
      %p397 = scmp.ne.s32.totalorder %s382, %s396
      %p398 = scmp.eq.s32.totalorder %s42, 0
      %p399 = por %p397, %p398
      %s400 = ssub.s32 %s36, %s43
      %p401 = scmp.eq.s32.totalorder %s400, 0
      %s403 = sadd.s32 %s402, 1
      %s404 = scalar_select %p401, %s402, %s403
      %p407 = pneg %p401
      %p408 = scmp.eq.s32.totalorder %s36, 1
      %p409 = por %p407, %p408
      %p410 = scmp.ne.s32.totalorder %s402, %s405
      %p411 = scmp.eq.s32.totalorder %s36, 0
      %p412 = por %p410, %p411
      %p413 = scmp.ne.s32.totalorder %s402, %s405
      %p414 = scmp.eq.s32.totalorder %s41, 1
      %p415 = por %p413, %p414
      %p416 = scmp.ne.s32.totalorder %s405, %s406
      %p417 = scmp.eq.s32.totalorder %s41, 0
      %p418 = por %p416, %p417
      %p419 = scmp.ne.s32.totalorder %s405, %s406
      %p420 = scmp.eq.s32.totalorder %s42, 1
      %p421 = por %p419, %p420
      %p423 = scmp.ne.s32.totalorder %s406, %s422
      %p424 = scmp.eq.s32.totalorder %s42, 0
      %p425 = por %p423, %p424
      %p426 = scmp.le.s32.totalorder 1, %s36
      %p427 = scmp.lt.s32.totalorder %s36, 3
      %p428 = pnand %p426, %p427
      %p429 = pneg %p428
      // Predicated region
      $region9: #{tpu_custom_call.1} parent=5 // pred_check
        _
      $region10: #{tpu_custom_call.1} parent=5 // pred_check_branch
        %431 = sbr.rel (%p428) target = $region12
      $region11: #{tpu_custom_call.1} parent=5 // pred_region
        %s432 = ssub.s32 %s36, 1
        // Predicated region
        $region13: #{tpu_custom_call.1} parent=11 // pred_check
          %p433 = pneg %p161
        $region14: #{tpu_custom_call.1} parent=11 // pred_check_branch
          %435 = sbr.rel (%p433) target = $region16
        $region15: #{tpu_custom_call.1} parent=11 // pred_region
          %s437 = ssub.s32 1024, 1024
          %438 = vsyncadd [#allocation13], %s437
          %s439 = sshll.u32 [#allocation14], 4
          %s440 = int_to_ptr.vmem [resolvable:$true] %s439
          %445 = dma.hbm_to_vmem [thread:$0]  %s4, 1024, %s440, [#allocation13], 64, 64, 4
        $region16: #{tpu_custom_call.1} parent=11 // pred_fallthru
          _
        // Predicated region
        $region17: #{tpu_custom_call.1} parent=11 // pred_check
          %p446 = pneg %p182
        $region18: #{tpu_custom_call.1} parent=11 // pred_check_branch
          %448 = sbr.rel (%p446) target = $region20
        $region19: #{tpu_custom_call.1} parent=11 // pred_region
          _
        $region20: #{tpu_custom_call.1} parent=11 // pred_fallthru
          _
        // Predicated region
        $region21: #{tpu_custom_call.1} parent=11 // pred_check
          %p449 = pneg %p203
        $region22: #{tpu_custom_call.1} parent=11 // pred_check_branch
          %451 = sbr.rel (%p449) target = $region24
        $region23: #{tpu_custom_call.1} parent=11 // pred_region
          _
        $region24: #{tpu_custom_call.1} parent=11 // pred_fallthru
          _
        // Predicated region
        $region25: #{tpu_custom_call.1} parent=11 // pred_check
          %p452 = pneg %p224
        $region26: #{tpu_custom_call.1} parent=11 // pred_check_branch
          %454 = sbr.rel (%p452) target = $region28
        $region27: #{tpu_custom_call.1} parent=11 // pred_region
          %s456 = ssub.s32 9216, 9216
          %457 = vsyncadd [#allocation16], %s456
          %s458 = sshll.u32 [#allocation15], 4
          %s459 = int_to_ptr.vmem [resolvable:$true] %s458
          %464 = dma.hbm_to_vmem [thread:$0]  %s7, 9216, %s459, [#allocation16], 64, 64, 4
        $region28: #{tpu_custom_call.1} parent=11 // pred_fallthru
          _
        // Predicated region
        $region29: #{tpu_custom_call.1} parent=11 // pred_check
          %p465 = pneg %p245
        $region30: #{tpu_custom_call.1} parent=11 // pred_check_branch
          %467 = sbr.rel (%p465) target = $region32
        $region31: #{tpu_custom_call.1} parent=11 // pred_region
          _
        $region32: #{tpu_custom_call.1} parent=11 // pred_fallthru
          _
        // Predicated region
        $region33: #{tpu_custom_call.1} parent=11 // pred_check
          %p468 = pneg %p266
        $region34: #{tpu_custom_call.1} parent=11 // pred_check_branch
          %470 = sbr.rel (%p468) target = $region36
        $region35: #{tpu_custom_call.1} parent=11 // pred_region
          _
        $region36: #{tpu_custom_call.1} parent=11 // pred_fallthru
          _
        // Predicated region
        $region37: #{tpu_custom_call.1} parent=11 // pred_check
          %p471 = pneg %p287
        $region38: #{tpu_custom_call.1} parent=11 // pred_check_branch
          %473 = sbr.rel (%p471) target = $region40
        $region39: #{tpu_custom_call.1} parent=11 // pred_region
          %s475 = ssub.s32 1024, 1024
          %476 = vsyncadd [#allocation16], %s475
          %s477 = sshll.u32 [#allocation17], 4
          %s478 = int_to_ptr.vmem [resolvable:$true] %s477
          %483 = dma.hbm_to_vmem [thread:$0]  %s10, 1024, %s478, [#allocation16], 64, 64, 4
        $region40: #{tpu_custom_call.1} parent=11 // pred_fallthru
          _
        // Predicated region
        $region41: #{tpu_custom_call.1} parent=11 // pred_check
          %p484 = pneg %p308
        $region42: #{tpu_custom_call.1} parent=11 // pred_check_branch
          %486 = sbr.rel (%p484) target = $region44
        $region43: #{tpu_custom_call.1} parent=11 // pred_region
          _
        $region44: #{tpu_custom_call.1} parent=11 // pred_fallthru
          _
        // Predicated region
        $region45: #{tpu_custom_call.1} parent=11 // pred_check
          %p487 = pneg %p329
        $region46: #{tpu_custom_call.1} parent=11 // pred_check_branch
          %489 = sbr.rel (%p487) target = $region48
        $region47: #{tpu_custom_call.1} parent=11 // pred_region
          _
        $region48: #{tpu_custom_call.1} parent=11 // pred_fallthru
          _
        // Predicated region
        $region49: #{tpu_custom_call.1} parent=11 // pred_check
          %p490 = pneg %p350
        $region50: #{tpu_custom_call.1} parent=11 // pred_check_branch
          %492 = sbr.rel (%p490) target = $region52
        $region51: #{tpu_custom_call.1} parent=11 // pred_region
          %s494 = ssub.s32 1024, 1024
          %495 = vsyncadd [#allocation19], %s494
          %s496 = sshll.u32 [#allocation18], 4
          %s497 = int_to_ptr.vmem [resolvable:$true] %s496
          %502 = dma.hbm_to_vmem [thread:$0]  %s13, 1024, %s497, [#allocation19], 64, 64, 4
        $region52: #{tpu_custom_call.1} parent=11 // pred_fallthru
          _
        // Predicated region
        $region53: #{tpu_custom_call.1} parent=11 // pred_check
          %p503 = pneg %p371
        $region54: #{tpu_custom_call.1} parent=11 // pred_check_branch
          %505 = sbr.rel (%p503) target = $region56
        $region55: #{tpu_custom_call.1} parent=11 // pred_region
          _
        $region56: #{tpu_custom_call.1} parent=11 // pred_fallthru
          _
        // Predicated region
        $region57: #{tpu_custom_call.1} parent=11 // pred_check
          %p506 = pneg %p392
        $region58: #{tpu_custom_call.1} parent=11 // pred_check_branch
          %508 = sbr.rel (%p506) target = $region60
        $region59: #{tpu_custom_call.1} parent=11 // pred_region
          _
        $region60: #{tpu_custom_call.1} parent=11 // pred_fallthru
          _
      $region12: #{tpu_custom_call.1} parent=5 // pred_fallthru
        _
      %p509 = scmp.lt.s32.totalorder %s36, 2
      // Predicated region
      $region61: #{tpu_custom_call.1} parent=5 // pred_check
        %p510 = pneg %p509
      $region62: #{tpu_custom_call.1} parent=5 // pred_check_branch
        %512 = sbr.rel (%p510) target = $region64
      $region63: #{tpu_custom_call.1} parent=5 // pred_region
        // Predicated region
        $region65: #{tpu_custom_call.1} parent=63 // pred_check
          %p513 = pneg %p56
        $region66: #{tpu_custom_call.1} parent=63 // pred_check_branch
          %515 = sbr.rel (%p513) target = $region68
        $region67: #{tpu_custom_call.1} parent=63 // pred_region
          %s516 = sand.u32 %s46, 1
          %s517 = scalar_lea.sflag [#allocation7], %s516
          %s518 = sand.u32 %s46, 1
          %s519 = smul.addr %s518, 32
          %s520 = scalar_lea.vmem [#allocation6], %s519
          %s522 = ssub.s32 512, 512
          %523 = vsyncadd %s517, %s522
          %s524 = smul.addr %s36, 8
          %s525 = smul.addr %s524, 64
          %s526 = scalar_lea.hbm %s0, %s525
          %s527 = sshll.u32 %s520, 4
          %s528 = int_to_ptr.vmem [resolvable:$true] %s527
          %533 = dma.hbm_to_vmem [thread:$0]  %s526, 512, %s528, %s517, 64, 64, 4
        $region68: #{tpu_custom_call.1} parent=63 // pred_fallthru
          _
        // Predicated region
        $region69: #{tpu_custom_call.1} parent=63 // pred_check
          %p534 = pneg %p82
        $region70: #{tpu_custom_call.1} parent=63 // pred_check_branch
          %536 = sbr.rel (%p534) target = $region72
        $region71: #{tpu_custom_call.1} parent=63 // pred_region
          %s537 = sand.u32 %s36, 1
          %s538 = scalar_lea.sflag [#allocation10], %s537
          %s539 = sand.u32 %s72, 1
          %s540 = smul.addr %s539, 32
          %s541 = scalar_lea.vmem [#allocation9], %s540
          %s543 = ssub.s32 512, 512
          %544 = vsyncadd %s538, %s543
          %s545 = smul.addr %s36, 8
          %s546 = smul.addr %s545, 64
          %s547 = scalar_lea.hbm %s1, %s546
          %s548 = sshll.u32 %s541, 4
          %s549 = int_to_ptr.vmem [resolvable:$true] %s548
          %554 = dma.hbm_to_vmem [thread:$0]  %s547, 512, %s549, %s538, 64, 64, 4
        $region72: #{tpu_custom_call.1} parent=63 // pred_fallthru
          _
        // Predicated region
        $region73: #{tpu_custom_call.1} parent=63 // pred_check
          %p555 = pneg %p108
        $region74: #{tpu_custom_call.1} parent=63 // pred_check_branch
          %557 = sbr.rel (%p555) target = $region76
        $region75: #{tpu_custom_call.1} parent=63 // pred_region
          %s558 = sand.u32 %s36, 1
          %s559 = scalar_lea.sflag [#allocation10], %s558
          %s560 = sand.u32 %s98, 1
          %s561 = smul.addr %s560, 32
          %s562 = scalar_lea.vmem [#allocation11], %s561
          %s564 = ssub.s32 512, 512
          %565 = vsyncadd %s559, %s564
          %s566 = smul.addr %s36, 8
          %s567 = smul.addr %s566, 64
          %s568 = scalar_lea.hbm %s2, %s567
          %s569 = sshll.u32 %s562, 4
          %s570 = int_to_ptr.vmem [resolvable:$true] %s569
          %575 = dma.hbm_to_vmem [thread:$0]  %s568, 512, %s570, %s559, 64, 64, 4
        $region76: #{tpu_custom_call.1} parent=63 // pred_fallthru
          _
        // Predicated region
        $region77: #{tpu_custom_call.1} parent=63 // pred_check
          %p576 = pneg %p134
        $region78: #{tpu_custom_call.1} parent=63 // pred_check_branch
          %578 = sbr.rel (%p576) target = $region80
        $region79: #{tpu_custom_call.1} parent=63 // pred_region
          %s579 = sand.u32 %s36, 1
          %s580 = scalar_lea.sflag [#allocation13], %s579
          %s581 = sand.u32 %s124, 1
          %s582 = smul.addr %s581, 32
          %s583 = scalar_lea.vmem [#allocation12], %s582
          %s585 = ssub.s32 512, 512
          %586 = vsyncadd %s580, %s585
          %s587 = smul.addr %s36, 8
          %s588 = smul.addr %s587, 64
          %s589 = scalar_lea.hbm %s3, %s588
          %s590 = sshll.u32 %s583, 4
          %s591 = int_to_ptr.vmem [resolvable:$true] %s590
          %596 = dma.hbm_to_vmem [thread:$0]  %s589, 512, %s591, %s580, 64, 64, 4
        $region80: #{tpu_custom_call.1} parent=63 // pred_fallthru
          _
      $region64: #{tpu_custom_call.1} parent=5 // pred_fallthru
        _
      %p597 = scmp.le.s32.totalorder 1, %s36
      %p598 = scmp.lt.s32.totalorder %s36, 3
      %p599 = pnand %p597, %p598
      %p600 = pneg %p599
      // Predicated region
      $region81: #{tpu_custom_call.1} parent=5 // pred_check
        _
      $region82: #{tpu_custom_call.1} parent=5 // pred_check_branch
        %602 = sbr.rel (%p599) target = $region84
      $region83: #{tpu_custom_call.1} parent=5 // pred_region
        %s603 = ssub.s32 %s36, 1
        %s604 = sand.u32 %s49, 1
        %s605 = scalar_lea.sflag [#allocation7], %s604
        %s606 = sand.u32 %s49, 1
        %s607 = smul.addr %s606, 32
        %s608 = scalar_lea.vmem [#allocation6], %s607
        // Predicated region
        $region85: #{tpu_custom_call.1} parent=83 // pred_check
          %p609 = pneg %p62
        $region86: #{tpu_custom_call.1} parent=83 // pred_check_branch
          %611 = sbr.rel (%p609) target = $region88
        $region87: #{tpu_custom_call.1} parent=83 // pred_region
          %612 = dma.done %s605, 512
        $region88: #{tpu_custom_call.1} parent=83 // pred_fallthru
          _
        %s613 = sand.u32 %s41, 1
        %s614 = scalar_lea.sflag [#allocation10], %s613
        %s615 = sand.u32 %s75, 1
        %s616 = smul.addr %s615, 32
        %s617 = scalar_lea.vmem [#allocation9], %s616
        // Predicated region
        $region89: #{tpu_custom_call.1} parent=83 // pred_check
          %p618 = pneg %p88
        $region90: #{tpu_custom_call.1} parent=83 // pred_check_branch
          %620 = sbr.rel (%p618) target = $region92
        $region91: #{tpu_custom_call.1} parent=83 // pred_region
          %621 = dma.done %s614, 512
        $region92: #{tpu_custom_call.1} parent=83 // pred_fallthru
          _
        %s622 = sand.u32 %s41, 1
        %s623 = scalar_lea.sflag [#allocation10], %s622
        %s624 = sand.u32 %s101, 1
        %s625 = smul.addr %s624, 32
        %s626 = scalar_lea.vmem [#allocation11], %s625
        // Predicated region
        $region93: #{tpu_custom_call.1} parent=83 // pred_check
          %p627 = pneg %p114
        $region94: #{tpu_custom_call.1} parent=83 // pred_check_branch
          %629 = sbr.rel (%p627) target = $region96
        $region95: #{tpu_custom_call.1} parent=83 // pred_region
          %630 = dma.done %s623, 512
        $region96: #{tpu_custom_call.1} parent=83 // pred_fallthru
          _
        %s631 = sand.u32 %s41, 1
        %s632 = scalar_lea.sflag [#allocation13], %s631
        %s633 = sand.u32 %s127, 1
        %s634 = smul.addr %s633, 32
        %s635 = scalar_lea.vmem [#allocation12], %s634
        // Predicated region
        $region97: #{tpu_custom_call.1} parent=83 // pred_check
          %p636 = pneg %p140
        $region98: #{tpu_custom_call.1} parent=83 // pred_check_branch
          %638 = sbr.rel (%p636) target = $region100
        $region99: #{tpu_custom_call.1} parent=83 // pred_region
          %639 = dma.done %s632, 512
        $region100: #{tpu_custom_call.1} parent=83 // pred_fallthru
          _
        // Predicated region
        $region101: #{tpu_custom_call.1} parent=83 // pred_check
          %p640 = pneg %p161
        $region102: #{tpu_custom_call.1} parent=83 // pred_check_branch
          %642 = sbr.rel (%p640) target = $region104
        $region103: #{tpu_custom_call.1} parent=83 // pred_region
          %643 = dma.done [#allocation13], 1024
        $region104: #{tpu_custom_call.1} parent=83 // pred_fallthru
          _
        // Predicated region
        $region105: #{tpu_custom_call.1} parent=83 // pred_check
          %p644 = pneg %p224
        $region106: #{tpu_custom_call.1} parent=83 // pred_check_branch
          %646 = sbr.rel (%p644) target = $region108
        $region107: #{tpu_custom_call.1} parent=83 // pred_region
          %647 = dma.done [#allocation16], 9216
        $region108: #{tpu_custom_call.1} parent=83 // pred_fallthru
          _
        // Predicated region
        $region109: #{tpu_custom_call.1} parent=83 // pred_check
          %p648 = pneg %p287
        $region110: #{tpu_custom_call.1} parent=83 // pred_check_branch
          %650 = sbr.rel (%p648) target = $region112
        $region111: #{tpu_custom_call.1} parent=83 // pred_region
          %651 = dma.done [#allocation16], 1024
        $region112: #{tpu_custom_call.1} parent=83 // pred_fallthru
          _
        // Predicated region
        $region113: #{tpu_custom_call.1} parent=83 // pred_check
          %p652 = pneg %p350
        $region114: #{tpu_custom_call.1} parent=83 // pred_check_branch
          %654 = sbr.rel (%p652) target = $region116
        $region115: #{tpu_custom_call.1} parent=83 // pred_region
          %655 = dma.done [#allocation19], 1024
        $region116: #{tpu_custom_call.1} parent=83 // pred_fallthru
          _
        %s656 = sand.u32 %s49, 1
        %s657 = scalar_lea.sflag [#allocation7], %s656
        %s658 = sand.u32 %s49, 1
        %s659 = smul.addr %s658, 32
        %s660 = scalar_lea.vmem [#allocation6], %s659
        %p661 = pneg %p62
        %p662 = pneg %p59
        %s663 = sand.u32 %s41, 1
        %s664 = scalar_lea.sflag [#allocation10], %s663
        %s665 = sand.u32 %s75, 1
        %s666 = smul.addr %s665, 32
        %s667 = scalar_lea.vmem [#allocation9], %s666
        %p668 = pneg %p88
        %p669 = pneg %p85
        %s670 = sand.u32 %s41, 1
        %s671 = scalar_lea.sflag [#allocation10], %s670
        %s672 = sand.u32 %s101, 1
        %s673 = smul.addr %s672, 32
        %s674 = scalar_lea.vmem [#allocation11], %s673
        %p675 = pneg %p114
        %p676 = pneg %p111
        %s677 = sand.u32 %s41, 1
        %s678 = scalar_lea.sflag [#allocation13], %s677
        %s679 = sand.u32 %s127, 1
        %s680 = smul.addr %s679, 32
        %s681 = scalar_lea.vmem [#allocation12], %s680
        %p682 = pneg %p140
        %p683 = pneg %p137
        %p684 = pneg %p161
        %p685 = pneg %p158
        %p686 = pneg %p182
        %p687 = pneg %p179
        %p688 = pneg %p203
        %p689 = pneg %p200
        %p690 = pneg %p224
        %p691 = pneg %p221
        %p692 = pneg %p245
        %p693 = pneg %p242
        %p694 = pneg %p266
        %p695 = pneg %p263
        %p696 = pneg %p287
        %p697 = pneg %p284
        %p698 = pneg %p308
        %p699 = pneg %p305
        %p700 = pneg %p329
        %p701 = pneg %p326
        %p702 = pneg %p350
        %p703 = pneg %p347
        %p704 = pneg %p371
        %p705 = pneg %p368
        %p706 = pneg %p392
        %p707 = pneg %p389
        %p708 = pneg %p418
        %p709 = pneg %p415
        %s710 = sand.u32 %s405, 1
        %s711 = scalar_lea.sflag [#allocation8], %s710
        %s712 = sand.u32 %s405, 1
        %s713 = smul.addr %s712, 64
        %s714 = scalar_lea.vmem [#allocation20], %s713
        %716 = vst [vmem:[#allocation2] sm:$0xff] 0.0
        %717 = vst [vmem:[#allocation2 + $0x8] sm:$0x1] 0.0
        %718 = vst [vmem:[#allocation2 + $0x10] sm:$0xff] 0.0
        %719 = vst [vmem:[#allocation2 + $0x18] sm:$0x1] 0.0
        %720 = vst [vmem:[#allocation2 + $0x20] sm:$0xff] 0.0
        %721 = vst [vmem:[#allocation2 + $0x28] sm:$0x1] 0.0
        %722 = vst [vmem:[#allocation2 + $0x30] sm:$0xff] 0.0
        %723 = vst [vmem:[#allocation2 + $0x38] sm:$0x1] 0.0
        %724 = vst [vmem:[#allocation2 + $0x40] sm:$0xff] 0.0
        %725 = vst [vmem:[#allocation2 + $0x48] sm:$0x1] 0.0
        %726 = vst [vmem:[#allocation2 + $0x50] sm:$0xff] 0.0
        %727 = vst [vmem:[#allocation2 + $0x58] sm:$0x1] 0.0
        %728 = vst [vmem:[#allocation2 + $0x60] sm:$0xff] 0.0
        %729 = vst [vmem:[#allocation2 + $0x68] sm:$0x1] 0.0
        %730 = vst [vmem:[#allocation2 + $0x70] sm:$0xff] 0.0
        %731 = vst [vmem:[#allocation2 + $0x78] sm:$0x1] 0.0
        %732 = vst [vmem:[#allocation2 + $0x80] sm:$0xff] 0.0
        %733 = vst [vmem:[#allocation2 + $0x88] sm:$0x1] 0.0
        %734 = vst [vmem:[#allocation3] sm:$0xff] 0.0
        %735 = vst [vmem:[#allocation3 + $0x8] sm:$0x1] 0.0
        %736 = vst [vmem:[#allocation3 + $0x10] sm:$0xff] 0.0
        %737 = vst [vmem:[#allocation3 + $0x18] sm:$0x1] 0.0
        %738 = vst [vmem:[#allocation3 + $0x20] sm:$0xff] 0.0
        %739 = vst [vmem:[#allocation3 + $0x28] sm:$0x1] 0.0
        %740 = vst [vmem:[#allocation3 + $0x30] sm:$0xff] 0.0
        %741 = vst [vmem:[#allocation3 + $0x38] sm:$0x1] 0.0
        %742 = vst [vmem:[#allocation3 + $0x40] sm:$0xff] 0.0
        %743 = vst [vmem:[#allocation3 + $0x48] sm:$0x1] 0.0
        %744 = vst [vmem:[#allocation3 + $0x50] sm:$0xff] 0.0
        %745 = vst [vmem:[#allocation3 + $0x58] sm:$0x1] 0.0
        %746 = vst [vmem:[#allocation3 + $0x60] sm:$0xff] 0.0
        %747 = vst [vmem:[#allocation3 + $0x68] sm:$0x1] 0.0
        %748 = vst [vmem:[#allocation3 + $0x70] sm:$0xff] 0.0
        %749 = vst [vmem:[#allocation3 + $0x78] sm:$0x1] 0.0
        %750 = vst [vmem:[#allocation3 + $0x80] sm:$0xff] 0.0
        %751 = vst [vmem:[#allocation3 + $0x88] sm:$0x1] 0.0
        %752 = vst [vmem:[#allocation4] sm:$0xff] 0.0
        %753 = vst [vmem:[#allocation4 + $0x8] sm:$0x1] 0.0
        %754 = vst [vmem:[#allocation4 + $0x10] sm:$0xff] 0.0
        %755 = vst [vmem:[#allocation4 + $0x18] sm:$0x1] 0.0
        %756 = vst [vmem:[#allocation4 + $0x20] sm:$0xff] 0.0
        %757 = vst [vmem:[#allocation4 + $0x28] sm:$0x1] 0.0
        %758 = vst [vmem:[#allocation4 + $0x30] sm:$0xff] 0.0
        %759 = vst [vmem:[#allocation4 + $0x38] sm:$0x1] 0.0
        %760 = vst [vmem:[#allocation4 + $0x40] sm:$0xff] 0.0
        %761 = vst [vmem:[#allocation4 + $0x48] sm:$0x1] 0.0
        %762 = vst [vmem:[#allocation4 + $0x50] sm:$0xff] 0.0
        %763 = vst [vmem:[#allocation4 + $0x58] sm:$0x1] 0.0
        %764 = vst [vmem:[#allocation4 + $0x60] sm:$0xff] 0.0
        %765 = vst [vmem:[#allocation4 + $0x68] sm:$0x1] 0.0
        %766 = vst [vmem:[#allocation4 + $0x70] sm:$0xff] 0.0
        %767 = vst [vmem:[#allocation4 + $0x78] sm:$0x1] 0.0
        %768 = vst [vmem:[#allocation4 + $0x80] sm:$0xff] 0.0
        %769 = vst [vmem:[#allocation4 + $0x88] sm:$0x1] 0.0
        %770 = vst [vmem:[#allocation5] sm:$0xff] 0.0
        %771 = vst [vmem:[#allocation5 + $0x8] sm:$0x1] 0.0
        %772 = vst [vmem:[#allocation5 + $0x10] sm:$0xff] 0.0
        %773 = vst [vmem:[#allocation5 + $0x18] sm:$0x1] 0.0
        %774 = vst [vmem:[#allocation5 + $0x20] sm:$0xff] 0.0
        %775 = vst [vmem:[#allocation5 + $0x28] sm:$0x1] 0.0
        %776 = vst [vmem:[#allocation5 + $0x30] sm:$0xff] 0.0
        %777 = vst [vmem:[#allocation5 + $0x38] sm:$0x1] 0.0
        %778 = vst [vmem:[#allocation5 + $0x40] sm:$0xff] 0.0
        %779 = vst [vmem:[#allocation5 + $0x48] sm:$0x1] 0.0
        %780 = vst [vmem:[#allocation5 + $0x50] sm:$0xff] 0.0
        %781 = vst [vmem:[#allocation5 + $0x58] sm:$0x1] 0.0
        %782 = vst [vmem:[#allocation5 + $0x60] sm:$0xff] 0.0
        %783 = vst [vmem:[#allocation5 + $0x68] sm:$0x1] 0.0
        %784 = vst [vmem:[#allocation5 + $0x70] sm:$0xff] 0.0
        %785 = vst [vmem:[#allocation5 + $0x78] sm:$0x1] 0.0
        %786 = vst [vmem:[#allocation5 + $0x80] sm:$0xff] 0.0
        %787 = vst [vmem:[#allocation5 + $0x88] sm:$0x1] 0.0
        %v788 = vld [vmem:[%s608] sm:$0xf]
        %v789 = vld [vmem:[%s608 + $0x4] sm:$0xf]
        %v790 = vld [vmem:[%s608 + $0x8] sm:$0xf]
        %v791 = vld [vmem:[%s608 + $0xc] sm:$0xf]
        %v792 = vld [vmem:[%s608 + $0x10] sm:$0xf]
        %v793 = vld [vmem:[%s608 + $0x14] sm:$0xf]
        %v794 = vld [vmem:[%s608 + $0x18] sm:$0xf]
        %v795 = vld [vmem:[%s608 + $0x1c] sm:$0xf]
        %v796 = vld [vmem:[#allocation14] sm:$0xf]
        %v797 = vld [vmem:[#allocation14 + $0x4] sm:$0xf]
        %v798 = vld [vmem:[#allocation14 + $0x8] sm:$0xf]
        %v799 = vld [vmem:[#allocation14 + $0xc] sm:$0xf]
        %v800 = vld [vmem:[#allocation14 + $0x10] sm:$0xf]
        %v801 = vld [vmem:[#allocation14 + $0x14] sm:$0xf]
        %v802 = vld [vmem:[#allocation14 + $0x18] sm:$0xf]
        %v803 = vld [vmem:[#allocation14 + $0x1c] sm:$0xf]
        %v804 = vld [vmem:[#allocation14 + $0x20] sm:$0xf]
        %v805 = vld [vmem:[#allocation14 + $0x24] sm:$0xf]
        %v806 = vld [vmem:[#allocation14 + $0x28] sm:$0xf]
        %v807 = vld [vmem:[#allocation14 + $0x2c] sm:$0xf]
        %v808 = vld [vmem:[#allocation14 + $0x30] sm:$0xf]
        %v809 = vld [vmem:[#allocation14 + $0x34] sm:$0xf]
        %v810 = vld [vmem:[#allocation14 + $0x38] sm:$0xf]
        %v811 = vld [vmem:[#allocation14 + $0x3c] sm:$0xf]
        %v820 = vunpack.c.l.b16 %v788
        %v821 = vunpack.c.l.b16 %v789
        %v822 = vunpack.c.l.b16 %v790
        %v823 = vunpack.c.l.b16 %v791
        %v824 = vunpack.c.l.b16 %v792
        %v825 = vunpack.c.l.b16 %v793
        %v826 = vunpack.c.l.b16 %v794
        %v827 = vunpack.c.l.b16 %v795
        %v828 = vpack.c.b16 %v821, %v820
        %v829 = vpack.c.b16 %v823, %v822
        %v830 = vpack.c.b16 %v825, %v824
        %v831 = vpack.c.b16 %v827, %v826
        %v852 = vunpack.c.l.b16 %v796
        %v853 = vunpack.c.l.b16 %v797
        %v854 = vunpack.c.l.b16 %v798
        %v855 = vunpack.c.l.b16 %v799
        %v856 = vunpack.c.l.b16 %v800
        %v857 = vunpack.c.l.b16 %v801
        %v858 = vunpack.c.l.b16 %v802
        %v859 = vunpack.c.l.b16 %v803
        %v860 = vunpack.c.l.b16 %v804
        %v861 = vunpack.c.l.b16 %v805
        %v862 = vunpack.c.l.b16 %v806
        %v863 = vunpack.c.l.b16 %v807
        %v864 = vunpack.c.l.b16 %v808
        %v865 = vunpack.c.l.b16 %v809
        %v866 = vunpack.c.l.b16 %v810
        %v867 = vunpack.c.l.b16 %v811
        %v868 = vpack.c.b16 %v853, %v852
        %v869 = vpack.c.b16 %v855, %v854
        %v870 = vpack.c.b16 %v857, %v856
        %v871 = vpack.c.b16 %v859, %v858
        %v872 = vpack.c.b16 %v861, %v860
        %v873 = vpack.c.b16 %v863, %v862
        %v874 = vpack.c.b16 %v865, %v864
        %v875 = vpack.c.b16 %v867, %v866
        %884 = vmatprep.subr.bf16.mxu0 0
        %885 = vmatpush1.bf16.msra.mxu0 %v875
        %886 = vmatprep.subr.bf16.mxu0 0
        %887 = vmatpush1.bf16.msra.mxu0 %v874
        %888 = vmatprep.subr.bf16.mxu0 0
        %889 = vmatpush1.bf16.msra.mxu0 %v873
        %890 = vmatprep.subr.bf16.mxu0 0
        %891 = vmatpush1.bf16.msra.mxu0 %v872
        %892 = vmatprep.subr.bf16.mxu0 0
        %893 = vmatpush1.bf16.msra.mxu0 %v871
        %894 = vmatprep.subr.bf16.mxu0 0
        %895 = vmatpush1.bf16.msra.mxu0 %v870
        %896 = vmatprep.subr.bf16.mxu0 0
        %897 = vmatpush1.bf16.msra.mxu0 %v869
        %898 = vmatprep.subr.bf16.mxu0 0
        %899 = vmatpush1.bf16.msra.mxu0 %v868
        %900 = vmatprep.subr.bf16.mxu0 0
        %901 = vmatpush2.bf16.msra.mxu0 0
        %902 = vmatprep.subr.bf16.mxu0 0
        %903 = vmatpush2.bf16.msra.mxu0 0
        %904 = vmatprep.subr.bf16.mxu0 0
        %905 = vmatpush2.bf16.msra.mxu0 0
        %906 = vmatprep.subr.bf16.mxu0 0
        %907 = vmatpush2.bf16.msra.mxu0 0
        %908 = vmatprep.subr.bf16.mxu0 0
        %909 = vmatpush2.bf16.msra.mxu0 0
        %910 = vmatprep.subr.bf16.mxu0 0
        %911 = vmatpush2.bf16.msra.mxu0 0
        %912 = vmatprep.subr.bf16.mxu0 0
        %913 = vmatpush2.bf16.msra.mxu0 0
        %914 = vmatprep.subr.bf16.mxu0 0
        %915 = vmatpush2.bf16.msra.mxu0 0
        %916 = vmatprep.mubr.bf16.mxu0 0
        %917 = vmatmul.mubr.bf16.gmra.mxu0 %v828
        %v918 = vpop.f32.mrf.mxu0
        %v919 = vadd.f32 0.0, %v918
        %v920 = vpop.f32.mrf.mxu0
        %v921 = vpop.f32.mrf.mxu0
        %v922 = vadd.f32 0.0, %v921
        %v923 = vpop.f32.mrf.mxu0
        %924 = vmatprep.mubr.bf16.mxu0 0
        %925 = vmatmul.mubr.bf16.gmra.mxu0 %v829
        %v926 = vpop.f32.mrf.mxu0
        %v927 = vadd.f32 0.0, %v926
        %v928 = vpop.f32.mrf.mxu0
        %v929 = vpop.f32.mrf.mxu0
        %v930 = vadd.f32 0.0, %v929
        %v931 = vpop.f32.mrf.mxu0
        %932 = vmatprep.mubr.bf16.mxu0 0
        %933 = vmatmul.mubr.bf16.gmra.mxu0 %v830
        %v934 = vpop.f32.mrf.mxu0
        %v935 = vadd.f32 0.0, %v934
        %v936 = vpop.f32.mrf.mxu0
        %v937 = vpop.f32.mrf.mxu0
        %v938 = vadd.f32 0.0, %v937
        %v939 = vpop.f32.mrf.mxu0
        %940 = vmatprep.mubr.bf16.mxu0 0
        %941 = vmatmul.mubr.bf16.gmra.mxu0 %v831
        %v942 = vpop.f32.mrf.mxu0
        %v943 = vadd.f32 0.0, %v942
        %v944 = vpop.f32.mrf.mxu0
        %v945 = vpop.f32.mrf.mxu0
        %v946 = vadd.f32 0.0, %v945
        %v947 = vpop.f32.mrf.mxu0
        %948 = vdwg.mxu0
        %v949 = vld [vmem:[%s5] sm:$0x1]
        %v951 = vlaneseq
        %v952 = vshrl.u32 %v951, 7
        %v953 = vsub.s32 0, %v952
        %v954 = vrot.slane %v949, %v953
        %v956 = vmul.f32 %v919, %v954
        %v957 = vmul.f32 %v922, %v954
        %v958 = vmul.f32 %v927, %v954
        %v959 = vmul.f32 %v930, %v954
        %v960 = vmul.f32 %v935, %v954
        %v961 = vmul.f32 %v938, %v954
        %v962 = vmul.f32 %v943, %v954
        %v963 = vmul.f32 %v946, %v954
        %v964 = vld [vmem:[%s6] sm:$0x1]
        %v966 = vlaneseq
        %v967 = vshrl.u32 %v966, 7
        %v968 = vsub.s32 0, %v967
        %v969 = vrot.slane %v964, %v968
        %v971 = vadd.f32 %v956, %v969
        %v972 = vadd.f32 %v957, %v969
        %v973 = vadd.f32 %v958, %v969
        %v974 = vadd.f32 %v959, %v969
        %v975 = vadd.f32 %v960, %v969
        %v976 = vadd.f32 %v961, %v969
        %v977 = vadd.f32 %v962, %v969
        %v978 = vadd.f32 %v963, %v969
        %v979 = vmax.f32 %v971, 0.0
        %v980 = vmax.f32 %v972, 0.0
        %v981 = vmax.f32 %v973, 0.0
        %v982 = vmax.f32 %v974, 0.0
        %v983 = vmax.f32 %v975, 0.0
        %v984 = vmax.f32 %v976, 0.0
        %v985 = vmax.f32 %v977, 0.0
        %v986 = vmax.f32 %v978, 0.0
        %s987 = scalar_lea.vmem [#allocation2], 16
        %988 = vst [vmem:[%s987 + $0x1] sm:$0xff] %v979
        %989 = vst [vmem:[%s987 + $0x11] sm:$0xff] %v980
        %990 = vst [vmem:[%s987 + $0x21] sm:$0xff] %v981
        %991 = vst [vmem:[%s987 + $0x31] sm:$0xff] %v982
        %992 = vst [vmem:[%s987 + $0x41] sm:$0xff] %v983
        %993 = vst [vmem:[%s987 + $0x51] sm:$0xff] %v984
        %994 = vst [vmem:[%s987 + $0x61] sm:$0xff] %v985
        %995 = vst [vmem:[%s987 + $0x71] sm:$0xff] %v986
        %v996 = vld [vmem:[%s617] sm:$0xf]
        %v997 = vld [vmem:[%s617 + $0x4] sm:$0xf]
        %v998 = vld [vmem:[%s617 + $0x8] sm:$0xf]
        %v999 = vld [vmem:[%s617 + $0xc] sm:$0xf]
        %v1000 = vld [vmem:[%s617 + $0x10] sm:$0xf]
        %v1001 = vld [vmem:[%s617 + $0x14] sm:$0xf]
        %v1002 = vld [vmem:[%s617 + $0x18] sm:$0xf]
        %v1003 = vld [vmem:[%s617 + $0x1c] sm:$0xf]
        %v1004 = vld [vmem:[#allocation14] sm:$0xf]
        %v1005 = vld [vmem:[#allocation14 + $0x4] sm:$0xf]
        %v1006 = vld [vmem:[#allocation14 + $0x8] sm:$0xf]
        %v1007 = vld [vmem:[#allocation14 + $0xc] sm:$0xf]
        %v1008 = vld [vmem:[#allocation14 + $0x10] sm:$0xf]
        %v1009 = vld [vmem:[#allocation14 + $0x14] sm:$0xf]
        %v1010 = vld [vmem:[#allocation14 + $0x18] sm:$0xf]
        %v1011 = vld [vmem:[#allocation14 + $0x1c] sm:$0xf]
        %v1012 = vld [vmem:[#allocation14 + $0x20] sm:$0xf]
        %v1013 = vld [vmem:[#allocation14 + $0x24] sm:$0xf]
        %v1014 = vld [vmem:[#allocation14 + $0x28] sm:$0xf]
        %v1015 = vld [vmem:[#allocation14 + $0x2c] sm:$0xf]
        %v1016 = vld [vmem:[#allocation14 + $0x30] sm:$0xf]
        %v1017 = vld [vmem:[#allocation14 + $0x34] sm:$0xf]
        %v1018 = vld [vmem:[#allocation14 + $0x38] sm:$0xf]
        %v1019 = vld [vmem:[#allocation14 + $0x3c] sm:$0xf]
        %v1028 = vunpack.c.l.b16 %v996
        %v1029 = vunpack.c.l.b16 %v997
        %v1030 = vunpack.c.l.b16 %v998
        %v1031 = vunpack.c.l.b16 %v999
        %v1032 = vunpack.c.l.b16 %v1000
        %v1033 = vunpack.c.l.b16 %v1001
        %v1034 = vunpack.c.l.b16 %v1002
        %v1035 = vunpack.c.l.b16 %v1003
        %v1036 = vpack.c.b16 %v1029, %v1028
        %v1037 = vpack.c.b16 %v1031, %v1030
        %v1038 = vpack.c.b16 %v1033, %v1032
        %v1039 = vpack.c.b16 %v1035, %v1034
        %v1060 = vunpack.c.l.b16 %v1004
        %v1061 = vunpack.c.l.b16 %v1005
        %v1062 = vunpack.c.l.b16 %v1006
        %v1063 = vunpack.c.l.b16 %v1007
        %v1064 = vunpack.c.l.b16 %v1008
        %v1065 = vunpack.c.l.b16 %v1009
        %v1066 = vunpack.c.l.b16 %v1010
        %v1067 = vunpack.c.l.b16 %v1011
        %v1068 = vunpack.c.l.b16 %v1012
        %v1069 = vunpack.c.l.b16 %v1013
        %v1070 = vunpack.c.l.b16 %v1014
        %v1071 = vunpack.c.l.b16 %v1015
        %v1072 = vunpack.c.l.b16 %v1016
        %v1073 = vunpack.c.l.b16 %v1017
        %v1074 = vunpack.c.l.b16 %v1018
        %v1075 = vunpack.c.l.b16 %v1019
        %v1076 = vpack.c.b16 %v1061, %v1060
        %v1077 = vpack.c.b16 %v1063, %v1062
        %v1078 = vpack.c.b16 %v1065, %v1064
        %v1079 = vpack.c.b16 %v1067, %v1066
        %v1080 = vpack.c.b16 %v1069, %v1068
        %v1081 = vpack.c.b16 %v1071, %v1070
        %v1082 = vpack.c.b16 %v1073, %v1072
        %v1083 = vpack.c.b16 %v1075, %v1074
        %1092 = vmatprep.subr.bf16.mxu0 0
        %1093 = vmatpush1.bf16.msra.mxu0 %v1083
        %1094 = vmatprep.subr.bf16.mxu0 0
        %1095 = vmatpush1.bf16.msra.mxu0 %v1082
        %1096 = vmatprep.subr.bf16.mxu0 0
        %1097 = vmatpush1.bf16.msra.mxu0 %v1081
        %1098 = vmatprep.subr.bf16.mxu0 0
        %1099 = vmatpush1.bf16.msra.mxu0 %v1080
        %1100 = vmatprep.subr.bf16.mxu0 0
        %1101 = vmatpush1.bf16.msra.mxu0 %v1079
        %1102 = vmatprep.subr.bf16.mxu0 0
        %1103 = vmatpush1.bf16.msra.mxu0 %v1078
        %1104 = vmatprep.subr.bf16.mxu0 0
        %1105 = vmatpush1.bf16.msra.mxu0 %v1077
        %1106 = vmatprep.subr.bf16.mxu0 0
        %1107 = vmatpush1.bf16.msra.mxu0 %v1076
        %1108 = vmatprep.subr.bf16.mxu0 0
        %1109 = vmatpush2.bf16.msra.mxu0 0
        %1110 = vmatprep.subr.bf16.mxu0 0
        %1111 = vmatpush2.bf16.msra.mxu0 0
        %1112 = vmatprep.subr.bf16.mxu0 0
        %1113 = vmatpush2.bf16.msra.mxu0 0
        %1114 = vmatprep.subr.bf16.mxu0 0
        %1115 = vmatpush2.bf16.msra.mxu0 0
        %1116 = vmatprep.subr.bf16.mxu0 0
        %1117 = vmatpush2.bf16.msra.mxu0 0
        %1118 = vmatprep.subr.bf16.mxu0 0
        %1119 = vmatpush2.bf16.msra.mxu0 0
        %1120 = vmatprep.subr.bf16.mxu0 0
        %1121 = vmatpush2.bf16.msra.mxu0 0
        %1122 = vmatprep.subr.bf16.mxu0 0
        %1123 = vmatpush2.bf16.msra.mxu0 0
        %1124 = vmatprep.mubr.bf16.mxu0 0
        %1125 = vmatmul.mubr.bf16.gmra.mxu0 %v1036
        %v1126 = vpop.f32.mrf.mxu0
        %v1127 = vadd.f32 0.0, %v1126
        %v1128 = vpop.f32.mrf.mxu0
        %v1129 = vpop.f32.mrf.mxu0
        %v1130 = vadd.f32 0.0, %v1129
        %v1131 = vpop.f32.mrf.mxu0
        %1132 = vmatprep.mubr.bf16.mxu0 0
        %1133 = vmatmul.mubr.bf16.gmra.mxu0 %v1037
        %v1134 = vpop.f32.mrf.mxu0
        %v1135 = vadd.f32 0.0, %v1134
        %v1136 = vpop.f32.mrf.mxu0
        %v1137 = vpop.f32.mrf.mxu0
        %v1138 = vadd.f32 0.0, %v1137
        %v1139 = vpop.f32.mrf.mxu0
        %1140 = vmatprep.mubr.bf16.mxu0 0
        %1141 = vmatmul.mubr.bf16.gmra.mxu0 %v1038
        %v1142 = vpop.f32.mrf.mxu0
        %v1143 = vadd.f32 0.0, %v1142
        %v1144 = vpop.f32.mrf.mxu0
        %v1145 = vpop.f32.mrf.mxu0
        %v1146 = vadd.f32 0.0, %v1145
        %v1147 = vpop.f32.mrf.mxu0
        %1148 = vmatprep.mubr.bf16.mxu0 0
        %1149 = vmatmul.mubr.bf16.gmra.mxu0 %v1039
        %v1150 = vpop.f32.mrf.mxu0
        %v1151 = vadd.f32 0.0, %v1150
        %v1152 = vpop.f32.mrf.mxu0
        %v1153 = vpop.f32.mrf.mxu0
        %v1154 = vadd.f32 0.0, %v1153
        %v1155 = vpop.f32.mrf.mxu0
        %1156 = vdwg.mxu0
        %v1157 = vld [vmem:[%s5] sm:$0x1]
        %v1159 = vlaneseq
        %v1160 = vshrl.u32 %v1159, 7
        %v1161 = vsub.s32 0, %v1160
        %v1162 = vrot.slane %v1157, %v1161
        %v1164 = vmul.f32 %v1127, %v1162
        %v1165 = vmul.f32 %v1130, %v1162
        %v1166 = vmul.f32 %v1135, %v1162
        %v1167 = vmul.f32 %v1138, %v1162
        %v1168 = vmul.f32 %v1143, %v1162
        %v1169 = vmul.f32 %v1146, %v1162
        %v1170 = vmul.f32 %v1151, %v1162
        %v1171 = vmul.f32 %v1154, %v1162
        %v1172 = vld [vmem:[%s6] sm:$0x1]
        %v1174 = vlaneseq
        %v1175 = vshrl.u32 %v1174, 7
        %v1176 = vsub.s32 0, %v1175
        %v1177 = vrot.slane %v1172, %v1176
        %v1179 = vadd.f32 %v1164, %v1177
        %v1180 = vadd.f32 %v1165, %v1177
        %v1181 = vadd.f32 %v1166, %v1177
        %v1182 = vadd.f32 %v1167, %v1177
        %v1183 = vadd.f32 %v1168, %v1177
        %v1184 = vadd.f32 %v1169, %v1177
        %v1185 = vadd.f32 %v1170, %v1177
        %v1186 = vadd.f32 %v1171, %v1177
        %v1187 = vmax.f32 %v1179, 0.0
        %v1188 = vmax.f32 %v1180, 0.0
        %v1189 = vmax.f32 %v1181, 0.0
        %v1190 = vmax.f32 %v1182, 0.0
        %v1191 = vmax.f32 %v1183, 0.0
        %v1192 = vmax.f32 %v1184, 0.0
        %v1193 = vmax.f32 %v1185, 0.0
        %v1194 = vmax.f32 %v1186, 0.0
        %s1195 = scalar_lea.vmem [#allocation3], 16
        %1196 = vst [vmem:[%s1195] sm:$0xff] %v1187
        %1197 = vst [vmem:[%s1195 + $0x10] sm:$0xff] %v1188
        %1198 = vst [vmem:[%s1195 + $0x20] sm:$0xff] %v1189
        %1199 = vst [vmem:[%s1195 + $0x30] sm:$0xff] %v1190
        %1200 = vst [vmem:[%s1195 + $0x40] sm:$0xff] %v1191
        %1201 = vst [vmem:[%s1195 + $0x50] sm:$0xff] %v1192
        %1202 = vst [vmem:[%s1195 + $0x60] sm:$0xff] %v1193
        %1203 = vst [vmem:[%s1195 + $0x70] sm:$0xff] %v1194
        %v1204 = vld [vmem:[%s626] sm:$0xf]
        %v1205 = vld [vmem:[%s626 + $0x4] sm:$0xf]
        %v1206 = vld [vmem:[%s626 + $0x8] sm:$0xf]
        %v1207 = vld [vmem:[%s626 + $0xc] sm:$0xf]
        %v1208 = vld [vmem:[%s626 + $0x10] sm:$0xf]
        %v1209 = vld [vmem:[%s626 + $0x14] sm:$0xf]
        %v1210 = vld [vmem:[%s626 + $0x18] sm:$0xf]
        %v1211 = vld [vmem:[%s626 + $0x1c] sm:$0xf]
        %v1212 = vld [vmem:[#allocation14] sm:$0xf]
        %v1213 = vld [vmem:[#allocation14 + $0x4] sm:$0xf]
        %v1214 = vld [vmem:[#allocation14 + $0x8] sm:$0xf]
        %v1215 = vld [vmem:[#allocation14 + $0xc] sm:$0xf]
        %v1216 = vld [vmem:[#allocation14 + $0x10] sm:$0xf]
        %v1217 = vld [vmem:[#allocation14 + $0x14] sm:$0xf]
        %v1218 = vld [vmem:[#allocation14 + $0x18] sm:$0xf]
        %v1219 = vld [vmem:[#allocation14 + $0x1c] sm:$0xf]
        %v1220 = vld [vmem:[#allocation14 + $0x20] sm:$0xf]
        %v1221 = vld [vmem:[#allocation14 + $0x24] sm:$0xf]
        %v1222 = vld [vmem:[#allocation14 + $0x28] sm:$0xf]
        %v1223 = vld [vmem:[#allocation14 + $0x2c] sm:$0xf]
        %v1224 = vld [vmem:[#allocation14 + $0x30] sm:$0xf]
        %v1225 = vld [vmem:[#allocation14 + $0x34] sm:$0xf]
        %v1226 = vld [vmem:[#allocation14 + $0x38] sm:$0xf]
        %v1227 = vld [vmem:[#allocation14 + $0x3c] sm:$0xf]
        %v1236 = vunpack.c.l.b16 %v1204
        %v1237 = vunpack.c.l.b16 %v1205
        %v1238 = vunpack.c.l.b16 %v1206
        %v1239 = vunpack.c.l.b16 %v1207
        %v1240 = vunpack.c.l.b16 %v1208
        %v1241 = vunpack.c.l.b16 %v1209
        %v1242 = vunpack.c.l.b16 %v1210
        %v1243 = vunpack.c.l.b16 %v1211
        %v1244 = vpack.c.b16 %v1237, %v1236
        %v1245 = vpack.c.b16 %v1239, %v1238
        %v1246 = vpack.c.b16 %v1241, %v1240
        %v1247 = vpack.c.b16 %v1243, %v1242
        %v1268 = vunpack.c.l.b16 %v1212
        %v1269 = vunpack.c.l.b16 %v1213
        %v1270 = vunpack.c.l.b16 %v1214
        %v1271 = vunpack.c.l.b16 %v1215
        %v1272 = vunpack.c.l.b16 %v1216
        %v1273 = vunpack.c.l.b16 %v1217
        %v1274 = vunpack.c.l.b16 %v1218
        %v1275 = vunpack.c.l.b16 %v1219
        %v1276 = vunpack.c.l.b16 %v1220
        %v1277 = vunpack.c.l.b16 %v1221
        %v1278 = vunpack.c.l.b16 %v1222
        %v1279 = vunpack.c.l.b16 %v1223
        %v1280 = vunpack.c.l.b16 %v1224
        %v1281 = vunpack.c.l.b16 %v1225
        %v1282 = vunpack.c.l.b16 %v1226
        %v1283 = vunpack.c.l.b16 %v1227
        %v1284 = vpack.c.b16 %v1269, %v1268
        %v1285 = vpack.c.b16 %v1271, %v1270
        %v1286 = vpack.c.b16 %v1273, %v1272
        %v1287 = vpack.c.b16 %v1275, %v1274
        %v1288 = vpack.c.b16 %v1277, %v1276
        %v1289 = vpack.c.b16 %v1279, %v1278
        %v1290 = vpack.c.b16 %v1281, %v1280
        %v1291 = vpack.c.b16 %v1283, %v1282
        %1300 = vmatprep.subr.bf16.mxu0 0
        %1301 = vmatpush1.bf16.msra.mxu0 %v1291
        %1302 = vmatprep.subr.bf16.mxu0 0
        %1303 = vmatpush1.bf16.msra.mxu0 %v1290
        %1304 = vmatprep.subr.bf16.mxu0 0
        %1305 = vmatpush1.bf16.msra.mxu0 %v1289
        %1306 = vmatprep.subr.bf16.mxu0 0
        %1307 = vmatpush1.bf16.msra.mxu0 %v1288
        %1308 = vmatprep.subr.bf16.mxu0 0
        %1309 = vmatpush1.bf16.msra.mxu0 %v1287
        %1310 = vmatprep.subr.bf16.mxu0 0
        %1311 = vmatpush1.bf16.msra.mxu0 %v1286
        %1312 = vmatprep.subr.bf16.mxu0 0
        %1313 = vmatpush1.bf16.msra.mxu0 %v1285
        %1314 = vmatprep.subr.bf16.mxu0 0
        %1315 = vmatpush1.bf16.msra.mxu0 %v1284
        %1316 = vmatprep.subr.bf16.mxu0 0
        %1317 = vmatpush2.bf16.msra.mxu0 0
        %1318 = vmatprep.subr.bf16.mxu0 0
        %1319 = vmatpush2.bf16.msra.mxu0 0
        %1320 = vmatprep.subr.bf16.mxu0 0
        %1321 = vmatpush2.bf16.msra.mxu0 0
        %1322 = vmatprep.subr.bf16.mxu0 0
        %1323 = vmatpush2.bf16.msra.mxu0 0
        %1324 = vmatprep.subr.bf16.mxu0 0
        %1325 = vmatpush2.bf16.msra.mxu0 0
        %1326 = vmatprep.subr.bf16.mxu0 0
        %1327 = vmatpush2.bf16.msra.mxu0 0
        %1328 = vmatprep.subr.bf16.mxu0 0
        %1329 = vmatpush2.bf16.msra.mxu0 0
        %1330 = vmatprep.subr.bf16.mxu0 0
        %1331 = vmatpush2.bf16.msra.mxu0 0
        %1332 = vmatprep.mubr.bf16.mxu0 0
        %1333 = vmatmul.mubr.bf16.gmra.mxu0 %v1244
        %v1334 = vpop.f32.mrf.mxu0
        %v1335 = vadd.f32 0.0, %v1334
        %v1336 = vpop.f32.mrf.mxu0
        %v1337 = vpop.f32.mrf.mxu0
        %v1338 = vadd.f32 0.0, %v1337
        %v1339 = vpop.f32.mrf.mxu0
        %1340 = vmatprep.mubr.bf16.mxu0 0
        %1341 = vmatmul.mubr.bf16.gmra.mxu0 %v1245
        %v1342 = vpop.f32.mrf.mxu0
        %v1343 = vadd.f32 0.0, %v1342
        %v1344 = vpop.f32.mrf.mxu0
        %v1345 = vpop.f32.mrf.mxu0
        %v1346 = vadd.f32 0.0, %v1345
        %v1347 = vpop.f32.mrf.mxu0
        %1348 = vmatprep.mubr.bf16.mxu0 0
        %1349 = vmatmul.mubr.bf16.gmra.mxu0 %v1246
        %v1350 = vpop.f32.mrf.mxu0
        %v1351 = vadd.f32 0.0, %v1350
        %v1352 = vpop.f32.mrf.mxu0
        %v1353 = vpop.f32.mrf.mxu0
        %v1354 = vadd.f32 0.0, %v1353
        %v1355 = vpop.f32.mrf.mxu0
        %1356 = vmatprep.mubr.bf16.mxu0 0
        %1357 = vmatmul.mubr.bf16.gmra.mxu0 %v1247
        %v1358 = vpop.f32.mrf.mxu0
        %v1359 = vadd.f32 0.0, %v1358
        %v1360 = vpop.f32.mrf.mxu0
        %v1361 = vpop.f32.mrf.mxu0
        %v1362 = vadd.f32 0.0, %v1361
        %v1363 = vpop.f32.mrf.mxu0
        %1364 = vdwg.mxu0
        %v1365 = vld [vmem:[%s5] sm:$0x1]
        %v1367 = vlaneseq
        %v1368 = vshrl.u32 %v1367, 7
        %v1369 = vsub.s32 0, %v1368
        %v1370 = vrot.slane %v1365, %v1369
        %v1372 = vmul.f32 %v1335, %v1370
        %v1373 = vmul.f32 %v1338, %v1370
        %v1374 = vmul.f32 %v1343, %v1370
        %v1375 = vmul.f32 %v1346, %v1370
        %v1376 = vmul.f32 %v1351, %v1370
        %v1377 = vmul.f32 %v1354, %v1370
        %v1378 = vmul.f32 %v1359, %v1370
        %v1379 = vmul.f32 %v1362, %v1370
        %v1380 = vld [vmem:[%s6] sm:$0x1]
        %v1382 = vlaneseq
        %v1383 = vshrl.u32 %v1382, 7
        %v1384 = vsub.s32 0, %v1383
        %v1385 = vrot.slane %v1380, %v1384
        %v1387 = vadd.f32 %v1372, %v1385
        %v1388 = vadd.f32 %v1373, %v1385
        %v1389 = vadd.f32 %v1374, %v1385
        %v1390 = vadd.f32 %v1375, %v1385
        %v1391 = vadd.f32 %v1376, %v1385
        %v1392 = vadd.f32 %v1377, %v1385
        %v1393 = vadd.f32 %v1378, %v1385
        %v1394 = vadd.f32 %v1379, %v1385
        %v1395 = vmax.f32 %v1387, 0.0
        %v1396 = vmax.f32 %v1388, 0.0
        %v1397 = vmax.f32 %v1389, 0.0
        %v1398 = vmax.f32 %v1390, 0.0
        %v1399 = vmax.f32 %v1391, 0.0
        %v1400 = vmax.f32 %v1392, 0.0
        %v1401 = vmax.f32 %v1393, 0.0
        %v1402 = vmax.f32 %v1394, 0.0
        %1403 = vst [vmem:[#allocation4 + $0x1] sm:$0xff] %v1395
        %1404 = vst [vmem:[#allocation4 + $0x11] sm:$0xff] %v1396
        %1405 = vst [vmem:[#allocation4 + $0x21] sm:$0xff] %v1397
        %1406 = vst [vmem:[#allocation4 + $0x31] sm:$0xff] %v1398
        %1407 = vst [vmem:[#allocation4 + $0x41] sm:$0xff] %v1399
        %1408 = vst [vmem:[#allocation4 + $0x51] sm:$0xff] %v1400
        %1409 = vst [vmem:[#allocation4 + $0x61] sm:$0xff] %v1401
        %1410 = vst [vmem:[#allocation4 + $0x71] sm:$0xff] %v1402
        %v1411 = vld [vmem:[%s635] sm:$0xf]
        %v1412 = vld [vmem:[%s635 + $0x4] sm:$0xf]
        %v1413 = vld [vmem:[%s635 + $0x8] sm:$0xf]
        %v1414 = vld [vmem:[%s635 + $0xc] sm:$0xf]
        %v1415 = vld [vmem:[%s635 + $0x10] sm:$0xf]
        %v1416 = vld [vmem:[%s635 + $0x14] sm:$0xf]
        %v1417 = vld [vmem:[%s635 + $0x18] sm:$0xf]
        %v1418 = vld [vmem:[%s635 + $0x1c] sm:$0xf]
        %v1419 = vld [vmem:[#allocation14] sm:$0xf]
        %v1420 = vld [vmem:[#allocation14 + $0x4] sm:$0xf]
        %v1421 = vld [vmem:[#allocation14 + $0x8] sm:$0xf]
        %v1422 = vld [vmem:[#allocation14 + $0xc] sm:$0xf]
        %v1423 = vld [vmem:[#allocation14 + $0x10] sm:$0xf]
        %v1424 = vld [vmem:[#allocation14 + $0x14] sm:$0xf]
        %v1425 = vld [vmem:[#allocation14 + $0x18] sm:$0xf]
        %v1426 = vld [vmem:[#allocation14 + $0x1c] sm:$0xf]
        %v1427 = vld [vmem:[#allocation14 + $0x20] sm:$0xf]
        %v1428 = vld [vmem:[#allocation14 + $0x24] sm:$0xf]
        %v1429 = vld [vmem:[#allocation14 + $0x28] sm:$0xf]
        %v1430 = vld [vmem:[#allocation14 + $0x2c] sm:$0xf]
        %v1431 = vld [vmem:[#allocation14 + $0x30] sm:$0xf]
        %v1432 = vld [vmem:[#allocation14 + $0x34] sm:$0xf]
        %v1433 = vld [vmem:[#allocation14 + $0x38] sm:$0xf]
        %v1434 = vld [vmem:[#allocation14 + $0x3c] sm:$0xf]
        %v1443 = vunpack.c.l.b16 %v1411
        %v1444 = vunpack.c.l.b16 %v1412
        %v1445 = vunpack.c.l.b16 %v1413
        %v1446 = vunpack.c.l.b16 %v1414
        %v1447 = vunpack.c.l.b16 %v1415
        %v1448 = vunpack.c.l.b16 %v1416
        %v1449 = vunpack.c.l.b16 %v1417
        %v1450 = vunpack.c.l.b16 %v1418
        %v1451 = vpack.c.b16 %v1444, %v1443
        %v1452 = vpack.c.b16 %v1446, %v1445
        %v1453 = vpack.c.b16 %v1448, %v1447
        %v1454 = vpack.c.b16 %v1450, %v1449
        %v1475 = vunpack.c.l.b16 %v1419
        %v1476 = vunpack.c.l.b16 %v1420
        %v1477 = vunpack.c.l.b16 %v1421
        %v1478 = vunpack.c.l.b16 %v1422
        %v1479 = vunpack.c.l.b16 %v1423
        %v1480 = vunpack.c.l.b16 %v1424
        %v1481 = vunpack.c.l.b16 %v1425
        %v1482 = vunpack.c.l.b16 %v1426
        %v1483 = vunpack.c.l.b16 %v1427
        %v1484 = vunpack.c.l.b16 %v1428
        %v1485 = vunpack.c.l.b16 %v1429
        %v1486 = vunpack.c.l.b16 %v1430
        %v1487 = vunpack.c.l.b16 %v1431
        %v1488 = vunpack.c.l.b16 %v1432
        %v1489 = vunpack.c.l.b16 %v1433
        %v1490 = vunpack.c.l.b16 %v1434
        %v1491 = vpack.c.b16 %v1476, %v1475
        %v1492 = vpack.c.b16 %v1478, %v1477
        %v1493 = vpack.c.b16 %v1480, %v1479
        %v1494 = vpack.c.b16 %v1482, %v1481
        %v1495 = vpack.c.b16 %v1484, %v1483
        %v1496 = vpack.c.b16 %v1486, %v1485
        %v1497 = vpack.c.b16 %v1488, %v1487
        %v1498 = vpack.c.b16 %v1490, %v1489
        %1507 = vmatprep.subr.bf16.mxu0 0
        %1508 = vmatpush1.bf16.msra.mxu0 %v1498
        %1509 = vmatprep.subr.bf16.mxu0 0
        %1510 = vmatpush1.bf16.msra.mxu0 %v1497
        %1511 = vmatprep.subr.bf16.mxu0 0
        %1512 = vmatpush1.bf16.msra.mxu0 %v1496
        %1513 = vmatprep.subr.bf16.mxu0 0
        %1514 = vmatpush1.bf16.msra.mxu0 %v1495
        %1515 = vmatprep.subr.bf16.mxu0 0
        %1516 = vmatpush1.bf16.msra.mxu0 %v1494
        %1517 = vmatprep.subr.bf16.mxu0 0
        %1518 = vmatpush1.bf16.msra.mxu0 %v1493
        %1519 = vmatprep.subr.bf16.mxu0 0
        %1520 = vmatpush1.bf16.msra.mxu0 %v1492
        %1521 = vmatprep.subr.bf16.mxu0 0
        %1522 = vmatpush1.bf16.msra.mxu0 %v1491
        %1523 = vmatprep.subr.bf16.mxu0 0
        %1524 = vmatpush2.bf16.msra.mxu0 0
        %1525 = vmatprep.subr.bf16.mxu0 0
        %1526 = vmatpush2.bf16.msra.mxu0 0
        %1527 = vmatprep.subr.bf16.mxu0 0
        %1528 = vmatpush2.bf16.msra.mxu0 0
        %1529 = vmatprep.subr.bf16.mxu0 0
        %1530 = vmatpush2.bf16.msra.mxu0 0
        %1531 = vmatprep.subr.bf16.mxu0 0
        %1532 = vmatpush2.bf16.msra.mxu0 0
        %1533 = vmatprep.subr.bf16.mxu0 0
        %1534 = vmatpush2.bf16.msra.mxu0 0
        %1535 = vmatprep.subr.bf16.mxu0 0
        %1536 = vmatpush2.bf16.msra.mxu0 0
        %1537 = vmatprep.subr.bf16.mxu0 0
        %1538 = vmatpush2.bf16.msra.mxu0 0
        %1539 = vmatprep.mubr.bf16.mxu0 0
        %1540 = vmatmul.mubr.bf16.gmra.mxu0 %v1451
        %v1541 = vpop.f32.mrf.mxu0
        %v1542 = vadd.f32 0.0, %v1541
        %v1543 = vpop.f32.mrf.mxu0
        %v1544 = vpop.f32.mrf.mxu0
        %v1545 = vadd.f32 0.0, %v1544
        %v1546 = vpop.f32.mrf.mxu0
        %1547 = vmatprep.mubr.bf16.mxu0 0
        %1548 = vmatmul.mubr.bf16.gmra.mxu0 %v1452
        %v1549 = vpop.f32.mrf.mxu0
        %v1550 = vadd.f32 0.0, %v1549
        %v1551 = vpop.f32.mrf.mxu0
        %v1552 = vpop.f32.mrf.mxu0
        %v1553 = vadd.f32 0.0, %v1552
        %v1554 = vpop.f32.mrf.mxu0
        %1555 = vmatprep.mubr.bf16.mxu0 0
        %1556 = vmatmul.mubr.bf16.gmra.mxu0 %v1453
        %v1557 = vpop.f32.mrf.mxu0
        %v1558 = vadd.f32 0.0, %v1557
        %v1559 = vpop.f32.mrf.mxu0
        %v1560 = vpop.f32.mrf.mxu0
        %v1561 = vadd.f32 0.0, %v1560
        %v1562 = vpop.f32.mrf.mxu0
        %1563 = vmatprep.mubr.bf16.mxu0 0
        %1564 = vmatmul.mubr.bf16.gmra.mxu0 %v1454
        %v1565 = vpop.f32.mrf.mxu0
        %v1566 = vadd.f32 0.0, %v1565
        %v1567 = vpop.f32.mrf.mxu0
        %v1568 = vpop.f32.mrf.mxu0
        %v1569 = vadd.f32 0.0, %v1568
        %v1570 = vpop.f32.mrf.mxu0
        %1571 = vdwg.mxu0
        %v1572 = vld [vmem:[%s5] sm:$0x1]
        %v1574 = vlaneseq
        %v1575 = vshrl.u32 %v1574, 7
        %v1576 = vsub.s32 0, %v1575
        %v1577 = vrot.slane %v1572, %v1576
        %v1579 = vmul.f32 %v1542, %v1577
        %v1580 = vmul.f32 %v1545, %v1577
        %v1581 = vmul.f32 %v1550, %v1577
        %v1582 = vmul.f32 %v1553, %v1577
        %v1583 = vmul.f32 %v1558, %v1577
        %v1584 = vmul.f32 %v1561, %v1577
        %v1585 = vmul.f32 %v1566, %v1577
        %v1586 = vmul.f32 %v1569, %v1577
        %v1587 = vld [vmem:[%s6] sm:$0x1]
        %v1589 = vlaneseq
        %v1590 = vshrl.u32 %v1589, 7
        %v1591 = vsub.s32 0, %v1590
        %v1592 = vrot.slane %v1587, %v1591
        %v1594 = vadd.f32 %v1579, %v1592
        %v1595 = vadd.f32 %v1580, %v1592
        %v1596 = vadd.f32 %v1581, %v1592
        %v1597 = vadd.f32 %v1582, %v1592
        %v1598 = vadd.f32 %v1583, %v1592
        %v1599 = vadd.f32 %v1584, %v1592
        %v1600 = vadd.f32 %v1585, %v1592
        %v1601 = vadd.f32 %v1586, %v1592
        %v1602 = vmax.f32 %v1594, 0.0
        %v1603 = vmax.f32 %v1595, 0.0
        %v1604 = vmax.f32 %v1596, 0.0
        %v1605 = vmax.f32 %v1597, 0.0
        %v1606 = vmax.f32 %v1598, 0.0
        %v1607 = vmax.f32 %v1599, 0.0
        %v1608 = vmax.f32 %v1600, 0.0
        %v1609 = vmax.f32 %v1601, 0.0
        %1610 = vst [vmem:[#allocation5] sm:$0xff] %v1602
        %1611 = vst [vmem:[#allocation5 + $0x10] sm:$0xff] %v1603
        %1612 = vst [vmem:[#allocation5 + $0x20] sm:$0xff] %v1604
        %1613 = vst [vmem:[#allocation5 + $0x30] sm:$0xff] %v1605
        %1614 = vst [vmem:[#allocation5 + $0x40] sm:$0xff] %v1606
        %1615 = vst [vmem:[#allocation5 + $0x50] sm:$0xff] %v1607
        %1616 = vst [vmem:[#allocation5 + $0x60] sm:$0xff] %v1608
        %1617 = vst [vmem:[#allocation5 + $0x70] sm:$0xff] %v1609
        %v1618 = vld [vmem:[#allocation2] sm:$0xff]
        %v1619 = vld [vmem:[#allocation2 + $0x10] sm:$0xff]
        %v1620 = vld [vmem:[#allocation2 + $0x20] sm:$0xff]
        %v1621 = vld [vmem:[#allocation2 + $0x30] sm:$0xff]
        %v1622 = vld [vmem:[#allocation2 + $0x40] sm:$0xff]
        %v1623 = vld [vmem:[#allocation2 + $0x50] sm:$0xff]
        %v1624 = vld [vmem:[#allocation2 + $0x60] sm:$0xff]
        %v1625 = vld [vmem:[#allocation2 + $0x70] sm:$0xff]
        %v1626 = vld [vmem:[#allocation15] sm:$0xf]
        %v1627 = vld [vmem:[#allocation15 + $0x4] sm:$0xf]
        %v1628 = vld [vmem:[#allocation15 + $0x8] sm:$0xf]
        %v1629 = vld [vmem:[#allocation15 + $0xc] sm:$0xf]
        %v1630 = vld [vmem:[#allocation15 + $0x10] sm:$0xf]
        %v1631 = vld [vmem:[#allocation15 + $0x14] sm:$0xf]
        %v1632 = vld [vmem:[#allocation15 + $0x18] sm:$0xf]
        %v1633 = vld [vmem:[#allocation15 + $0x1c] sm:$0xf]
        %v1634 = vld [vmem:[#allocation15 + $0x20] sm:$0xf]
        %v1635 = vld [vmem:[#allocation15 + $0x24] sm:$0xf]
        %v1636 = vld [vmem:[#allocation15 + $0x28] sm:$0xf]
        %v1637 = vld [vmem:[#allocation15 + $0x2c] sm:$0xf]
        %v1638 = vld [vmem:[#allocation15 + $0x30] sm:$0xf]
        %v1639 = vld [vmem:[#allocation15 + $0x34] sm:$0xf]
        %v1640 = vld [vmem:[#allocation15 + $0x38] sm:$0xf]
        %v1641 = vld [vmem:[#allocation15 + $0x3c] sm:$0xf]
        %v1642 = vpack.c.bf16 %v1619, %v1618
        %v1643 = vpack.c.bf16 %v1621, %v1620
        %v1644 = vpack.c.bf16 %v1623, %v1622
        %v1645 = vpack.c.bf16 %v1625, %v1624
        %v1646 = vld [vmem:[#allocation3] sm:$0xff]
        %v1647 = vld [vmem:[#allocation3 + $0x10] sm:$0xff]
        %v1648 = vld [vmem:[#allocation3 + $0x20] sm:$0xff]
        %v1649 = vld [vmem:[#allocation3 + $0x30] sm:$0xff]
        %v1650 = vld [vmem:[#allocation3 + $0x40] sm:$0xff]
        %v1651 = vld [vmem:[#allocation3 + $0x50] sm:$0xff]
        %v1652 = vld [vmem:[#allocation3 + $0x60] sm:$0xff]
        %v1653 = vld [vmem:[#allocation3 + $0x70] sm:$0xff]
        %s1654 = scalar_lea.vmem [#allocation15], 64
        %v1655 = vld [vmem:[%s1654] sm:$0xf]
        %v1656 = vld [vmem:[%s1654 + $0x4] sm:$0xf]
        %v1657 = vld [vmem:[%s1654 + $0x8] sm:$0xf]
        %v1658 = vld [vmem:[%s1654 + $0xc] sm:$0xf]
        %v1659 = vld [vmem:[%s1654 + $0x10] sm:$0xf]
        %v1660 = vld [vmem:[%s1654 + $0x14] sm:$0xf]
        %v1661 = vld [vmem:[%s1654 + $0x18] sm:$0xf]
        %v1662 = vld [vmem:[%s1654 + $0x1c] sm:$0xf]
        %v1663 = vld [vmem:[%s1654 + $0x20] sm:$0xf]
        %v1664 = vld [vmem:[%s1654 + $0x24] sm:$0xf]
        %v1665 = vld [vmem:[%s1654 + $0x28] sm:$0xf]
        %v1666 = vld [vmem:[%s1654 + $0x2c] sm:$0xf]
        %v1667 = vld [vmem:[%s1654 + $0x30] sm:$0xf]
        %v1668 = vld [vmem:[%s1654 + $0x34] sm:$0xf]
        %v1669 = vld [vmem:[%s1654 + $0x38] sm:$0xf]
        %v1670 = vld [vmem:[%s1654 + $0x3c] sm:$0xf]
        %v1671 = vpack.c.bf16 %v1647, %v1646
        %v1672 = vpack.c.bf16 %v1649, %v1648
        %v1673 = vpack.c.bf16 %v1651, %v1650
        %v1674 = vpack.c.bf16 %v1653, %v1652
        %v1691 = vunpack.c.l.b16 %v1655
        %v1692 = vunpack.c.l.b16 %v1656
        %v1693 = vunpack.c.l.b16 %v1657
        %v1694 = vunpack.c.l.b16 %v1658
        %v1695 = vunpack.c.l.b16 %v1659
        %v1696 = vunpack.c.l.b16 %v1660
        %v1697 = vunpack.c.l.b16 %v1661
        %v1698 = vunpack.c.l.b16 %v1662
        %v1699 = vunpack.c.l.b16 %v1663
        %v1700 = vunpack.c.l.b16 %v1664
        %v1701 = vunpack.c.l.b16 %v1665
        %v1702 = vunpack.c.l.b16 %v1666
        %v1703 = vunpack.c.l.b16 %v1667
        %v1704 = vunpack.c.l.b16 %v1668
        %v1705 = vunpack.c.l.b16 %v1669
        %v1706 = vunpack.c.l.b16 %v1670
        %v1707 = vpack.c.b16 %v1692, %v1691
        %v1708 = vpack.c.b16 %v1694, %v1693
        %v1709 = vpack.c.b16 %v1696, %v1695
        %v1710 = vpack.c.b16 %v1698, %v1697
        %v1711 = vpack.c.b16 %v1700, %v1699
        %v1712 = vpack.c.b16 %v1702, %v1701
        %v1713 = vpack.c.b16 %v1704, %v1703
        %v1714 = vpack.c.b16 %v1706, %v1705
        %1723 = vmatprep.subr.bf16.mxu0 0
        %1724 = vmatpush1.bf16.msra.mxu0 %v1714
        %1725 = vmatprep.subr.bf16.mxu0 0
        %1726 = vmatpush1.bf16.msra.mxu0 %v1713
        %1727 = vmatprep.subr.bf16.mxu0 0
        %1728 = vmatpush1.bf16.msra.mxu0 %v1712
        %1729 = vmatprep.subr.bf16.mxu0 0
        %1730 = vmatpush1.bf16.msra.mxu0 %v1711
        %1731 = vmatprep.subr.bf16.mxu0 0
        %1732 = vmatpush1.bf16.msra.mxu0 %v1710
        %1733 = vmatprep.subr.bf16.mxu0 0
        %1734 = vmatpush1.bf16.msra.mxu0 %v1709
        %1735 = vmatprep.subr.bf16.mxu0 0
        %1736 = vmatpush1.bf16.msra.mxu0 %v1708
        %1737 = vmatprep.subr.bf16.mxu0 0
        %1738 = vmatpush1.bf16.msra.mxu0 %v1707
        %1739 = vmatprep.subr.bf16.mxu0 0
        %1740 = vmatpush2.bf16.msra.mxu0 0
        %1741 = vmatprep.subr.bf16.mxu0 0
        %1742 = vmatpush2.bf16.msra.mxu0 0
        %1743 = vmatprep.subr.bf16.mxu0 0
        %1744 = vmatpush2.bf16.msra.mxu0 0
        %1745 = vmatprep.subr.bf16.mxu0 0
        %1746 = vmatpush2.bf16.msra.mxu0 0
        %1747 = vmatprep.subr.bf16.mxu0 0
        %1748 = vmatpush2.bf16.msra.mxu0 0
        %1749 = vmatprep.subr.bf16.mxu0 0
        %1750 = vmatpush2.bf16.msra.mxu0 0
        %1751 = vmatprep.subr.bf16.mxu0 0
        %1752 = vmatpush2.bf16.msra.mxu0 0
        %1753 = vmatprep.subr.bf16.mxu0 0
        %1754 = vmatpush2.bf16.msra.mxu0 0
        %1755 = vmatprep.mubr.bf16.mxu0 0
        %1756 = vmatmul.mubr.bf16.gmra.mxu0 %v1671
        %v1757 = vpop.f32.mrf.mxu0
        %v1758 = vadd.f32 0.0, %v1757
        %v1759 = vpop.f32.mrf.mxu0
        %v1760 = vpop.f32.mrf.mxu0
        %v1761 = vadd.f32 0.0, %v1760
        %v1762 = vpop.f32.mrf.mxu0
        %1763 = vmatprep.mubr.bf16.mxu0 0
        %1764 = vmatmul.mubr.bf16.gmra.mxu0 %v1672
        %v1765 = vpop.f32.mrf.mxu0
        %v1766 = vadd.f32 0.0, %v1765
        %v1767 = vpop.f32.mrf.mxu0
        %v1768 = vpop.f32.mrf.mxu0
        %v1769 = vadd.f32 0.0, %v1768
        %v1770 = vpop.f32.mrf.mxu0
        %1771 = vmatprep.mubr.bf16.mxu0 0
        %1772 = vmatmul.mubr.bf16.gmra.mxu0 %v1673
        %v1773 = vpop.f32.mrf.mxu0
        %v1774 = vadd.f32 0.0, %v1773
        %v1775 = vpop.f32.mrf.mxu0
        %v1776 = vpop.f32.mrf.mxu0
        %v1777 = vadd.f32 0.0, %v1776
        %v1778 = vpop.f32.mrf.mxu0
        %1779 = vmatprep.mubr.bf16.mxu0 0
        %1780 = vmatmul.mubr.bf16.gmra.mxu0 %v1674
        %v1781 = vpop.f32.mrf.mxu0
        %v1782 = vadd.f32 0.0, %v1781
        %v1783 = vpop.f32.mrf.mxu0
        %v1784 = vpop.f32.mrf.mxu0
        %v1785 = vadd.f32 0.0, %v1784
        %v1786 = vpop.f32.mrf.mxu0
        %1787 = vdwg.mxu0
        %v1804 = vunpack.c.l.b16 %v1626
        %v1805 = vunpack.c.l.b16 %v1627
        %v1806 = vunpack.c.l.b16 %v1628
        %v1807 = vunpack.c.l.b16 %v1629
        %v1808 = vunpack.c.l.b16 %v1630
        %v1809 = vunpack.c.l.b16 %v1631
        %v1810 = vunpack.c.l.b16 %v1632
        %v1811 = vunpack.c.l.b16 %v1633
        %v1812 = vunpack.c.l.b16 %v1634
        %v1813 = vunpack.c.l.b16 %v1635
        %v1814 = vunpack.c.l.b16 %v1636
        %v1815 = vunpack.c.l.b16 %v1637
        %v1816 = vunpack.c.l.b16 %v1638
        %v1817 = vunpack.c.l.b16 %v1639
        %v1818 = vunpack.c.l.b16 %v1640
        %v1819 = vunpack.c.l.b16 %v1641
        %v1820 = vpack.c.b16 %v1805, %v1804
        %v1821 = vpack.c.b16 %v1807, %v1806
        %v1822 = vpack.c.b16 %v1809, %v1808
        %v1823 = vpack.c.b16 %v1811, %v1810
        %v1824 = vpack.c.b16 %v1813, %v1812
        %v1825 = vpack.c.b16 %v1815, %v1814
        %v1826 = vpack.c.b16 %v1817, %v1816
        %v1827 = vpack.c.b16 %v1819, %v1818
        %1836 = vmatprep.subr.bf16.mxu0 0
        %1837 = vmatpush1.bf16.msra.mxu0 %v1827
        %1838 = vmatprep.subr.bf16.mxu0 0
        %1839 = vmatpush1.bf16.msra.mxu0 %v1826
        %1840 = vmatprep.subr.bf16.mxu0 0
        %1841 = vmatpush1.bf16.msra.mxu0 %v1825
        %1842 = vmatprep.subr.bf16.mxu0 0
        %1843 = vmatpush1.bf16.msra.mxu0 %v1824
        %1844 = vmatprep.subr.bf16.mxu0 0
        %1845 = vmatpush1.bf16.msra.mxu0 %v1823
        %1846 = vmatprep.subr.bf16.mxu0 0
        %1847 = vmatpush1.bf16.msra.mxu0 %v1822
        %1848 = vmatprep.subr.bf16.mxu0 0
        %1849 = vmatpush1.bf16.msra.mxu0 %v1821
        %1850 = vmatprep.subr.bf16.mxu0 0
        %1851 = vmatpush1.bf16.msra.mxu0 %v1820
        %1852 = vmatprep.subr.bf16.mxu0 0
        %1853 = vmatpush2.bf16.msra.mxu0 0
        %1854 = vmatprep.subr.bf16.mxu0 0
        %1855 = vmatpush2.bf16.msra.mxu0 0
        %1856 = vmatprep.subr.bf16.mxu0 0
        %1857 = vmatpush2.bf16.msra.mxu0 0
        %1858 = vmatprep.subr.bf16.mxu0 0
        %1859 = vmatpush2.bf16.msra.mxu0 0
        %1860 = vmatprep.subr.bf16.mxu0 0
        %1861 = vmatpush2.bf16.msra.mxu0 0
        %1862 = vmatprep.subr.bf16.mxu0 0
        %1863 = vmatpush2.bf16.msra.mxu0 0
        %1864 = vmatprep.subr.bf16.mxu0 0
        %1865 = vmatpush2.bf16.msra.mxu0 0
        %1866 = vmatprep.subr.bf16.mxu0 0
        %1867 = vmatpush2.bf16.msra.mxu0 0
        %1868 = vmatprep.mubr.bf16.mxu0 0
        %1869 = vmatmul.mubr.bf16.gmra.mxu0 %v1642
        %v1870 = vpop.f32.mrf.mxu0
        %v1871 = vadd.f32 %v1758, %v1870
        %v1872 = vpop.f32.mrf.mxu0
        %v1873 = vpop.f32.mrf.mxu0
        %v1874 = vadd.f32 %v1761, %v1873
        %v1875 = vpop.f32.mrf.mxu0
        %1876 = vmatprep.mubr.bf16.mxu0 0
        %1877 = vmatmul.mubr.bf16.gmra.mxu0 %v1643
        %v1878 = vpop.f32.mrf.mxu0
        %v1879 = vadd.f32 %v1766, %v1878
        %v1880 = vpop.f32.mrf.mxu0
        %v1881 = vpop.f32.mrf.mxu0
        %v1882 = vadd.f32 %v1769, %v1881
        %v1883 = vpop.f32.mrf.mxu0
        %1884 = vmatprep.mubr.bf16.mxu0 0
        %1885 = vmatmul.mubr.bf16.gmra.mxu0 %v1644
        %v1886 = vpop.f32.mrf.mxu0
        %v1887 = vadd.f32 %v1774, %v1886
        %v1888 = vpop.f32.mrf.mxu0
        %v1889 = vpop.f32.mrf.mxu0
        %v1890 = vadd.f32 %v1777, %v1889
        %v1891 = vpop.f32.mrf.mxu0
        %1892 = vmatprep.mubr.bf16.mxu0 0
        %1893 = vmatmul.mubr.bf16.gmra.mxu0 %v1645
        %v1894 = vpop.f32.mrf.mxu0
        %v1895 = vadd.f32 %v1782, %v1894
        %v1896 = vpop.f32.mrf.mxu0
        %v1897 = vpop.f32.mrf.mxu0
        %v1898 = vadd.f32 %v1785, %v1897
        %v1899 = vpop.f32.mrf.mxu0
        %1900 = vdwg.mxu0
        %v1901 = vld [vmem:[#allocation2 + $0x1] sm:$0xff]
        %v1902 = vld [vmem:[#allocation2 + $0x11] sm:$0xff]
        %v1903 = vld [vmem:[#allocation2 + $0x21] sm:$0xff]
        %v1904 = vld [vmem:[#allocation2 + $0x31] sm:$0xff]
        %v1905 = vld [vmem:[#allocation2 + $0x41] sm:$0xff]
        %v1906 = vld [vmem:[#allocation2 + $0x51] sm:$0xff]
        %v1907 = vld [vmem:[#allocation2 + $0x61] sm:$0xff]
        %v1908 = vld [vmem:[#allocation2 + $0x71] sm:$0xff]
        %s1909 = scalar_lea.vmem [#allocation15], 128
        %v1910 = vld [vmem:[%s1909] sm:$0xf]
        %v1911 = vld [vmem:[%s1909 + $0x4] sm:$0xf]
        %v1912 = vld [vmem:[%s1909 + $0x8] sm:$0xf]
        %v1913 = vld [vmem:[%s1909 + $0xc] sm:$0xf]
        %v1914 = vld [vmem:[%s1909 + $0x10] sm:$0xf]
        %v1915 = vld [vmem:[%s1909 + $0x14] sm:$0xf]
        %v1916 = vld [vmem:[%s1909 + $0x18] sm:$0xf]
        %v1917 = vld [vmem:[%s1909 + $0x1c] sm:$0xf]
        %v1918 = vld [vmem:[%s1909 + $0x20] sm:$0xf]
        %v1919 = vld [vmem:[%s1909 + $0x24] sm:$0xf]
        %v1920 = vld [vmem:[%s1909 + $0x28] sm:$0xf]
        %v1921 = vld [vmem:[%s1909 + $0x2c] sm:$0xf]
        %v1922 = vld [vmem:[%s1909 + $0x30] sm:$0xf]
        %v1923 = vld [vmem:[%s1909 + $0x34] sm:$0xf]
        %v1924 = vld [vmem:[%s1909 + $0x38] sm:$0xf]
        %v1925 = vld [vmem:[%s1909 + $0x3c] sm:$0xf]
        %v1926 = vpack.c.bf16 %v1902, %v1901
        %v1927 = vpack.c.bf16 %v1904, %v1903
        %v1928 = vpack.c.bf16 %v1906, %v1905
        %v1929 = vpack.c.bf16 %v1908, %v1907
        %v1946 = vunpack.c.l.b16 %v1910
        %v1947 = vunpack.c.l.b16 %v1911
        %v1948 = vunpack.c.l.b16 %v1912
        %v1949 = vunpack.c.l.b16 %v1913
        %v1950 = vunpack.c.l.b16 %v1914
        %v1951 = vunpack.c.l.b16 %v1915
        %v1952 = vunpack.c.l.b16 %v1916
        %v1953 = vunpack.c.l.b16 %v1917
        %v1954 = vunpack.c.l.b16 %v1918
        %v1955 = vunpack.c.l.b16 %v1919
        %v1956 = vunpack.c.l.b16 %v1920
        %v1957 = vunpack.c.l.b16 %v1921
        %v1958 = vunpack.c.l.b16 %v1922
        %v1959 = vunpack.c.l.b16 %v1923
        %v1960 = vunpack.c.l.b16 %v1924
        %v1961 = vunpack.c.l.b16 %v1925
        %v1962 = vpack.c.b16 %v1947, %v1946
        %v1963 = vpack.c.b16 %v1949, %v1948
        %v1964 = vpack.c.b16 %v1951, %v1950
        %v1965 = vpack.c.b16 %v1953, %v1952
        %v1966 = vpack.c.b16 %v1955, %v1954
        %v1967 = vpack.c.b16 %v1957, %v1956
        %v1968 = vpack.c.b16 %v1959, %v1958
        %v1969 = vpack.c.b16 %v1961, %v1960
        %1978 = vmatprep.subr.bf16.mxu0 0
        %1979 = vmatpush1.bf16.msra.mxu0 %v1969
        %1980 = vmatprep.subr.bf16.mxu0 0
        %1981 = vmatpush1.bf16.msra.mxu0 %v1968
        %1982 = vmatprep.subr.bf16.mxu0 0
        %1983 = vmatpush1.bf16.msra.mxu0 %v1967
        %1984 = vmatprep.subr.bf16.mxu0 0
        %1985 = vmatpush1.bf16.msra.mxu0 %v1966
        %1986 = vmatprep.subr.bf16.mxu0 0
        %1987 = vmatpush1.bf16.msra.mxu0 %v1965
        %1988 = vmatprep.subr.bf16.mxu0 0
        %1989 = vmatpush1.bf16.msra.mxu0 %v1964
        %1990 = vmatprep.subr.bf16.mxu0 0
        %1991 = vmatpush1.bf16.msra.mxu0 %v1963
        %1992 = vmatprep.subr.bf16.mxu0 0
        %1993 = vmatpush1.bf16.msra.mxu0 %v1962
        %1994 = vmatprep.subr.bf16.mxu0 0
        %1995 = vmatpush2.bf16.msra.mxu0 0
        %1996 = vmatprep.subr.bf16.mxu0 0
        %1997 = vmatpush2.bf16.msra.mxu0 0
        %1998 = vmatprep.subr.bf16.mxu0 0
        %1999 = vmatpush2.bf16.msra.mxu0 0
        %2000 = vmatprep.subr.bf16.mxu0 0
        %2001 = vmatpush2.bf16.msra.mxu0 0
        %2002 = vmatprep.subr.bf16.mxu0 0
        %2003 = vmatpush2.bf16.msra.mxu0 0
        %2004 = vmatprep.subr.bf16.mxu0 0
        %2005 = vmatpush2.bf16.msra.mxu0 0
        %2006 = vmatprep.subr.bf16.mxu0 0
        %2007 = vmatpush2.bf16.msra.mxu0 0
        %2008 = vmatprep.subr.bf16.mxu0 0
        %2009 = vmatpush2.bf16.msra.mxu0 0
        %2010 = vmatprep.mubr.bf16.mxu0 0
        %2011 = vmatmul.mubr.bf16.gmra.mxu0 %v1926
        %v2012 = vpop.f32.mrf.mxu0
        %v2013 = vadd.f32 0.0, %v2012
        %v2014 = vpop.f32.mrf.mxu0
        %v2015 = vpop.f32.mrf.mxu0
        %v2016 = vadd.f32 0.0, %v2015
        %v2017 = vpop.f32.mrf.mxu0
        %2018 = vmatprep.mubr.bf16.mxu0 0
        %2019 = vmatmul.mubr.bf16.gmra.mxu0 %v1927
        %v2020 = vpop.f32.mrf.mxu0
        %v2021 = vadd.f32 0.0, %v2020
        %v2022 = vpop.f32.mrf.mxu0
        %v2023 = vpop.f32.mrf.mxu0
        %v2024 = vadd.f32 0.0, %v2023
        %v2025 = vpop.f32.mrf.mxu0
        %2026 = vmatprep.mubr.bf16.mxu0 0
        %2027 = vmatmul.mubr.bf16.gmra.mxu0 %v1928
        %v2028 = vpop.f32.mrf.mxu0
        %v2029 = vadd.f32 0.0, %v2028
        %v2030 = vpop.f32.mrf.mxu0
        %v2031 = vpop.f32.mrf.mxu0
        %v2032 = vadd.f32 0.0, %v2031
        %v2033 = vpop.f32.mrf.mxu0
        %2034 = vmatprep.mubr.bf16.mxu0 0
        %2035 = vmatmul.mubr.bf16.gmra.mxu0 %v1929
        %v2036 = vpop.f32.mrf.mxu0
        %v2037 = vadd.f32 0.0, %v2036
        %v2038 = vpop.f32.mrf.mxu0
        %v2039 = vpop.f32.mrf.mxu0
        %v2040 = vadd.f32 0.0, %v2039
        %v2041 = vpop.f32.mrf.mxu0
        %2042 = vdwg.mxu0
        %v2043 = vadd.f32 %v1871, %v2013
        %v2044 = vadd.f32 %v1874, %v2016
        %v2045 = vadd.f32 %v1879, %v2021
        %v2046 = vadd.f32 %v1882, %v2024
        %v2047 = vadd.f32 %v1887, %v2029
        %v2048 = vadd.f32 %v1890, %v2032
        %v2049 = vadd.f32 %v1895, %v2037
        %v2050 = vadd.f32 %v1898, %v2040
        %v2051 = vld [vmem:[#allocation4] sm:$0xff]
        %v2052 = vld [vmem:[#allocation4 + $0x10] sm:$0xff]
        %v2053 = vld [vmem:[#allocation4 + $0x20] sm:$0xff]
        %v2054 = vld [vmem:[#allocation4 + $0x30] sm:$0xff]
        %v2055 = vld [vmem:[#allocation4 + $0x40] sm:$0xff]
        %v2056 = vld [vmem:[#allocation4 + $0x50] sm:$0xff]
        %v2057 = vld [vmem:[#allocation4 + $0x60] sm:$0xff]
        %v2058 = vld [vmem:[#allocation4 + $0x70] sm:$0xff]
        %s2059 = scalar_lea.vmem [#allocation15], 192
        %v2060 = vld [vmem:[%s2059] sm:$0xf]
        %v2061 = vld [vmem:[%s2059 + $0x4] sm:$0xf]
        %v2062 = vld [vmem:[%s2059 + $0x8] sm:$0xf]
        %v2063 = vld [vmem:[%s2059 + $0xc] sm:$0xf]
        %v2064 = vld [vmem:[%s2059 + $0x10] sm:$0xf]
        %v2065 = vld [vmem:[%s2059 + $0x14] sm:$0xf]
        %v2066 = vld [vmem:[%s2059 + $0x18] sm:$0xf]
        %v2067 = vld [vmem:[%s2059 + $0x1c] sm:$0xf]
        %v2068 = vld [vmem:[%s2059 + $0x20] sm:$0xf]
        %v2069 = vld [vmem:[%s2059 + $0x24] sm:$0xf]
        %v2070 = vld [vmem:[%s2059 + $0x28] sm:$0xf]
        %v2071 = vld [vmem:[%s2059 + $0x2c] sm:$0xf]
        %v2072 = vld [vmem:[%s2059 + $0x30] sm:$0xf]
        %v2073 = vld [vmem:[%s2059 + $0x34] sm:$0xf]
        %v2074 = vld [vmem:[%s2059 + $0x38] sm:$0xf]
        %v2075 = vld [vmem:[%s2059 + $0x3c] sm:$0xf]
        %v2076 = vpack.c.bf16 %v2052, %v2051
        %v2077 = vpack.c.bf16 %v2054, %v2053
        %v2078 = vpack.c.bf16 %v2056, %v2055
        %v2079 = vpack.c.bf16 %v2058, %v2057
        %v2096 = vunpack.c.l.b16 %v2060
        %v2097 = vunpack.c.l.b16 %v2061
        %v2098 = vunpack.c.l.b16 %v2062
        %v2099 = vunpack.c.l.b16 %v2063
        %v2100 = vunpack.c.l.b16 %v2064
        %v2101 = vunpack.c.l.b16 %v2065
        %v2102 = vunpack.c.l.b16 %v2066
        %v2103 = vunpack.c.l.b16 %v2067
        %v2104 = vunpack.c.l.b16 %v2068
        %v2105 = vunpack.c.l.b16 %v2069
        %v2106 = vunpack.c.l.b16 %v2070
        %v2107 = vunpack.c.l.b16 %v2071
        %v2108 = vunpack.c.l.b16 %v2072
        %v2109 = vunpack.c.l.b16 %v2073
        %v2110 = vunpack.c.l.b16 %v2074
        %v2111 = vunpack.c.l.b16 %v2075
        %v2112 = vpack.c.b16 %v2097, %v2096
        %v2113 = vpack.c.b16 %v2099, %v2098
        %v2114 = vpack.c.b16 %v2101, %v2100
        %v2115 = vpack.c.b16 %v2103, %v2102
        %v2116 = vpack.c.b16 %v2105, %v2104
        %v2117 = vpack.c.b16 %v2107, %v2106
        %v2118 = vpack.c.b16 %v2109, %v2108
        %v2119 = vpack.c.b16 %v2111, %v2110
        %2128 = vmatprep.subr.bf16.mxu0 0
        %2129 = vmatpush1.bf16.msra.mxu0 %v2119
        %2130 = vmatprep.subr.bf16.mxu0 0
        %2131 = vmatpush1.bf16.msra.mxu0 %v2118
        %2132 = vmatprep.subr.bf16.mxu0 0
        %2133 = vmatpush1.bf16.msra.mxu0 %v2117
        %2134 = vmatprep.subr.bf16.mxu0 0
        %2135 = vmatpush1.bf16.msra.mxu0 %v2116
        %2136 = vmatprep.subr.bf16.mxu0 0
        %2137 = vmatpush1.bf16.msra.mxu0 %v2115
        %2138 = vmatprep.subr.bf16.mxu0 0
        %2139 = vmatpush1.bf16.msra.mxu0 %v2114
        %2140 = vmatprep.subr.bf16.mxu0 0
        %2141 = vmatpush1.bf16.msra.mxu0 %v2113
        %2142 = vmatprep.subr.bf16.mxu0 0
        %2143 = vmatpush1.bf16.msra.mxu0 %v2112
        %2144 = vmatprep.subr.bf16.mxu0 0
        %2145 = vmatpush2.bf16.msra.mxu0 0
        %2146 = vmatprep.subr.bf16.mxu0 0
        %2147 = vmatpush2.bf16.msra.mxu0 0
        %2148 = vmatprep.subr.bf16.mxu0 0
        %2149 = vmatpush2.bf16.msra.mxu0 0
        %2150 = vmatprep.subr.bf16.mxu0 0
        %2151 = vmatpush2.bf16.msra.mxu0 0
        %2152 = vmatprep.subr.bf16.mxu0 0
        %2153 = vmatpush2.bf16.msra.mxu0 0
        %2154 = vmatprep.subr.bf16.mxu0 0
        %2155 = vmatpush2.bf16.msra.mxu0 0
        %2156 = vmatprep.subr.bf16.mxu0 0
        %2157 = vmatpush2.bf16.msra.mxu0 0
        %2158 = vmatprep.subr.bf16.mxu0 0
        %2159 = vmatpush2.bf16.msra.mxu0 0
        %2160 = vmatprep.mubr.bf16.mxu0 0
        %2161 = vmatmul.mubr.bf16.gmra.mxu0 %v2076
        %v2162 = vpop.f32.mrf.mxu0
        %v2163 = vadd.f32 0.0, %v2162
        %v2164 = vpop.f32.mrf.mxu0
        %v2165 = vpop.f32.mrf.mxu0
        %v2166 = vadd.f32 0.0, %v2165
        %v2167 = vpop.f32.mrf.mxu0
        %2168 = vmatprep.mubr.bf16.mxu0 0
        %2169 = vmatmul.mubr.bf16.gmra.mxu0 %v2077
        %v2170 = vpop.f32.mrf.mxu0
        %v2171 = vadd.f32 0.0, %v2170
        %v2172 = vpop.f32.mrf.mxu0
        %v2173 = vpop.f32.mrf.mxu0
        %v2174 = vadd.f32 0.0, %v2173
        %v2175 = vpop.f32.mrf.mxu0
        %2176 = vmatprep.mubr.bf16.mxu0 0
        %2177 = vmatmul.mubr.bf16.gmra.mxu0 %v2078
        %v2178 = vpop.f32.mrf.mxu0
        %v2179 = vadd.f32 0.0, %v2178
        %v2180 = vpop.f32.mrf.mxu0
        %v2181 = vpop.f32.mrf.mxu0
        %v2182 = vadd.f32 0.0, %v2181
        %v2183 = vpop.f32.mrf.mxu0
        %2184 = vmatprep.mubr.bf16.mxu0 0
        %2185 = vmatmul.mubr.bf16.gmra.mxu0 %v2079
        %v2186 = vpop.f32.mrf.mxu0
        %v2187 = vadd.f32 0.0, %v2186
        %v2188 = vpop.f32.mrf.mxu0
        %v2189 = vpop.f32.mrf.mxu0
        %v2190 = vadd.f32 0.0, %v2189
        %v2191 = vpop.f32.mrf.mxu0
        %2192 = vdwg.mxu0
        %v2193 = vadd.f32 %v2043, %v2163
        %v2194 = vadd.f32 %v2044, %v2166
        %v2195 = vadd.f32 %v2045, %v2171
        %v2196 = vadd.f32 %v2046, %v2174
        %v2197 = vadd.f32 %v2047, %v2179
        %v2198 = vadd.f32 %v2048, %v2182
        %v2199 = vadd.f32 %v2049, %v2187
        %v2200 = vadd.f32 %v2050, %v2190
        %v2201 = vld [vmem:[#allocation5] sm:$0xff]
        %v2202 = vld [vmem:[#allocation5 + $0x10] sm:$0xff]
        %v2203 = vld [vmem:[#allocation5 + $0x20] sm:$0xff]
        %v2204 = vld [vmem:[#allocation5 + $0x30] sm:$0xff]
        %v2205 = vld [vmem:[#allocation5 + $0x40] sm:$0xff]
        %v2206 = vld [vmem:[#allocation5 + $0x50] sm:$0xff]
        %v2207 = vld [vmem:[#allocation5 + $0x60] sm:$0xff]
        %v2208 = vld [vmem:[#allocation5 + $0x70] sm:$0xff]
        %s2209 = scalar_lea.vmem [#allocation15], 256
        %v2210 = vld [vmem:[%s2209] sm:$0xf]
        %v2211 = vld [vmem:[%s2209 + $0x4] sm:$0xf]
        %v2212 = vld [vmem:[%s2209 + $0x8] sm:$0xf]
        %v2213 = vld [vmem:[%s2209 + $0xc] sm:$0xf]
        %v2214 = vld [vmem:[%s2209 + $0x10] sm:$0xf]
        %v2215 = vld [vmem:[%s2209 + $0x14] sm:$0xf]
        %v2216 = vld [vmem:[%s2209 + $0x18] sm:$0xf]
        %v2217 = vld [vmem:[%s2209 + $0x1c] sm:$0xf]
        %v2218 = vld [vmem:[%s2209 + $0x20] sm:$0xf]
        %v2219 = vld [vmem:[%s2209 + $0x24] sm:$0xf]
        %v2220 = vld [vmem:[%s2209 + $0x28] sm:$0xf]
        %v2221 = vld [vmem:[%s2209 + $0x2c] sm:$0xf]
        %v2222 = vld [vmem:[%s2209 + $0x30] sm:$0xf]
        %v2223 = vld [vmem:[%s2209 + $0x34] sm:$0xf]
        %v2224 = vld [vmem:[%s2209 + $0x38] sm:$0xf]
        %v2225 = vld [vmem:[%s2209 + $0x3c] sm:$0xf]
        %v2226 = vpack.c.bf16 %v2202, %v2201
        %v2227 = vpack.c.bf16 %v2204, %v2203
        %v2228 = vpack.c.bf16 %v2206, %v2205
        %v2229 = vpack.c.bf16 %v2208, %v2207
        %v2246 = vunpack.c.l.b16 %v2210
        %v2247 = vunpack.c.l.b16 %v2211
        %v2248 = vunpack.c.l.b16 %v2212
        %v2249 = vunpack.c.l.b16 %v2213
        %v2250 = vunpack.c.l.b16 %v2214
        %v2251 = vunpack.c.l.b16 %v2215
        %v2252 = vunpack.c.l.b16 %v2216
        %v2253 = vunpack.c.l.b16 %v2217
        %v2254 = vunpack.c.l.b16 %v2218
        %v2255 = vunpack.c.l.b16 %v2219
        %v2256 = vunpack.c.l.b16 %v2220
        %v2257 = vunpack.c.l.b16 %v2221
        %v2258 = vunpack.c.l.b16 %v2222
        %v2259 = vunpack.c.l.b16 %v2223
        %v2260 = vunpack.c.l.b16 %v2224
        %v2261 = vunpack.c.l.b16 %v2225
        %v2262 = vpack.c.b16 %v2247, %v2246
        %v2263 = vpack.c.b16 %v2249, %v2248
        %v2264 = vpack.c.b16 %v2251, %v2250
        %v2265 = vpack.c.b16 %v2253, %v2252
        %v2266 = vpack.c.b16 %v2255, %v2254
        %v2267 = vpack.c.b16 %v2257, %v2256
        %v2268 = vpack.c.b16 %v2259, %v2258
        %v2269 = vpack.c.b16 %v2261, %v2260
        %2278 = vmatprep.subr.bf16.mxu0 0
        %2279 = vmatpush1.bf16.msra.mxu0 %v2269
        %2280 = vmatprep.subr.bf16.mxu0 0
        %2281 = vmatpush1.bf16.msra.mxu0 %v2268
        %2282 = vmatprep.subr.bf16.mxu0 0
        %2283 = vmatpush1.bf16.msra.mxu0 %v2267
        %2284 = vmatprep.subr.bf16.mxu0 0
        %2285 = vmatpush1.bf16.msra.mxu0 %v2266
        %2286 = vmatprep.subr.bf16.mxu0 0
        %2287 = vmatpush1.bf16.msra.mxu0 %v2265
        %2288 = vmatprep.subr.bf16.mxu0 0
        %2289 = vmatpush1.bf16.msra.mxu0 %v2264
        %2290 = vmatprep.subr.bf16.mxu0 0
        %2291 = vmatpush1.bf16.msra.mxu0 %v2263
        %2292 = vmatprep.subr.bf16.mxu0 0
        %2293 = vmatpush1.bf16.msra.mxu0 %v2262
        %2294 = vmatprep.subr.bf16.mxu0 0
        %2295 = vmatpush2.bf16.msra.mxu0 0
        %2296 = vmatprep.subr.bf16.mxu0 0
        %2297 = vmatpush2.bf16.msra.mxu0 0
        %2298 = vmatprep.subr.bf16.mxu0 0
        %2299 = vmatpush2.bf16.msra.mxu0 0
        %2300 = vmatprep.subr.bf16.mxu0 0
        %2301 = vmatpush2.bf16.msra.mxu0 0
        %2302 = vmatprep.subr.bf16.mxu0 0
        %2303 = vmatpush2.bf16.msra.mxu0 0
        %2304 = vmatprep.subr.bf16.mxu0 0
        %2305 = vmatpush2.bf16.msra.mxu0 0
        %2306 = vmatprep.subr.bf16.mxu0 0
        %2307 = vmatpush2.bf16.msra.mxu0 0
        %2308 = vmatprep.subr.bf16.mxu0 0
        %2309 = vmatpush2.bf16.msra.mxu0 0
        %2310 = vmatprep.mubr.bf16.mxu0 0
        %2311 = vmatmul.mubr.bf16.gmra.mxu0 %v2226
        %v2312 = vpop.f32.mrf.mxu0
        %v2313 = vadd.f32 0.0, %v2312
        %v2314 = vpop.f32.mrf.mxu0
        %v2315 = vpop.f32.mrf.mxu0
        %v2316 = vadd.f32 0.0, %v2315
        %v2317 = vpop.f32.mrf.mxu0
        %2318 = vmatprep.mubr.bf16.mxu0 0
        %2319 = vmatmul.mubr.bf16.gmra.mxu0 %v2227
        %v2320 = vpop.f32.mrf.mxu0
        %v2321 = vadd.f32 0.0, %v2320
        %v2322 = vpop.f32.mrf.mxu0
        %v2323 = vpop.f32.mrf.mxu0
        %v2324 = vadd.f32 0.0, %v2323
        %v2325 = vpop.f32.mrf.mxu0
        %2326 = vmatprep.mubr.bf16.mxu0 0
        %2327 = vmatmul.mubr.bf16.gmra.mxu0 %v2228
        %v2328 = vpop.f32.mrf.mxu0
        %v2329 = vadd.f32 0.0, %v2328
        %v2330 = vpop.f32.mrf.mxu0
        %v2331 = vpop.f32.mrf.mxu0
        %v2332 = vadd.f32 0.0, %v2331
        %v2333 = vpop.f32.mrf.mxu0
        %2334 = vmatprep.mubr.bf16.mxu0 0
        %2335 = vmatmul.mubr.bf16.gmra.mxu0 %v2229
        %v2336 = vpop.f32.mrf.mxu0
        %v2337 = vadd.f32 0.0, %v2336
        %v2338 = vpop.f32.mrf.mxu0
        %v2339 = vpop.f32.mrf.mxu0
        %v2340 = vadd.f32 0.0, %v2339
        %v2341 = vpop.f32.mrf.mxu0
        %2342 = vdwg.mxu0
        %v2343 = vadd.f32 %v2193, %v2313
        %v2344 = vadd.f32 %v2194, %v2316
        %v2345 = vadd.f32 %v2195, %v2321
        %v2346 = vadd.f32 %v2196, %v2324
        %v2347 = vadd.f32 %v2197, %v2329
        %v2348 = vadd.f32 %v2198, %v2332
        %v2349 = vadd.f32 %v2199, %v2337
        %v2350 = vadd.f32 %v2200, %v2340
        %v2351 = vld [vmem:[#allocation4 + $0x1] sm:$0xff]
        %v2352 = vld [vmem:[#allocation4 + $0x11] sm:$0xff]
        %v2353 = vld [vmem:[#allocation4 + $0x21] sm:$0xff]
        %v2354 = vld [vmem:[#allocation4 + $0x31] sm:$0xff]
        %v2355 = vld [vmem:[#allocation4 + $0x41] sm:$0xff]
        %v2356 = vld [vmem:[#allocation4 + $0x51] sm:$0xff]
        %v2357 = vld [vmem:[#allocation4 + $0x61] sm:$0xff]
        %v2358 = vld [vmem:[#allocation4 + $0x71] sm:$0xff]
        %s2359 = scalar_lea.vmem [#allocation15], 320
        %v2360 = vld [vmem:[%s2359] sm:$0xf]
        %v2361 = vld [vmem:[%s2359 + $0x4] sm:$0xf]
        %v2362 = vld [vmem:[%s2359 + $0x8] sm:$0xf]
        %v2363 = vld [vmem:[%s2359 + $0xc] sm:$0xf]
        %v2364 = vld [vmem:[%s2359 + $0x10] sm:$0xf]
        %v2365 = vld [vmem:[%s2359 + $0x14] sm:$0xf]
        %v2366 = vld [vmem:[%s2359 + $0x18] sm:$0xf]
        %v2367 = vld [vmem:[%s2359 + $0x1c] sm:$0xf]
        %v2368 = vld [vmem:[%s2359 + $0x20] sm:$0xf]
        %v2369 = vld [vmem:[%s2359 + $0x24] sm:$0xf]
        %v2370 = vld [vmem:[%s2359 + $0x28] sm:$0xf]
        %v2371 = vld [vmem:[%s2359 + $0x2c] sm:$0xf]
        %v2372 = vld [vmem:[%s2359 + $0x30] sm:$0xf]
        %v2373 = vld [vmem:[%s2359 + $0x34] sm:$0xf]
        %v2374 = vld [vmem:[%s2359 + $0x38] sm:$0xf]
        %v2375 = vld [vmem:[%s2359 + $0x3c] sm:$0xf]
        %v2376 = vpack.c.bf16 %v2352, %v2351
        %v2377 = vpack.c.bf16 %v2354, %v2353
        %v2378 = vpack.c.bf16 %v2356, %v2355
        %v2379 = vpack.c.bf16 %v2358, %v2357
        %v2396 = vunpack.c.l.b16 %v2360
        %v2397 = vunpack.c.l.b16 %v2361
        %v2398 = vunpack.c.l.b16 %v2362
        %v2399 = vunpack.c.l.b16 %v2363
        %v2400 = vunpack.c.l.b16 %v2364
        %v2401 = vunpack.c.l.b16 %v2365
        %v2402 = vunpack.c.l.b16 %v2366
        %v2403 = vunpack.c.l.b16 %v2367
        %v2404 = vunpack.c.l.b16 %v2368
        %v2405 = vunpack.c.l.b16 %v2369
        %v2406 = vunpack.c.l.b16 %v2370
        %v2407 = vunpack.c.l.b16 %v2371
        %v2408 = vunpack.c.l.b16 %v2372
        %v2409 = vunpack.c.l.b16 %v2373
        %v2410 = vunpack.c.l.b16 %v2374
        %v2411 = vunpack.c.l.b16 %v2375
        %v2412 = vpack.c.b16 %v2397, %v2396
        %v2413 = vpack.c.b16 %v2399, %v2398
        %v2414 = vpack.c.b16 %v2401, %v2400
        %v2415 = vpack.c.b16 %v2403, %v2402
        %v2416 = vpack.c.b16 %v2405, %v2404
        %v2417 = vpack.c.b16 %v2407, %v2406
        %v2418 = vpack.c.b16 %v2409, %v2408
        %v2419 = vpack.c.b16 %v2411, %v2410
        %2428 = vmatprep.subr.bf16.mxu0 0
        %2429 = vmatpush1.bf16.msra.mxu0 %v2419
        %2430 = vmatprep.subr.bf16.mxu0 0
        %2431 = vmatpush1.bf16.msra.mxu0 %v2418
        %2432 = vmatprep.subr.bf16.mxu0 0
        %2433 = vmatpush1.bf16.msra.mxu0 %v2417
        %2434 = vmatprep.subr.bf16.mxu0 0
        %2435 = vmatpush1.bf16.msra.mxu0 %v2416
        %2436 = vmatprep.subr.bf16.mxu0 0
        %2437 = vmatpush1.bf16.msra.mxu0 %v2415
        %2438 = vmatprep.subr.bf16.mxu0 0
        %2439 = vmatpush1.bf16.msra.mxu0 %v2414
        %2440 = vmatprep.subr.bf16.mxu0 0
        %2441 = vmatpush1.bf16.msra.mxu0 %v2413
        %2442 = vmatprep.subr.bf16.mxu0 0
        %2443 = vmatpush1.bf16.msra.mxu0 %v2412
        %2444 = vmatprep.subr.bf16.mxu0 0
        %2445 = vmatpush2.bf16.msra.mxu0 0
        %2446 = vmatprep.subr.bf16.mxu0 0
        %2447 = vmatpush2.bf16.msra.mxu0 0
        %2448 = vmatprep.subr.bf16.mxu0 0
        %2449 = vmatpush2.bf16.msra.mxu0 0
        %2450 = vmatprep.subr.bf16.mxu0 0
        %2451 = vmatpush2.bf16.msra.mxu0 0
        %2452 = vmatprep.subr.bf16.mxu0 0
        %2453 = vmatpush2.bf16.msra.mxu0 0
        %2454 = vmatprep.subr.bf16.mxu0 0
        %2455 = vmatpush2.bf16.msra.mxu0 0
        %2456 = vmatprep.subr.bf16.mxu0 0
        %2457 = vmatpush2.bf16.msra.mxu0 0
        %2458 = vmatprep.subr.bf16.mxu0 0
        %2459 = vmatpush2.bf16.msra.mxu0 0
        %2460 = vmatprep.mubr.bf16.mxu0 0
        %2461 = vmatmul.mubr.bf16.gmra.mxu0 %v2376
        %v2462 = vpop.f32.mrf.mxu0
        %v2463 = vadd.f32 0.0, %v2462
        %v2464 = vpop.f32.mrf.mxu0
        %v2465 = vpop.f32.mrf.mxu0
        %v2466 = vadd.f32 0.0, %v2465
        %v2467 = vpop.f32.mrf.mxu0
        %2468 = vmatprep.mubr.bf16.mxu0 0
        %2469 = vmatmul.mubr.bf16.gmra.mxu0 %v2377
        %v2470 = vpop.f32.mrf.mxu0
        %v2471 = vadd.f32 0.0, %v2470
        %v2472 = vpop.f32.mrf.mxu0
        %v2473 = vpop.f32.mrf.mxu0
        %v2474 = vadd.f32 0.0, %v2473
        %v2475 = vpop.f32.mrf.mxu0
        %2476 = vmatprep.mubr.bf16.mxu0 0
        %2477 = vmatmul.mubr.bf16.gmra.mxu0 %v2378
        %v2478 = vpop.f32.mrf.mxu0
        %v2479 = vadd.f32 0.0, %v2478
        %v2480 = vpop.f32.mrf.mxu0
        %v2481 = vpop.f32.mrf.mxu0
        %v2482 = vadd.f32 0.0, %v2481
        %v2483 = vpop.f32.mrf.mxu0
        %2484 = vmatprep.mubr.bf16.mxu0 0
        %2485 = vmatmul.mubr.bf16.gmra.mxu0 %v2379
        %v2486 = vpop.f32.mrf.mxu0
        %v2487 = vadd.f32 0.0, %v2486
        %v2488 = vpop.f32.mrf.mxu0
        %v2489 = vpop.f32.mrf.mxu0
        %v2490 = vadd.f32 0.0, %v2489
        %v2491 = vpop.f32.mrf.mxu0
        %2492 = vdwg.mxu0
        %v2493 = vadd.f32 %v2343, %v2463
        %v2494 = vadd.f32 %v2344, %v2466
        %v2495 = vadd.f32 %v2345, %v2471
        %v2496 = vadd.f32 %v2346, %v2474
        %v2497 = vadd.f32 %v2347, %v2479
        %v2498 = vadd.f32 %v2348, %v2482
        %v2499 = vadd.f32 %v2349, %v2487
        %v2500 = vadd.f32 %v2350, %v2490
        %v2501 = vld [vmem:[%s987] sm:$0xff]
        %v2502 = vld [vmem:[%s987 + $0x10] sm:$0xff]
        %v2503 = vld [vmem:[%s987 + $0x20] sm:$0xff]
        %v2504 = vld [vmem:[%s987 + $0x30] sm:$0xff]
        %v2505 = vld [vmem:[%s987 + $0x40] sm:$0xff]
        %v2506 = vld [vmem:[%s987 + $0x50] sm:$0xff]
        %v2507 = vld [vmem:[%s987 + $0x60] sm:$0xff]
        %v2508 = vld [vmem:[%s987 + $0x70] sm:$0xff]
        %s2509 = scalar_lea.vmem [#allocation15], 384
        %v2510 = vld [vmem:[%s2509] sm:$0xf]
        %v2511 = vld [vmem:[%s2509 + $0x4] sm:$0xf]
        %v2512 = vld [vmem:[%s2509 + $0x8] sm:$0xf]
        %v2513 = vld [vmem:[%s2509 + $0xc] sm:$0xf]
        %v2514 = vld [vmem:[%s2509 + $0x10] sm:$0xf]
        %v2515 = vld [vmem:[%s2509 + $0x14] sm:$0xf]
        %v2516 = vld [vmem:[%s2509 + $0x18] sm:$0xf]
        %v2517 = vld [vmem:[%s2509 + $0x1c] sm:$0xf]
        %v2518 = vld [vmem:[%s2509 + $0x20] sm:$0xf]
        %v2519 = vld [vmem:[%s2509 + $0x24] sm:$0xf]
        %v2520 = vld [vmem:[%s2509 + $0x28] sm:$0xf]
        %v2521 = vld [vmem:[%s2509 + $0x2c] sm:$0xf]
        %v2522 = vld [vmem:[%s2509 + $0x30] sm:$0xf]
        %v2523 = vld [vmem:[%s2509 + $0x34] sm:$0xf]
        %v2524 = vld [vmem:[%s2509 + $0x38] sm:$0xf]
        %v2525 = vld [vmem:[%s2509 + $0x3c] sm:$0xf]
        %v2526 = vpack.c.bf16 %v2502, %v2501
        %v2527 = vpack.c.bf16 %v2504, %v2503
        %v2528 = vpack.c.bf16 %v2506, %v2505
        %v2529 = vpack.c.bf16 %v2508, %v2507
        %v2546 = vunpack.c.l.b16 %v2510
        %v2547 = vunpack.c.l.b16 %v2511
        %v2548 = vunpack.c.l.b16 %v2512
        %v2549 = vunpack.c.l.b16 %v2513
        %v2550 = vunpack.c.l.b16 %v2514
        %v2551 = vunpack.c.l.b16 %v2515
        %v2552 = vunpack.c.l.b16 %v2516
        %v2553 = vunpack.c.l.b16 %v2517
        %v2554 = vunpack.c.l.b16 %v2518
        %v2555 = vunpack.c.l.b16 %v2519
        %v2556 = vunpack.c.l.b16 %v2520
        %v2557 = vunpack.c.l.b16 %v2521
        %v2558 = vunpack.c.l.b16 %v2522
        %v2559 = vunpack.c.l.b16 %v2523
        %v2560 = vunpack.c.l.b16 %v2524
        %v2561 = vunpack.c.l.b16 %v2525
        %v2562 = vpack.c.b16 %v2547, %v2546
        %v2563 = vpack.c.b16 %v2549, %v2548
        %v2564 = vpack.c.b16 %v2551, %v2550
        %v2565 = vpack.c.b16 %v2553, %v2552
        %v2566 = vpack.c.b16 %v2555, %v2554
        %v2567 = vpack.c.b16 %v2557, %v2556
        %v2568 = vpack.c.b16 %v2559, %v2558
        %v2569 = vpack.c.b16 %v2561, %v2560
        %2578 = vmatprep.subr.bf16.mxu0 0
        %2579 = vmatpush1.bf16.msra.mxu0 %v2569
        %2580 = vmatprep.subr.bf16.mxu0 0
        %2581 = vmatpush1.bf16.msra.mxu0 %v2568
        %2582 = vmatprep.subr.bf16.mxu0 0
        %2583 = vmatpush1.bf16.msra.mxu0 %v2567
        %2584 = vmatprep.subr.bf16.mxu0 0
        %2585 = vmatpush1.bf16.msra.mxu0 %v2566
        %2586 = vmatprep.subr.bf16.mxu0 0
        %2587 = vmatpush1.bf16.msra.mxu0 %v2565
        %2588 = vmatprep.subr.bf16.mxu0 0
        %2589 = vmatpush1.bf16.msra.mxu0 %v2564
        %2590 = vmatprep.subr.bf16.mxu0 0
        %2591 = vmatpush1.bf16.msra.mxu0 %v2563
        %2592 = vmatprep.subr.bf16.mxu0 0
        %2593 = vmatpush1.bf16.msra.mxu0 %v2562
        %2594 = vmatprep.subr.bf16.mxu0 0
        %2595 = vmatpush2.bf16.msra.mxu0 0
        %2596 = vmatprep.subr.bf16.mxu0 0
        %2597 = vmatpush2.bf16.msra.mxu0 0
        %2598 = vmatprep.subr.bf16.mxu0 0
        %2599 = vmatpush2.bf16.msra.mxu0 0
        %2600 = vmatprep.subr.bf16.mxu0 0
        %2601 = vmatpush2.bf16.msra.mxu0 0
        %2602 = vmatprep.subr.bf16.mxu0 0
        %2603 = vmatpush2.bf16.msra.mxu0 0
        %2604 = vmatprep.subr.bf16.mxu0 0
        %2605 = vmatpush2.bf16.msra.mxu0 0
        %2606 = vmatprep.subr.bf16.mxu0 0
        %2607 = vmatpush2.bf16.msra.mxu0 0
        %2608 = vmatprep.subr.bf16.mxu0 0
        %2609 = vmatpush2.bf16.msra.mxu0 0
        %2610 = vmatprep.mubr.bf16.mxu0 0
        %2611 = vmatmul.mubr.bf16.gmra.mxu0 %v2526
        %v2612 = vpop.f32.mrf.mxu0
        %v2613 = vadd.f32 0.0, %v2612
        %v2614 = vpop.f32.mrf.mxu0
        %v2615 = vpop.f32.mrf.mxu0
        %v2616 = vadd.f32 0.0, %v2615
        %v2617 = vpop.f32.mrf.mxu0
        %2618 = vmatprep.mubr.bf16.mxu0 0
        %2619 = vmatmul.mubr.bf16.gmra.mxu0 %v2527
        %v2620 = vpop.f32.mrf.mxu0
        %v2621 = vadd.f32 0.0, %v2620
        %v2622 = vpop.f32.mrf.mxu0
        %v2623 = vpop.f32.mrf.mxu0
        %v2624 = vadd.f32 0.0, %v2623
        %v2625 = vpop.f32.mrf.mxu0
        %2626 = vmatprep.mubr.bf16.mxu0 0
        %2627 = vmatmul.mubr.bf16.gmra.mxu0 %v2528
        %v2628 = vpop.f32.mrf.mxu0
        %v2629 = vadd.f32 0.0, %v2628
        %v2630 = vpop.f32.mrf.mxu0
        %v2631 = vpop.f32.mrf.mxu0
        %v2632 = vadd.f32 0.0, %v2631
        %v2633 = vpop.f32.mrf.mxu0
        %2634 = vmatprep.mubr.bf16.mxu0 0
        %2635 = vmatmul.mubr.bf16.gmra.mxu0 %v2529
        %v2636 = vpop.f32.mrf.mxu0
        %v2637 = vadd.f32 0.0, %v2636
        %v2638 = vpop.f32.mrf.mxu0
        %v2639 = vpop.f32.mrf.mxu0
        %v2640 = vadd.f32 0.0, %v2639
        %v2641 = vpop.f32.mrf.mxu0
        %2642 = vdwg.mxu0
        %v2643 = vadd.f32 %v2493, %v2613
        %v2644 = vadd.f32 %v2494, %v2616
        %v2645 = vadd.f32 %v2495, %v2621
        %v2646 = vadd.f32 %v2496, %v2624
        %v2647 = vadd.f32 %v2497, %v2629
        %v2648 = vadd.f32 %v2498, %v2632
        %v2649 = vadd.f32 %v2499, %v2637
        %v2650 = vadd.f32 %v2500, %v2640
        %v2651 = vld [vmem:[%s1195] sm:$0xff]
        %v2652 = vld [vmem:[%s1195 + $0x10] sm:$0xff]
        %v2653 = vld [vmem:[%s1195 + $0x20] sm:$0xff]
        %v2654 = vld [vmem:[%s1195 + $0x30] sm:$0xff]
        %v2655 = vld [vmem:[%s1195 + $0x40] sm:$0xff]
        %v2656 = vld [vmem:[%s1195 + $0x50] sm:$0xff]
        %v2657 = vld [vmem:[%s1195 + $0x60] sm:$0xff]
        %v2658 = vld [vmem:[%s1195 + $0x70] sm:$0xff]
        %s2659 = scalar_lea.vmem [#allocation15], 448
        %v2660 = vld [vmem:[%s2659] sm:$0xf]
        %v2661 = vld [vmem:[%s2659 + $0x4] sm:$0xf]
        %v2662 = vld [vmem:[%s2659 + $0x8] sm:$0xf]
        %v2663 = vld [vmem:[%s2659 + $0xc] sm:$0xf]
        %v2664 = vld [vmem:[%s2659 + $0x10] sm:$0xf]
        %v2665 = vld [vmem:[%s2659 + $0x14] sm:$0xf]
        %v2666 = vld [vmem:[%s2659 + $0x18] sm:$0xf]
        %v2667 = vld [vmem:[%s2659 + $0x1c] sm:$0xf]
        %v2668 = vld [vmem:[%s2659 + $0x20] sm:$0xf]
        %v2669 = vld [vmem:[%s2659 + $0x24] sm:$0xf]
        %v2670 = vld [vmem:[%s2659 + $0x28] sm:$0xf]
        %v2671 = vld [vmem:[%s2659 + $0x2c] sm:$0xf]
        %v2672 = vld [vmem:[%s2659 + $0x30] sm:$0xf]
        %v2673 = vld [vmem:[%s2659 + $0x34] sm:$0xf]
        %v2674 = vld [vmem:[%s2659 + $0x38] sm:$0xf]
        %v2675 = vld [vmem:[%s2659 + $0x3c] sm:$0xf]
        %v2676 = vpack.c.bf16 %v2652, %v2651
        %v2677 = vpack.c.bf16 %v2654, %v2653
        %v2678 = vpack.c.bf16 %v2656, %v2655
        %v2679 = vpack.c.bf16 %v2658, %v2657
        %v2696 = vunpack.c.l.b16 %v2660
        %v2697 = vunpack.c.l.b16 %v2661
        %v2698 = vunpack.c.l.b16 %v2662
        %v2699 = vunpack.c.l.b16 %v2663
        %v2700 = vunpack.c.l.b16 %v2664
        %v2701 = vunpack.c.l.b16 %v2665
        %v2702 = vunpack.c.l.b16 %v2666
        %v2703 = vunpack.c.l.b16 %v2667
        %v2704 = vunpack.c.l.b16 %v2668
        %v2705 = vunpack.c.l.b16 %v2669
        %v2706 = vunpack.c.l.b16 %v2670
        %v2707 = vunpack.c.l.b16 %v2671
        %v2708 = vunpack.c.l.b16 %v2672
        %v2709 = vunpack.c.l.b16 %v2673
        %v2710 = vunpack.c.l.b16 %v2674
        %v2711 = vunpack.c.l.b16 %v2675
        %v2712 = vpack.c.b16 %v2697, %v2696
        %v2713 = vpack.c.b16 %v2699, %v2698
        %v2714 = vpack.c.b16 %v2701, %v2700
        %v2715 = vpack.c.b16 %v2703, %v2702
        %v2716 = vpack.c.b16 %v2705, %v2704
        %v2717 = vpack.c.b16 %v2707, %v2706
        %v2718 = vpack.c.b16 %v2709, %v2708
        %v2719 = vpack.c.b16 %v2711, %v2710
        %2728 = vmatprep.subr.bf16.mxu0 0
        %2729 = vmatpush1.bf16.msra.mxu0 %v2719
        %2730 = vmatprep.subr.bf16.mxu0 0
        %2731 = vmatpush1.bf16.msra.mxu0 %v2718
        %2732 = vmatprep.subr.bf16.mxu0 0
        %2733 = vmatpush1.bf16.msra.mxu0 %v2717
        %2734 = vmatprep.subr.bf16.mxu0 0
        %2735 = vmatpush1.bf16.msra.mxu0 %v2716
        %2736 = vmatprep.subr.bf16.mxu0 0
        %2737 = vmatpush1.bf16.msra.mxu0 %v2715
        %2738 = vmatprep.subr.bf16.mxu0 0
        %2739 = vmatpush1.bf16.msra.mxu0 %v2714
        %2740 = vmatprep.subr.bf16.mxu0 0
        %2741 = vmatpush1.bf16.msra.mxu0 %v2713
        %2742 = vmatprep.subr.bf16.mxu0 0
        %2743 = vmatpush1.bf16.msra.mxu0 %v2712
        %2744 = vmatprep.subr.bf16.mxu0 0
        %2745 = vmatpush2.bf16.msra.mxu0 0
        %2746 = vmatprep.subr.bf16.mxu0 0
        %2747 = vmatpush2.bf16.msra.mxu0 0
        %2748 = vmatprep.subr.bf16.mxu0 0
        %2749 = vmatpush2.bf16.msra.mxu0 0
        %2750 = vmatprep.subr.bf16.mxu0 0
        %2751 = vmatpush2.bf16.msra.mxu0 0
        %2752 = vmatprep.subr.bf16.mxu0 0
        %2753 = vmatpush2.bf16.msra.mxu0 0
        %2754 = vmatprep.subr.bf16.mxu0 0
        %2755 = vmatpush2.bf16.msra.mxu0 0
        %2756 = vmatprep.subr.bf16.mxu0 0
        %2757 = vmatpush2.bf16.msra.mxu0 0
        %2758 = vmatprep.subr.bf16.mxu0 0
        %2759 = vmatpush2.bf16.msra.mxu0 0
        %2760 = vmatprep.mubr.bf16.mxu0 0
        %2761 = vmatmul.mubr.bf16.gmra.mxu0 %v2676
        %v2762 = vpop.f32.mrf.mxu0
        %v2763 = vadd.f32 0.0, %v2762
        %v2764 = vpop.f32.mrf.mxu0
        %v2765 = vpop.f32.mrf.mxu0
        %v2766 = vadd.f32 0.0, %v2765
        %v2767 = vpop.f32.mrf.mxu0
        %2768 = vmatprep.mubr.bf16.mxu0 0
        %2769 = vmatmul.mubr.bf16.gmra.mxu0 %v2677
        %v2770 = vpop.f32.mrf.mxu0
        %v2771 = vadd.f32 0.0, %v2770
        %v2772 = vpop.f32.mrf.mxu0
        %v2773 = vpop.f32.mrf.mxu0
        %v2774 = vadd.f32 0.0, %v2773
        %v2775 = vpop.f32.mrf.mxu0
        %2776 = vmatprep.mubr.bf16.mxu0 0
        %2777 = vmatmul.mubr.bf16.gmra.mxu0 %v2678
        %v2778 = vpop.f32.mrf.mxu0
        %v2779 = vadd.f32 0.0, %v2778
        %v2780 = vpop.f32.mrf.mxu0
        %v2781 = vpop.f32.mrf.mxu0
        %v2782 = vadd.f32 0.0, %v2781
        %v2783 = vpop.f32.mrf.mxu0
        %2784 = vmatprep.mubr.bf16.mxu0 0
        %2785 = vmatmul.mubr.bf16.gmra.mxu0 %v2679
        %v2786 = vpop.f32.mrf.mxu0
        %v2787 = vadd.f32 0.0, %v2786
        %v2788 = vpop.f32.mrf.mxu0
        %v2789 = vpop.f32.mrf.mxu0
        %v2790 = vadd.f32 0.0, %v2789
        %v2791 = vpop.f32.mrf.mxu0
        %2792 = vdwg.mxu0
        %v2793 = vadd.f32 %v2643, %v2763
        %v2794 = vadd.f32 %v2644, %v2766
        %v2795 = vadd.f32 %v2645, %v2771
        %v2796 = vadd.f32 %v2646, %v2774
        %v2797 = vadd.f32 %v2647, %v2779
        %v2798 = vadd.f32 %v2648, %v2782
        %v2799 = vadd.f32 %v2649, %v2787
        %v2800 = vadd.f32 %v2650, %v2790
        %v2801 = vld [vmem:[%s987 + $0x1] sm:$0xff]
        %v2802 = vld [vmem:[%s987 + $0x11] sm:$0xff]
        %v2803 = vld [vmem:[%s987 + $0x21] sm:$0xff]
        %v2804 = vld [vmem:[%s987 + $0x31] sm:$0xff]
        %v2805 = vld [vmem:[%s987 + $0x41] sm:$0xff]
        %v2806 = vld [vmem:[%s987 + $0x51] sm:$0xff]
        %v2807 = vld [vmem:[%s987 + $0x61] sm:$0xff]
        %v2808 = vld [vmem:[%s987 + $0x71] sm:$0xff]
        %s2809 = scalar_lea.vmem [#allocation15], 512
        %v2810 = vld [vmem:[%s2809] sm:$0xf]
        %v2811 = vld [vmem:[%s2809 + $0x4] sm:$0xf]
        %v2812 = vld [vmem:[%s2809 + $0x8] sm:$0xf]
        %v2813 = vld [vmem:[%s2809 + $0xc] sm:$0xf]
        %v2814 = vld [vmem:[%s2809 + $0x10] sm:$0xf]
        %v2815 = vld [vmem:[%s2809 + $0x14] sm:$0xf]
        %v2816 = vld [vmem:[%s2809 + $0x18] sm:$0xf]
        %v2817 = vld [vmem:[%s2809 + $0x1c] sm:$0xf]
        %v2818 = vld [vmem:[%s2809 + $0x20] sm:$0xf]
        %v2819 = vld [vmem:[%s2809 + $0x24] sm:$0xf]
        %v2820 = vld [vmem:[%s2809 + $0x28] sm:$0xf]
        %v2821 = vld [vmem:[%s2809 + $0x2c] sm:$0xf]
        %v2822 = vld [vmem:[%s2809 + $0x30] sm:$0xf]
        %v2823 = vld [vmem:[%s2809 + $0x34] sm:$0xf]
        %v2824 = vld [vmem:[%s2809 + $0x38] sm:$0xf]
        %v2825 = vld [vmem:[%s2809 + $0x3c] sm:$0xf]
        %v2826 = vpack.c.bf16 %v2802, %v2801
        %v2827 = vpack.c.bf16 %v2804, %v2803
        %v2828 = vpack.c.bf16 %v2806, %v2805
        %v2829 = vpack.c.bf16 %v2808, %v2807
        %v2846 = vunpack.c.l.b16 %v2810
        %v2847 = vunpack.c.l.b16 %v2811
        %v2848 = vunpack.c.l.b16 %v2812
        %v2849 = vunpack.c.l.b16 %v2813
        %v2850 = vunpack.c.l.b16 %v2814
        %v2851 = vunpack.c.l.b16 %v2815
        %v2852 = vunpack.c.l.b16 %v2816
        %v2853 = vunpack.c.l.b16 %v2817
        %v2854 = vunpack.c.l.b16 %v2818
        %v2855 = vunpack.c.l.b16 %v2819
        %v2856 = vunpack.c.l.b16 %v2820
        %v2857 = vunpack.c.l.b16 %v2821
        %v2858 = vunpack.c.l.b16 %v2822
        %v2859 = vunpack.c.l.b16 %v2823
        %v2860 = vunpack.c.l.b16 %v2824
        %v2861 = vunpack.c.l.b16 %v2825
        %v2862 = vpack.c.b16 %v2847, %v2846
        %v2863 = vpack.c.b16 %v2849, %v2848
        %v2864 = vpack.c.b16 %v2851, %v2850
        %v2865 = vpack.c.b16 %v2853, %v2852
        %v2866 = vpack.c.b16 %v2855, %v2854
        %v2867 = vpack.c.b16 %v2857, %v2856
        %v2868 = vpack.c.b16 %v2859, %v2858
        %v2869 = vpack.c.b16 %v2861, %v2860
        %2878 = vmatprep.subr.bf16.mxu0 0
        %2879 = vmatpush1.bf16.msra.mxu0 %v2869
        %2880 = vmatprep.subr.bf16.mxu0 0
        %2881 = vmatpush1.bf16.msra.mxu0 %v2868
        %2882 = vmatprep.subr.bf16.mxu0 0
        %2883 = vmatpush1.bf16.msra.mxu0 %v2867
        %2884 = vmatprep.subr.bf16.mxu0 0
        %2885 = vmatpush1.bf16.msra.mxu0 %v2866
        %2886 = vmatprep.subr.bf16.mxu0 0
        %2887 = vmatpush1.bf16.msra.mxu0 %v2865
        %2888 = vmatprep.subr.bf16.mxu0 0
        %2889 = vmatpush1.bf16.msra.mxu0 %v2864
        %2890 = vmatprep.subr.bf16.mxu0 0
        %2891 = vmatpush1.bf16.msra.mxu0 %v2863
        %2892 = vmatprep.subr.bf16.mxu0 0
        %2893 = vmatpush1.bf16.msra.mxu0 %v2862
        %2894 = vmatprep.subr.bf16.mxu0 0
        %2895 = vmatpush2.bf16.msra.mxu0 0
        %2896 = vmatprep.subr.bf16.mxu0 0
        %2897 = vmatpush2.bf16.msra.mxu0 0
        %2898 = vmatprep.subr.bf16.mxu0 0
        %2899 = vmatpush2.bf16.msra.mxu0 0
        %2900 = vmatprep.subr.bf16.mxu0 0
        %2901 = vmatpush2.bf16.msra.mxu0 0
        %2902 = vmatprep.subr.bf16.mxu0 0
        %2903 = vmatpush2.bf16.msra.mxu0 0
        %2904 = vmatprep.subr.bf16.mxu0 0
        %2905 = vmatpush2.bf16.msra.mxu0 0
        %2906 = vmatprep.subr.bf16.mxu0 0
        %2907 = vmatpush2.bf16.msra.mxu0 0
        %2908 = vmatprep.subr.bf16.mxu0 0
        %2909 = vmatpush2.bf16.msra.mxu0 0
        %2910 = vmatprep.mubr.bf16.mxu0 0
        %2911 = vmatmul.mubr.bf16.gmra.mxu0 %v2826
        %v2912 = vpop.f32.mrf.mxu0
        %v2913 = vadd.f32 0.0, %v2912
        %v2914 = vpop.f32.mrf.mxu0
        %v2915 = vpop.f32.mrf.mxu0
        %v2916 = vadd.f32 0.0, %v2915
        %v2917 = vpop.f32.mrf.mxu0
        %2918 = vmatprep.mubr.bf16.mxu0 0
        %2919 = vmatmul.mubr.bf16.gmra.mxu0 %v2827
        %v2920 = vpop.f32.mrf.mxu0
        %v2921 = vadd.f32 0.0, %v2920
        %v2922 = vpop.f32.mrf.mxu0
        %v2923 = vpop.f32.mrf.mxu0
        %v2924 = vadd.f32 0.0, %v2923
        %v2925 = vpop.f32.mrf.mxu0
        %2926 = vmatprep.mubr.bf16.mxu0 0
        %2927 = vmatmul.mubr.bf16.gmra.mxu0 %v2828
        %v2928 = vpop.f32.mrf.mxu0
        %v2929 = vadd.f32 0.0, %v2928
        %v2930 = vpop.f32.mrf.mxu0
        %v2931 = vpop.f32.mrf.mxu0
        %v2932 = vadd.f32 0.0, %v2931
        %v2933 = vpop.f32.mrf.mxu0
        %2934 = vmatprep.mubr.bf16.mxu0 0
        %2935 = vmatmul.mubr.bf16.gmra.mxu0 %v2829
        %v2936 = vpop.f32.mrf.mxu0
        %v2937 = vadd.f32 0.0, %v2936
        %v2938 = vpop.f32.mrf.mxu0
        %v2939 = vpop.f32.mrf.mxu0
        %v2940 = vadd.f32 0.0, %v2939
        %v2941 = vpop.f32.mrf.mxu0
        %2942 = vdwg.mxu0
        %v2943 = vadd.f32 %v2793, %v2913
        %v2944 = vadd.f32 %v2794, %v2916
        %v2945 = vadd.f32 %v2795, %v2921
        %v2946 = vadd.f32 %v2796, %v2924
        %v2947 = vadd.f32 %v2797, %v2929
        %v2948 = vadd.f32 %v2798, %v2932
        %v2949 = vadd.f32 %v2799, %v2937
        %v2950 = vadd.f32 %v2800, %v2940
        %v2951 = vld [vmem:[%s8] sm:$0x1]
        %v2953 = vlaneseq
        %v2954 = vshrl.u32 %v2953, 7
        %v2955 = vsub.s32 0, %v2954
        %v2956 = vrot.slane %v2951, %v2955
        %v2958 = vmul.f32 %v2943, %v2956
        %v2959 = vmul.f32 %v2944, %v2956
        %v2960 = vmul.f32 %v2945, %v2956
        %v2961 = vmul.f32 %v2946, %v2956
        %v2962 = vmul.f32 %v2947, %v2956
        %v2963 = vmul.f32 %v2948, %v2956
        %v2964 = vmul.f32 %v2949, %v2956
        %v2965 = vmul.f32 %v2950, %v2956
        %v2966 = vld [vmem:[%s9] sm:$0x1]
        %v2968 = vlaneseq
        %v2969 = vshrl.u32 %v2968, 7
        %v2970 = vsub.s32 0, %v2969
        %v2971 = vrot.slane %v2966, %v2970
        %v2973 = vadd.f32 %v2958, %v2971
        %v2974 = vadd.f32 %v2959, %v2971
        %v2975 = vadd.f32 %v2960, %v2971
        %v2976 = vadd.f32 %v2961, %v2971
        %v2977 = vadd.f32 %v2962, %v2971
        %v2978 = vadd.f32 %v2963, %v2971
        %v2979 = vadd.f32 %v2964, %v2971
        %v2980 = vadd.f32 %v2965, %v2971
        %v2981 = vmax.f32 %v2973, 0.0
        %v2982 = vmax.f32 %v2974, 0.0
        %v2983 = vmax.f32 %v2975, 0.0
        %v2984 = vmax.f32 %v2976, 0.0
        %v2985 = vmax.f32 %v2977, 0.0
        %v2986 = vmax.f32 %v2978, 0.0
        %v2987 = vmax.f32 %v2979, 0.0
        %v2988 = vmax.f32 %v2980, 0.0
        %v2989 = vld [vmem:[#allocation17] sm:$0xf]
        %v2990 = vld [vmem:[#allocation17 + $0x4] sm:$0xf]
        %v2991 = vld [vmem:[#allocation17 + $0x8] sm:$0xf]
        %v2992 = vld [vmem:[#allocation17 + $0xc] sm:$0xf]
        %v2993 = vld [vmem:[#allocation17 + $0x10] sm:$0xf]
        %v2994 = vld [vmem:[#allocation17 + $0x14] sm:$0xf]
        %v2995 = vld [vmem:[#allocation17 + $0x18] sm:$0xf]
        %v2996 = vld [vmem:[#allocation17 + $0x1c] sm:$0xf]
        %v2997 = vld [vmem:[#allocation17 + $0x20] sm:$0xf]
        %v2998 = vld [vmem:[#allocation17 + $0x24] sm:$0xf]
        %v2999 = vld [vmem:[#allocation17 + $0x28] sm:$0xf]
        %v3000 = vld [vmem:[#allocation17 + $0x2c] sm:$0xf]
        %v3001 = vld [vmem:[#allocation17 + $0x30] sm:$0xf]
        %v3002 = vld [vmem:[#allocation17 + $0x34] sm:$0xf]
        %v3003 = vld [vmem:[#allocation17 + $0x38] sm:$0xf]
        %v3004 = vld [vmem:[#allocation17 + $0x3c] sm:$0xf]
        %v3005 = vpack.c.bf16 %v2982, %v2981
        %v3006 = vpack.c.bf16 %v2984, %v2983
        %v3007 = vpack.c.bf16 %v2986, %v2985
        %v3008 = vpack.c.bf16 %v2988, %v2987
        %v3025 = vunpack.c.l.b16 %v2989
        %v3026 = vunpack.c.l.b16 %v2990
        %v3027 = vunpack.c.l.b16 %v2991
        %v3028 = vunpack.c.l.b16 %v2992
        %v3029 = vunpack.c.l.b16 %v2993
        %v3030 = vunpack.c.l.b16 %v2994
        %v3031 = vunpack.c.l.b16 %v2995
        %v3032 = vunpack.c.l.b16 %v2996
        %v3033 = vunpack.c.l.b16 %v2997
        %v3034 = vunpack.c.l.b16 %v2998
        %v3035 = vunpack.c.l.b16 %v2999
        %v3036 = vunpack.c.l.b16 %v3000
        %v3037 = vunpack.c.l.b16 %v3001
        %v3038 = vunpack.c.l.b16 %v3002
        %v3039 = vunpack.c.l.b16 %v3003
        %v3040 = vunpack.c.l.b16 %v3004
        %v3041 = vpack.c.b16 %v3026, %v3025
        %v3042 = vpack.c.b16 %v3028, %v3027
        %v3043 = vpack.c.b16 %v3030, %v3029
        %v3044 = vpack.c.b16 %v3032, %v3031
        %v3045 = vpack.c.b16 %v3034, %v3033
        %v3046 = vpack.c.b16 %v3036, %v3035
        %v3047 = vpack.c.b16 %v3038, %v3037
        %v3048 = vpack.c.b16 %v3040, %v3039
        %3057 = vmatprep.subr.bf16.mxu0 0
        %3058 = vmatpush1.bf16.msra.mxu0 %v3048
        %3059 = vmatprep.subr.bf16.mxu0 0
        %3060 = vmatpush1.bf16.msra.mxu0 %v3047
        %3061 = vmatprep.subr.bf16.mxu0 0
        %3062 = vmatpush1.bf16.msra.mxu0 %v3046
        %3063 = vmatprep.subr.bf16.mxu0 0
        %3064 = vmatpush1.bf16.msra.mxu0 %v3045
        %3065 = vmatprep.subr.bf16.mxu0 0
        %3066 = vmatpush1.bf16.msra.mxu0 %v3044
        %3067 = vmatprep.subr.bf16.mxu0 0
        %3068 = vmatpush1.bf16.msra.mxu0 %v3043
        %3069 = vmatprep.subr.bf16.mxu0 0
        %3070 = vmatpush1.bf16.msra.mxu0 %v3042
        %3071 = vmatprep.subr.bf16.mxu0 0
        %3072 = vmatpush1.bf16.msra.mxu0 %v3041
        %3073 = vmatprep.subr.bf16.mxu0 0
        %3074 = vmatpush2.bf16.msra.mxu0 0
        %3075 = vmatprep.subr.bf16.mxu0 0
        %3076 = vmatpush2.bf16.msra.mxu0 0
        %3077 = vmatprep.subr.bf16.mxu0 0
        %3078 = vmatpush2.bf16.msra.mxu0 0
        %3079 = vmatprep.subr.bf16.mxu0 0
        %3080 = vmatpush2.bf16.msra.mxu0 0
        %3081 = vmatprep.subr.bf16.mxu0 0
        %3082 = vmatpush2.bf16.msra.mxu0 0
        %3083 = vmatprep.subr.bf16.mxu0 0
        %3084 = vmatpush2.bf16.msra.mxu0 0
        %3085 = vmatprep.subr.bf16.mxu0 0
        %3086 = vmatpush2.bf16.msra.mxu0 0
        %3087 = vmatprep.subr.bf16.mxu0 0
        %3088 = vmatpush2.bf16.msra.mxu0 0
        %3089 = vmatprep.mubr.bf16.mxu0 0
        %3090 = vmatmul.mubr.bf16.gmra.mxu0 %v3005
        %v3091 = vpop.f32.mrf.mxu0
        %v3092 = vadd.f32 0.0, %v3091
        %v3093 = vpop.f32.mrf.mxu0
        %v3094 = vpop.f32.mrf.mxu0
        %v3095 = vadd.f32 0.0, %v3094
        %v3096 = vpop.f32.mrf.mxu0
        %3097 = vmatprep.mubr.bf16.mxu0 0
        %3098 = vmatmul.mubr.bf16.gmra.mxu0 %v3006
        %v3099 = vpop.f32.mrf.mxu0
        %v3100 = vadd.f32 0.0, %v3099
        %v3101 = vpop.f32.mrf.mxu0
        %v3102 = vpop.f32.mrf.mxu0
        %v3103 = vadd.f32 0.0, %v3102
        %v3104 = vpop.f32.mrf.mxu0
        %3105 = vmatprep.mubr.bf16.mxu0 0
        %3106 = vmatmul.mubr.bf16.gmra.mxu0 %v3007
        %v3107 = vpop.f32.mrf.mxu0
        %v3108 = vadd.f32 0.0, %v3107
        %v3109 = vpop.f32.mrf.mxu0
        %v3110 = vpop.f32.mrf.mxu0
        %v3111 = vadd.f32 0.0, %v3110
        %v3112 = vpop.f32.mrf.mxu0
        %3113 = vmatprep.mubr.bf16.mxu0 0
        %3114 = vmatmul.mubr.bf16.gmra.mxu0 %v3008
        %v3115 = vpop.f32.mrf.mxu0
        %v3116 = vadd.f32 0.0, %v3115
        %v3117 = vpop.f32.mrf.mxu0
        %v3118 = vpop.f32.mrf.mxu0
        %v3119 = vadd.f32 0.0, %v3118
        %v3120 = vpop.f32.mrf.mxu0
        %3121 = vdwg.mxu0
        %v3122 = vld [vmem:[%s11] sm:$0x1]
        %v3124 = vlaneseq
        %v3125 = vshrl.u32 %v3124, 7
        %v3126 = vsub.s32 0, %v3125
        %v3127 = vrot.slane %v3122, %v3126
        %v3129 = vmul.f32 %v3092, %v3127
        %v3130 = vmul.f32 %v3095, %v3127
        %v3131 = vmul.f32 %v3100, %v3127
        %v3132 = vmul.f32 %v3103, %v3127
        %v3133 = vmul.f32 %v3108, %v3127
        %v3134 = vmul.f32 %v3111, %v3127
        %v3135 = vmul.f32 %v3116, %v3127
        %v3136 = vmul.f32 %v3119, %v3127
        %v3137 = vld [vmem:[%s12] sm:$0x1]
        %v3139 = vlaneseq
        %v3140 = vshrl.u32 %v3139, 7
        %v3141 = vsub.s32 0, %v3140
        %v3142 = vrot.slane %v3137, %v3141
        %v3144 = vadd.f32 %v3129, %v3142
        %v3145 = vadd.f32 %v3130, %v3142
        %v3146 = vadd.f32 %v3131, %v3142
        %v3147 = vadd.f32 %v3132, %v3142
        %v3148 = vadd.f32 %v3133, %v3142
        %v3149 = vadd.f32 %v3134, %v3142
        %v3150 = vadd.f32 %v3135, %v3142
        %v3151 = vadd.f32 %v3136, %v3142
        %v3152 = vld [vmem:[%s635] sm:$0xf]
        %v3153 = vld [vmem:[%s635 + $0x4] sm:$0xf]
        %v3154 = vld [vmem:[%s635 + $0x8] sm:$0xf]
        %v3155 = vld [vmem:[%s635 + $0xc] sm:$0xf]
        %v3156 = vld [vmem:[%s635 + $0x10] sm:$0xf]
        %v3157 = vld [vmem:[%s635 + $0x14] sm:$0xf]
        %v3158 = vld [vmem:[%s635 + $0x18] sm:$0xf]
        %v3159 = vld [vmem:[%s635 + $0x1c] sm:$0xf]
        %v3160 = vld [vmem:[#allocation18] sm:$0xf]
        %v3161 = vld [vmem:[#allocation18 + $0x4] sm:$0xf]
        %v3162 = vld [vmem:[#allocation18 + $0x8] sm:$0xf]
        %v3163 = vld [vmem:[#allocation18 + $0xc] sm:$0xf]
        %v3164 = vld [vmem:[#allocation18 + $0x10] sm:$0xf]
        %v3165 = vld [vmem:[#allocation18 + $0x14] sm:$0xf]
        %v3166 = vld [vmem:[#allocation18 + $0x18] sm:$0xf]
        %v3167 = vld [vmem:[#allocation18 + $0x1c] sm:$0xf]
        %v3168 = vld [vmem:[#allocation18 + $0x20] sm:$0xf]
        %v3169 = vld [vmem:[#allocation18 + $0x24] sm:$0xf]
        %v3170 = vld [vmem:[#allocation18 + $0x28] sm:$0xf]
        %v3171 = vld [vmem:[#allocation18 + $0x2c] sm:$0xf]
        %v3172 = vld [vmem:[#allocation18 + $0x30] sm:$0xf]
        %v3173 = vld [vmem:[#allocation18 + $0x34] sm:$0xf]
        %v3174 = vld [vmem:[#allocation18 + $0x38] sm:$0xf]
        %v3175 = vld [vmem:[#allocation18 + $0x3c] sm:$0xf]
        %v3184 = vunpack.c.l.b16 %v3152
        %v3185 = vunpack.c.l.b16 %v3153
        %v3186 = vunpack.c.l.b16 %v3154
        %v3187 = vunpack.c.l.b16 %v3155
        %v3188 = vunpack.c.l.b16 %v3156
        %v3189 = vunpack.c.l.b16 %v3157
        %v3190 = vunpack.c.l.b16 %v3158
        %v3191 = vunpack.c.l.b16 %v3159
        %v3192 = vpack.c.b16 %v3185, %v3184
        %v3193 = vpack.c.b16 %v3187, %v3186
        %v3194 = vpack.c.b16 %v3189, %v3188
        %v3195 = vpack.c.b16 %v3191, %v3190
        %v3216 = vunpack.c.l.b16 %v3160
        %v3217 = vunpack.c.l.b16 %v3161
        %v3218 = vunpack.c.l.b16 %v3162
        %v3219 = vunpack.c.l.b16 %v3163
        %v3220 = vunpack.c.l.b16 %v3164
        %v3221 = vunpack.c.l.b16 %v3165
        %v3222 = vunpack.c.l.b16 %v3166
        %v3223 = vunpack.c.l.b16 %v3167
        %v3224 = vunpack.c.l.b16 %v3168
        %v3225 = vunpack.c.l.b16 %v3169
        %v3226 = vunpack.c.l.b16 %v3170
        %v3227 = vunpack.c.l.b16 %v3171
        %v3228 = vunpack.c.l.b16 %v3172
        %v3229 = vunpack.c.l.b16 %v3173
        %v3230 = vunpack.c.l.b16 %v3174
        %v3231 = vunpack.c.l.b16 %v3175
        %v3232 = vpack.c.b16 %v3217, %v3216
        %v3233 = vpack.c.b16 %v3219, %v3218
        %v3234 = vpack.c.b16 %v3221, %v3220
        %v3235 = vpack.c.b16 %v3223, %v3222
        %v3236 = vpack.c.b16 %v3225, %v3224
        %v3237 = vpack.c.b16 %v3227, %v3226
        %v3238 = vpack.c.b16 %v3229, %v3228
        %v3239 = vpack.c.b16 %v3231, %v3230
        %3248 = vmatprep.subr.bf16.mxu0 0
        %3249 = vmatpush1.bf16.msra.mxu0 %v3239
        %3250 = vmatprep.subr.bf16.mxu0 0
        %3251 = vmatpush1.bf16.msra.mxu0 %v3238
        %3252 = vmatprep.subr.bf16.mxu0 0
        %3253 = vmatpush1.bf16.msra.mxu0 %v3237
        %3254 = vmatprep.subr.bf16.mxu0 0
        %3255 = vmatpush1.bf16.msra.mxu0 %v3236
        %3256 = vmatprep.subr.bf16.mxu0 0
        %3257 = vmatpush1.bf16.msra.mxu0 %v3235
        %3258 = vmatprep.subr.bf16.mxu0 0
        %3259 = vmatpush1.bf16.msra.mxu0 %v3234
        %3260 = vmatprep.subr.bf16.mxu0 0
        %3261 = vmatpush1.bf16.msra.mxu0 %v3233
        %3262 = vmatprep.subr.bf16.mxu0 0
        %3263 = vmatpush1.bf16.msra.mxu0 %v3232
        %3264 = vmatprep.subr.bf16.mxu0 0
        %3265 = vmatpush2.bf16.msra.mxu0 0
        %3266 = vmatprep.subr.bf16.mxu0 0
        %3267 = vmatpush2.bf16.msra.mxu0 0
        %3268 = vmatprep.subr.bf16.mxu0 0
        %3269 = vmatpush2.bf16.msra.mxu0 0
        %3270 = vmatprep.subr.bf16.mxu0 0
        %3271 = vmatpush2.bf16.msra.mxu0 0
        %3272 = vmatprep.subr.bf16.mxu0 0
        %3273 = vmatpush2.bf16.msra.mxu0 0
        %3274 = vmatprep.subr.bf16.mxu0 0
        %3275 = vmatpush2.bf16.msra.mxu0 0
        %3276 = vmatprep.subr.bf16.mxu0 0
        %3277 = vmatpush2.bf16.msra.mxu0 0
        %3278 = vmatprep.subr.bf16.mxu0 0
        %3279 = vmatpush2.bf16.msra.mxu0 0
        %3280 = vmatprep.mubr.bf16.mxu0 0
        %3281 = vmatmul.mubr.bf16.gmra.mxu0 %v3192
        %v3282 = vpop.f32.mrf.mxu0
        %v3283 = vadd.f32 0.0, %v3282
        %v3284 = vpop.f32.mrf.mxu0
        %v3285 = vpop.f32.mrf.mxu0
        %v3286 = vadd.f32 0.0, %v3285
        %v3287 = vpop.f32.mrf.mxu0
        %3288 = vmatprep.mubr.bf16.mxu0 0
        %3289 = vmatmul.mubr.bf16.gmra.mxu0 %v3193
        %v3290 = vpop.f32.mrf.mxu0
        %v3291 = vadd.f32 0.0, %v3290
        %v3292 = vpop.f32.mrf.mxu0
        %v3293 = vpop.f32.mrf.mxu0
        %v3294 = vadd.f32 0.0, %v3293
        %v3295 = vpop.f32.mrf.mxu0
        %3296 = vmatprep.mubr.bf16.mxu0 0
        %3297 = vmatmul.mubr.bf16.gmra.mxu0 %v3194
        %v3298 = vpop.f32.mrf.mxu0
        %v3299 = vadd.f32 0.0, %v3298
        %v3300 = vpop.f32.mrf.mxu0
        %v3301 = vpop.f32.mrf.mxu0
        %v3302 = vadd.f32 0.0, %v3301
        %v3303 = vpop.f32.mrf.mxu0
        %3304 = vmatprep.mubr.bf16.mxu0 0
        %3305 = vmatmul.mubr.bf16.gmra.mxu0 %v3195
        %v3306 = vpop.f32.mrf.mxu0
        %v3307 = vadd.f32 0.0, %v3306
        %v3308 = vpop.f32.mrf.mxu0
        %v3309 = vpop.f32.mrf.mxu0
        %v3310 = vadd.f32 0.0, %v3309
        %v3311 = vpop.f32.mrf.mxu0
        %3312 = vdwg.mxu0
        %v3313 = vld [vmem:[%s14] sm:$0x1]
        %v3315 = vlaneseq
        %v3316 = vshrl.u32 %v3315, 7
        %v3317 = vsub.s32 0, %v3316
        %v3318 = vrot.slane %v3313, %v3317
        %v3320 = vmul.f32 %v3283, %v3318
        %v3321 = vmul.f32 %v3286, %v3318
        %v3322 = vmul.f32 %v3291, %v3318
        %v3323 = vmul.f32 %v3294, %v3318
        %v3324 = vmul.f32 %v3299, %v3318
        %v3325 = vmul.f32 %v3302, %v3318
        %v3326 = vmul.f32 %v3307, %v3318
        %v3327 = vmul.f32 %v3310, %v3318
        %v3328 = vld [vmem:[%s15] sm:$0x1]
        %v3330 = vlaneseq
        %v3331 = vshrl.u32 %v3330, 7
        %v3332 = vsub.s32 0, %v3331
        %v3333 = vrot.slane %v3328, %v3332
        %v3335 = vadd.f32 %v3320, %v3333
        %v3336 = vadd.f32 %v3321, %v3333
        %v3337 = vadd.f32 %v3322, %v3333
        %v3338 = vadd.f32 %v3323, %v3333
        %v3339 = vadd.f32 %v3324, %v3333
        %v3340 = vadd.f32 %v3325, %v3333
        %v3341 = vadd.f32 %v3326, %v3333
        %v3342 = vadd.f32 %v3327, %v3333
        %v3343 = vadd.f32 %v3144, %v3335
        %v3344 = vadd.f32 %v3145, %v3336
        %v3345 = vadd.f32 %v3146, %v3337
        %v3346 = vadd.f32 %v3147, %v3338
        %v3347 = vadd.f32 %v3148, %v3339
        %v3348 = vadd.f32 %v3149, %v3340
        %v3349 = vadd.f32 %v3150, %v3341
        %v3350 = vadd.f32 %v3151, %v3342
        %v3351 = vmax.f32 %v3343, 0.0
        %v3352 = vmax.f32 %v3344, 0.0
        %v3353 = vmax.f32 %v3345, 0.0
        %v3354 = vmax.f32 %v3346, 0.0
        %v3355 = vmax.f32 %v3347, 0.0
        %v3356 = vmax.f32 %v3348, 0.0
        %v3357 = vmax.f32 %v3349, 0.0
        %v3358 = vmax.f32 %v3350, 0.0
        %3359 = vst [vmem:[%s714] sm:$0xff] %v3351
        %3360 = vst [vmem:[%s714 + $0x8] sm:$0xff] %v3352
        %3361 = vst [vmem:[%s714 + $0x10] sm:$0xff] %v3353
        %3362 = vst [vmem:[%s714 + $0x18] sm:$0xff] %v3354
        %3363 = vst [vmem:[%s714 + $0x20] sm:$0xff] %v3355
        %3364 = vst [vmem:[%s714 + $0x28] sm:$0xff] %v3356
        %3365 = vst [vmem:[%s714 + $0x30] sm:$0xff] %v3357
        %3366 = vst [vmem:[%s714 + $0x38] sm:$0xff] %v3358
        %s3367 = sand.u32 %s405, 1
        %s3368 = scalar_lea.sflag [#allocation8], %s3367
        %s3369 = sand.u32 %s405, 1
        %s3370 = smul.addr %s3369, 64
        %s3371 = scalar_lea.vmem [#allocation20], %s3370
        // Predicated region
        $region117: #{tpu_custom_call.1} parent=83 // pred_check
          %p3372 = pneg %p415
        $region118: #{tpu_custom_call.1} parent=83 // pred_check_branch
          %3374 = sbr.rel (%p3372) target = $region120
        $region119: #{tpu_custom_call.1} parent=83 // pred_region
          %s3376 = ssub.s32 1024, 1024
          %3377 = vsyncadd %s3368, %s3376
          %s3378 = smul.addr %s41, 8
          %s3379 = smul.addr %s3378, 128
          %s3380 = scalar_lea.hbm %s16, %s3379
          %s3381 = sshll.u32 %s3371, 4
          %s3382 = int_to_ptr.vmem [resolvable:$true] %s3381
          %3387 = dma.vmem_to_hbm [thread:$0]  %s3382, 1024, %s3380, %s3368, 128, 128, 8
        $region120: #{tpu_custom_call.1} parent=83 // pred_fallthru
          _
      $region84: #{tpu_custom_call.1} parent=5 // pred_fallthru
        _
      %p3388 = scmp.le.s32.totalorder 2, %s36
      // Predicated region
      $region121: #{tpu_custom_call.1} parent=5 // pred_check
        %p3389 = pneg %p3388
      $region122: #{tpu_custom_call.1} parent=5 // pred_check_branch
        %3391 = sbr.rel (%p3389) target = $region124
      $region123: #{tpu_custom_call.1} parent=5 // pred_region
        %s3392 = ssub.s32 %s36, 2
        // Predicated region
        $region125: #{tpu_custom_call.1} parent=123 // pred_check
          %p3393 = pneg %p421
        $region126: #{tpu_custom_call.1} parent=123 // pred_check_branch
          %3395 = sbr.rel (%p3393) target = $region128
        $region127: #{tpu_custom_call.1} parent=123 // pred_region
          %s3396 = sand.u32 %s406, 1
          %s3397 = scalar_lea.sflag [#allocation8], %s3396
          %s3398 = sand.u32 %s406, 1
          %s3399 = smul.addr %s3398, 64
          %s3400 = scalar_lea.vmem [#allocation20], %s3399
          %3401 = dma.done %s3397, 1024
        $region128: #{tpu_custom_call.1} parent=123 // pred_fallthru
          _
      $region124: #{tpu_custom_call.1} parent=5 // pred_fallthru
        _
    $region6: #{tpu_custom_call.1} parent=1 // loop_footer
      %s40 = sadd.s32 1, %s36
    $region7: #{tpu_custom_call.1} parent=1 // loop_footer_branch
      %35 = sbr.rel target = $region3
    $region8: #{tpu_custom_call.1} parent=1 // loop_exit
      _
    %3402 = vsyncpa [#allocation7], 1
    %s3403 = scalar_lea.sflag [#allocation7], 1
    %3404 = vsyncpa %s3403, 1
    %3405 = vsyncpa [#allocation10], 1
    %s3406 = scalar_lea.sflag [#allocation10], 1
    %3407 = vsyncpa %s3406, 1
    %3408 = vsyncpa [#allocation13], 1
    %s3409 = scalar_lea.sflag [#allocation13], 1
    %3410 = vsyncpa %s3409, 1
    %3411 = vsyncpa [#allocation16], 1
    %3412 = vsyncpa [#allocation19], 1
    %3413 = vsyncpa [#allocation8], 1
    %s3414 = scalar_lea.sflag [#allocation8], 1
    %3415 = vsyncpa %s3414, 1

</llo_original>
